<compile_context>
chip_gen: v5e
topology: v5e:2x2
jax: 0.10.0
libtpu: 0.0.40
codegen_flags: <defaults>
</compile_context>

<pallas_src>
import jax
import jax.numpy as jnp
from jax.experimental import pallas as pl
from jax.experimental.pallas import tpu as pltpu


# ------------------------------ Pallas kernels ------------------------------ #

def _matmul_bias_kernel(a_ref, w_ref, b_ref, o_ref):
    acc = jnp.dot(a_ref[...], w_ref[...], preferred_element_type=jnp.float32)
    o_ref[...] = (acc + b_ref[...]).astype(o_ref.dtype)


def pallas_matmul_bias(a, w, b):
    """(M,K) @ (K,N) + b as one full-array block (used only on the small,
    downsampled feature maps: M <= ~2000, K <= 144, N = f)."""
    M, K = a.shape
    N = w.shape[1]
    return pl.pallas_call(
        _matmul_bias_kernel,
        out_shape=jax.ShapeDtypeStruct((M, N), a.dtype),
        grid=(1,),
        in_specs=[
            pl.BlockSpec((M, K), lambda i: (0, 0)),
            pl.BlockSpec((K, N), lambda i: (0, 0)),
            pl.BlockSpec((1, N), lambda i: (0, 0)),
        ],
        out_specs=pl.BlockSpec((M, N), lambda i: (0, 0)),
    )(a, w, b.reshape(1, N))


def _esa_tail_kernel(x_ref, c3_ref, wcf_ref, bcf_ref, w4_ref, b4_ref, o_ref):
    # x_ref:  (bm, gx*C)  packed as [gx pixels x C channels] per row (lane-dense)
    # c3_ref: (bm, gx*f)  packed as [gx pixels x f channels] per row
    x = x_ref[...]
    cf = jnp.dot(x, wcf_ref[...], preferred_element_type=jnp.float32) + bcf_ref[...]
    z = c3_ref[...] + cf
    c4 = jnp.dot(z, w4_ref[...], preferred_element_type=jnp.float32) + b4_ref[...]
    m = 1.0 / (1.0 + jnp.exp(-c4))        # exp rides the EUP slot; kernel is mem-bound
    o_ref[...] = (x * m).astype(o_ref.dtype)


def _pick_row_block(R, target=256):
    """Largest multiple-of-8 divisor of R that is <= target (keeps >=2 grid steps
    when possible so v7x's two TensorCores both get work)."""
    best = R
    for bm in range(8, min(R, target) + 1, 8):
        if R % bm == 0:
            best = bm
    if best == R and R > 8 and R % 16 == 0:
        best = R // 2
    return best


def pallas_esa_tail(x_packed, c3_packed, wcf_blk, bcf_row, w4_blk, b4_row):
    """out = x * sigmoid((c3 + x @ Wcf + bcf) @ W4 + b4), lane-dense packed layout."""
    R, Lx = x_packed.shape
    Lc = c3_packed.shape[1]
    bm = _pick_row_block(R)
    return pl.pallas_call(
        _esa_tail_kernel,
        out_shape=jax.ShapeDtypeStruct((R, Lx), x_packed.dtype),
        grid=(R // bm,),
        in_specs=[
            pl.BlockSpec((bm, Lx), lambda i: (i, 0)),
            pl.BlockSpec((bm, Lc), lambda i: (i, 0)),
            pl.BlockSpec(tuple(wcf_blk.shape), lambda i: (0, 0)),
            pl.BlockSpec(tuple(bcf_row.shape), lambda i: (0, 0)),
            pl.BlockSpec(tuple(w4_blk.shape), lambda i: (0, 0)),
            pl.BlockSpec(tuple(b4_row.shape), lambda i: (0, 0)),
        ],
        out_specs=pl.BlockSpec((bm, Lx), lambda i: (i, 0)),
        compiler_params=pltpu.CompilerParams(dimension_semantics=("parallel",)),
    )(x_packed, c3_packed, wcf_blk, bcf_row, w4_blk, b4_row)


# -------------------------------- JAX glue ---------------------------------- #

def _extract_windows(x, k, stride):
    """NHWC sliding windows: (B,H,W,C) -> (B,Ho,Wo,k,k,C)."""
    B, H, W, C = x.shape
    Ho = (H - k) // stride + 1
    Wo = (W - k) // stride + 1
    rows = jnp.arange(Ho) * stride
    cols = jnp.arange(Wo) * stride
    x1 = x[:, rows[:, None] + jnp.arange(k)[None, :], :, :]       # (B,Ho,k,W,C)
    x2 = x1[:, :, :, cols[:, None] + jnp.arange(k)[None, :], :]   # (B,Ho,k,Wo,k,C)
    return jnp.transpose(x2, (0, 1, 3, 2, 4, 5)), Ho, Wo          # (B,Ho,Wo,k,k,C)


def conv2d_nhwc(x, w_oihw, b):
    """3x3 valid conv (stride 1) on a tiny map: im2col + single-block Pallas matmul."""
    Cout, Cin, kh, kw = w_oihw.shape
    win, Ho, Wo = _extract_windows(x, kh, 1)
    B = x.shape[0]
    patches = win.reshape(B * Ho * Wo, kh * kw * Cin)
    w_mat = jnp.transpose(w_oihw, (2, 3, 1, 0)).reshape(kh * kw * Cin, Cout)
    y = pallas_matmul_bias(patches, w_mat, b)
    return y.reshape(B, Ho, Wo, Cout)


def maxpool2d_nhwc(x, k, stride):
    # TODO(synk): tiny reduction (~30K elems) kept in XLA — a Pallas launch costs more.
    win, _, _ = _extract_windows(x, k, stride)
    return jnp.max(win, axis=(3, 4))


def gelu(x):
    # Exact GELU (PyTorch nn.GELU default); applied on <=9x9 maps only.
    return 0.5 * x * (1.0 + jax.lax.erf(x / jnp.sqrt(2.0).astype(x.dtype)))


def _bilinear_matrix(out_size, in_size):
    """F.interpolate(mode='bilinear', align_corners=False) as a dense matrix."""
    scale = in_size / out_size
    dst = jnp.arange(out_size, dtype=jnp.float32)
    src = jnp.maximum((dst + 0.5) * scale - 0.5, 0.0)
    i0 = jnp.floor(src).astype(jnp.int32)
    i1 = jnp.minimum(i0 + 1, in_size - 1)
    w1 = src - i0.astype(jnp.float32)
    w0 = 1.0 - w1
    M = jnp.zeros((out_size, in_size), jnp.float32)
    M = M.at[jnp.arange(out_size), i0].add(w0)
    M = M.at[jnp.arange(out_size), i1].add(w1)
    return M


def bilinear_resize_nhwc(x, Hout, Wout):
    # Upsampling a 3x3 map — pure XLA (two tiny contractions).
    B, Hin, Win, C = x.shape
    Mh = _bilinear_matrix(Hout, Hin).astype(x.dtype)
    Mw = _bilinear_matrix(Wout, Win).astype(x.dtype)
    t = jnp.einsum("oh,bhwc->bowc", Mh, x)
    return jnp.einsum("pw,bowc->bopc", Mw, t)       # (B,Hout,Wout,C)


# ------------------------------- ESA forward -------------------------------- #

def esa_forward(x_nchw, params):
    B, C, H, W = x_nchw.shape
    f = params["conv1_w"].shape[0]

    x = jnp.transpose(x_nchw, (0, 2, 3, 1))          # == input.permute(0, 2, 3, 1)
    x2d = x.reshape(B * H * W, C)

    w1, b1 = params["conv1_w"], params["conv1_b"]    # (f, C), (f,)
    w2, b2 = params["conv2_w"], params["conv2_b"]    # (f, f, 3, 3), (f,)
    wf, bf = params["conv_f_w"], params["conv_f_b"]  # (f, f), (f,)
    w4, b4 = params["conv4_w"], params["conv4_b"]    # (C, f), (C,)

    # --- c1 = conv2(conv1(x)): fold the 1x1 Linear into the 3x3/stride-2 conv ----
    w2_p = jnp.transpose(w2, (2, 3, 1, 0))                           # (3,3,f_in,f_out)
    w12 = jnp.einsum("pqjo,jc->pqco", w2_p, w1).reshape(9 * C, f)    # (9*C, f)
    b12 = b2 + jnp.einsum("pqjo,j->o", w2_p, b1)
    win, Ho, Wo = _extract_windows(x, 3, 2)
    c1 = pallas_matmul_bias(win.reshape(B * Ho * Wo, 9 * C), w12, b12)
    c1 = c1.reshape(B, Ho, Wo, f)

    # --- v_max = MaxPool2d(7, 3)(c1) --------------------------------------------
    v_max = maxpool2d_nhwc(c1, 7, 3)

    # --- tiny 3x3 convs + GELU ----------------------------------------------------
    v_range = gelu(conv2d_nhwc(v_max, params["conv_max_w"], params["conv_max_b"]))
    c3 = gelu(conv2d_nhwc(v_range, params["conv3_w"], params["conv3_b"]))
    c3 = conv2d_nhwc(c3, params["conv3__w"], params["conv3__b"])

    # --- bilinear upsample to (H, W) ---------------------------------------------
    c3_up = bilinear_resize_nhwc(c3, H, W)                           # (B,H,W,f)

    # --- fused lane-dense tail: cf (folded conv_f∘conv1), +c3, conv4, sigmoid, *x -
    w_cf = w1.T @ wf.T                 # (C, f): cf = x @ w_cf + b_cf
    b_cf = wf @ b1 + bf                # (f,)

    LANES = 128
    gx = LANES // C if (C <= LANES and LANES % C == 0) else 1   # pixels packed per row
    M = B * H * W
    c32d = c3_up.reshape(M, f)

    pad = (-M) % gx
    if pad:  # not hit for the shapes below; kept for generality
        x2d = jnp.pad(x2d, ((0, pad), (0, 0)))
        c32d = jnp.pad(c32d, ((0, pad), (0, 0)))
    Mp = M + pad
    R = Mp // gx
    x_packed = x2d.reshape(R, gx * C)            # contiguous reshape (zero-cost)
    c3_packed = c32d.reshape(R, gx * f)

    eye = jnp.eye(gx, dtype=x2d.dtype)
    wcf_blk = jnp.kron(eye, w_cf)                # (gx*C, gx*f) block-diagonal
    w4_blk = jnp.kron(eye, w4.T)                 # (gx*f, gx*C) block-diagonal
    bcf_row = jnp.tile(b_cf, gx).reshape(1, gx * f)
    b4_row = jnp.tile(b4, gx).reshape(1, gx * C)

    out_packed = pallas_esa_tail(x_packed, c3_packed, wcf_blk, bcf_row, w4_blk, b4_row)
    out = out_packed.reshape(Mp, C)[:M].reshape(B, H, W, C)
    return jnp.transpose(out, (0, 3, 1, 2))      # back to NCHW


# --------------------------- deterministic parameters ------------------------ #

def init_params(key, num_feat=16):
    f = num_feat // 4
    ks = jax.random.split(key, 14)

    def rnd(k, shape, scale=0.1):
        return jax.random.normal(k, shape, jnp.float32) * scale

    return {
        # PyTorch shapes: Linear weight (out, in); Conv2d weight (out, in, kh, kw)
        "conv1_w": rnd(ks[0], (f, num_feat)),
        "conv1_b": rnd(ks[1], (f,)),
        "conv_f_w": rnd(ks[2], (f, f)),
        "conv_f_b": rnd(ks[3], (f,)),
        "conv_max_w": rnd(ks[4], (f, f, 3, 3)),
        "conv_max_b": rnd(ks[5], (f,)),
        "conv2_w": rnd(ks[6], (f, f, 3, 3)),
        "conv2_b": rnd(ks[7], (f,)),
        "conv3_w": rnd(ks[8], (f, f, 3, 3)),
        "conv3_b": rnd(ks[9], (f,)),
        "conv3__w": rnd(ks[10], (f, f, 3, 3)),
        "conv3__b": rnd(ks[11], (f,)),
        "conv4_w": rnd(ks[12], (num_feat, f)),
        "conv4_b": rnd(ks[13], (num_feat,)),
    }


if __name__ == "__main__":
    key = jax.random.PRNGKey(0)
    k_x, k_p = jax.random.split(key)

    # H, W must be >= 51 so conv2 -> maxpool(7,3) -> three valid 3x3 convs all
    # produce non-empty maps (a requirement of the PyTorch module itself).
    B, num_feat, H, W = 2, 16, 64, 64
    x = jax.random.normal(k_x, (B, num_feat, H, W), jnp.float32)
    params = init_params(k_p, num_feat)

    fwd = jax.jit(esa_forward)
    out = fwd(x, params)
    jax.block_until_ready(out)
    assert out.shape == (B, num_feat, H, W)
    assert out.dtype == jnp.float32
    print("KERNEL_OK")
</pallas_src>

<mosaic_0001>
module attributes {stable_mosaic.version = 11 : i64} {
  func.func @_matmul_bias_kernel(%arg0: i32, %arg1: memref<1922x144xf32, #tpu.memory_space<vmem>>, %arg2: memref<144x4xf32, #tpu.memory_space<vmem>>, %arg3: memref<1x4xf32, #tpu.memory_space<vmem>>, %arg4: memref<1922x4xf32, #tpu.memory_space<vmem>>) attributes {dimension_semantics = [#tpu.dimension_semantics<arbitrary>], iteration_bounds = array<i64: 1>, scalar_prefetch = 0 : i64, scratch_operands = 0 : i64, tpu.core_type = #tpu.core_type<tc>, window_params = [{pipeline_mode = #tpu.pipeline_mode<synchronous>, transform_indices = @transform_0, window_bounds = array<i64: 1922, 144>}, {pipeline_mode = #tpu.pipeline_mode<synchronous>, transform_indices = @transform_1, window_bounds = array<i64: 144, 4>}, {pipeline_mode = #tpu.pipeline_mode<synchronous>, transform_indices = @transform_2, window_bounds = array<i64: 1, 4>}, {pipeline_mode = #tpu.pipeline_mode<synchronous>, transform_indices = @transform_3, window_bounds = array<i64: 1922, 4>}]} {
    %c0 = arith.constant 0 : index
    %c0_0 = arith.constant 0 : index
    %0 = vector.load %arg1[%c0, %c0_0] : memref<1922x144xf32, #tpu.memory_space<vmem>>, vector<1922x144xf32>
    %c0_1 = arith.constant 0 : index
    %c0_2 = arith.constant 0 : index
    %1 = vector.load %arg2[%c0_1, %c0_2] : memref<144x4xf32, #tpu.memory_space<vmem>>, vector<144x4xf32>
    %cst = arith.constant dense<0.000000e+00> : vector<1922x4xf32>
    %2 = tpu.matmul %0, %1, %cst {dimension_numbers = #tpu.dot_dimension_numbers<[1], [0], [0], [1], [0, 0, 1, 1], [], []>} : vector<1922x144xf32>, vector<144x4xf32>, vector<1922x4xf32> -> vector<1922x4xf32>
    %c0_3 = arith.constant 0 : index
    %c0_4 = arith.constant 0 : index
    %3 = vector.load %arg3[%c0_3, %c0_4] : memref<1x4xf32, #tpu.memory_space<vmem>>, vector<1x4xf32>
    %4 = vector.broadcast %3 : vector<1x4xf32> to vector<1922x4xf32>
    %5 = arith.addf %2, %4 : vector<1922x4xf32>
    %c0_5 = arith.constant 0 : index
    %c0_6 = arith.constant 0 : index
    %6 = vector.load %arg4[%c0_5, %c0_6] : memref<1922x4xf32, #tpu.memory_space<vmem>>, vector<1922x4xf32>
    tpu.vector_store %arg4[%c0_5, %c0_6], %5 {strides = array<i32>} : memref<1922x4xf32, #tpu.memory_space<vmem>>, vector<1922x4xf32>,
    return
  }
  func.func @transform_0(%arg0: i32) -> (i32, i32) {
    %c0_i32 = arith.constant 0 : i32
    %c0_i32_0 = arith.constant 0 : i32
    %c0_i32_1 = arith.constant 0 : i32
    return %c0_i32, %c0_i32_0 : i32, i32
  }
  func.func @transform_1(%arg0: i32) -> (i32, i32) {
    %c0_i32 = arith.constant 0 : i32
    %c0_i32_0 = arith.constant 0 : i32
    %c0_i32_1 = arith.constant 0 : i32
    return %c0_i32, %c0_i32_0 : i32, i32
  }
  func.func @transform_2(%arg0: i32) -> (i32, i32) {
    %c0_i32 = arith.constant 0 : i32
    %c0_i32_0 = arith.constant 0 : i32
    %c0_i32_1 = arith.constant 0 : i32
    return %c0_i32, %c0_i32_0 : i32, i32
  }
  func.func @transform_3(%arg0: i32) -> (i32, i32) {
    %c0_i32 = arith.constant 0 : i32
    %c0_i32_0 = arith.constant 0 : i32
    %c0_i32_1 = arith.constant 0 : i32
    return %c0_i32, %c0_i32_0 : i32, i32
  }
}

module attributes {stable_mosaic.version = 11 : i64} {
  func.func @_matmul_bias_kernel(%arg0: i32, %arg1: memref<98x36xf32, #tpu.memory_space<vmem>>, %arg2: memref<36x4xf32, #tpu.memory_space<vmem>>, %arg3: memref<1x4xf32, #tpu.memory_space<vmem>>, %arg4: memref<98x4xf32, #tpu.memory_space<vmem>>) attributes {dimension_semantics = [#tpu.dimension_semantics<arbitrary>], iteration_bounds = array<i64: 1>, scalar_prefetch = 0 : i64, scratch_operands = 0 : i64, tpu.core_type = #tpu.core_type<tc>, window_params = [{pipeline_mode = #tpu.pipeline_mode<synchronous>, transform_indices = @transform_0, window_bounds = array<i64: 98, 36>}, {pipeline_mode = #tpu.pipeline_mode<synchronous>, transform_indices = @transform_1, window_bounds = array<i64: 36, 4>}, {pipeline_mode = #tpu.pipeline_mode<synchronous>, transform_indices = @transform_2, window_bounds = array<i64: 1, 4>}, {pipeline_mode = #tpu.pipeline_mode<synchronous>, transform_indices = @transform_3, window_bounds = array<i64: 98, 4>}]} {
    %c0 = arith.constant 0 : index
    %c0_0 = arith.constant 0 : index
    %0 = vector.load %arg1[%c0, %c0_0] : memref<98x36xf32, #tpu.memory_space<vmem>>, vector<98x36xf32>
    %c0_1 = arith.constant 0 : index
    %c0_2 = arith.constant 0 : index
    %1 = vector.load %arg2[%c0_1, %c0_2] : memref<36x4xf32, #tpu.memory_space<vmem>>, vector<36x4xf32>
    %cst = arith.constant dense<0.000000e+00> : vector<98x4xf32>
    %2 = tpu.matmul %0, %1, %cst {dimension_numbers = #tpu.dot_dimension_numbers<[1], [0], [0], [1], [0, 0, 1, 1], [], []>} : vector<98x36xf32>, vector<36x4xf32>, vector<98x4xf32> -> vector<98x4xf32>
    %c0_3 = arith.constant 0 : index
    %c0_4 = arith.constant 0 : index
    %3 = vector.load %arg3[%c0_3, %c0_4] : memref<1x4xf32, #tpu.memory_space<vmem>>, vector<1x4xf32>
    %4 = vector.broadcast %3 : vector<1x4xf32> to vector<98x4xf32>
    %5 = arith.addf %2, %4 : vector<98x4xf32>
    %c0_5 = arith.constant 0 : index
    %c0_6 = arith.constant 0 : index
    %6 = vector.load %arg4[%c0_5, %c0_6] : memref<98x4xf32, #tpu.memory_space<vmem>>, vector<98x4xf32>
    tpu.vector_store %arg4[%c0_5, %c0_6], %5 {strides = array<i32>} : memref<98x4xf32, #tpu.memory_space<vmem>>, vector<98x4xf32>,
    return
  }
  func.func @transform_0(%arg0: i32) -> (i32, i32) {
    %c0_i32 = arith.constant 0 : i32
    %c0_i32_0 = arith.constant 0 : i32
    %c0_i32_1 = arith.constant 0 : i32
    return %c0_i32, %c0_i32_0 : i32, i32
  }
  func.func @transform_1(%arg0: i32) -> (i32, i32) {
    %c0_i32 = arith.constant 0 : i32
    %c0_i32_0 = arith.constant 0 : i32
    %c0_i32_1 = arith.constant 0 : i32
    return %c0_i32, %c0_i32_0 : i32, i32
  }
  func.func @transform_2(%arg0: i32) -> (i32, i32) {
    %c0_i32 = arith.constant 0 : i32
    %c0_i32_0 = arith.constant 0 : i32
    %c0_i32_1 = arith.constant 0 : i32
    return %c0_i32, %c0_i32_0 : i32, i32
  }
  func.func @transform_3(%arg0: i32) -> (i32, i32) {
    %c0_i32 = arith.constant 0 : i32
    %c0_i32_0 = arith.constant 0 : i32
    %c0_i32_1 = arith.constant 0 : i32
    return %c0_i32, %c0_i32_0 : i32, i32
  }
}

module attributes {stable_mosaic.version = 11 : i64} {
  func.func @_matmul_bias_kernel(%arg0: i32, %arg1: memref<50x36xf32, #tpu.memory_space<vmem>>, %arg2: memref<36x4xf32, #tpu.memory_space<vmem>>, %arg3: memref<1x4xf32, #tpu.memory_space<vmem>>, %arg4: memref<50x4xf32, #tpu.memory_space<vmem>>) attributes {dimension_semantics = [#tpu.dimension_semantics<arbitrary>], iteration_bounds = array<i64: 1>, scalar_prefetch = 0 : i64, scratch_operands = 0 : i64, tpu.core_type = #tpu.core_type<tc>, window_params = [{pipeline_mode = #tpu.pipeline_mode<synchronous>, transform_indices = @transform_0, window_bounds = array<i64: 50, 36>}, {pipeline_mode = #tpu.pipeline_mode<synchronous>, transform_indices = @transform_1, window_bounds = array<i64: 36, 4>}, {pipeline_mode = #tpu.pipeline_mode<synchronous>, transform_indices = @transform_2, window_bounds = array<i64: 1, 4>}, {pipeline_mode = #tpu.pipeline_mode<synchronous>, transform_indices = @transform_3, window_bounds = array<i64: 50, 4>}]} {
    %c0 = arith.constant 0 : index
    %c0_0 = arith.constant 0 : index
    %0 = vector.load %arg1[%c0, %c0_0] : memref<50x36xf32, #tpu.memory_space<vmem>>, vector<50x36xf32>
    %c0_1 = arith.constant 0 : index
    %c0_2 = arith.constant 0 : index
    %1 = vector.load %arg2[%c0_1, %c0_2] : memref<36x4xf32, #tpu.memory_space<vmem>>, vector<36x4xf32>
    %cst = arith.constant dense<0.000000e+00> : vector<50x4xf32>
    %2 = tpu.matmul %0, %1, %cst {dimension_numbers = #tpu.dot_dimension_numbers<[1], [0], [0], [1], [0, 0, 1, 1], [], []>} : vector<50x36xf32>, vector<36x4xf32>, vector<50x4xf32> -> vector<50x4xf32>
    %c0_3 = arith.constant 0 : index
    %c0_4 = arith.constant 0 : index
    %3 = vector.load %arg3[%c0_3, %c0_4] : memref<1x4xf32, #tpu.memory_space<vmem>>, vector<1x4xf32>
    %4 = vector.broadcast %3 : vector<1x4xf32> to vector<50x4xf32>
    %5 = arith.addf %2, %4 : vector<50x4xf32>
    %c0_5 = arith.constant 0 : index
    %c0_6 = arith.constant 0 : index
    %6 = vector.load %arg4[%c0_5, %c0_6] : memref<50x4xf32, #tpu.memory_space<vmem>>, vector<50x4xf32>
    tpu.vector_store %arg4[%c0_5, %c0_6], %5 {strides = array<i32>} : memref<50x4xf32, #tpu.memory_space<vmem>>, vector<50x4xf32>,
    return
  }
  func.func @transform_0(%arg0: i32) -> (i32, i32) {
    %c0_i32 = arith.constant 0 : i32
    %c0_i32_0 = arith.constant 0 : i32
    %c0_i32_1 = arith.constant 0 : i32
    return %c0_i32, %c0_i32_0 : i32, i32
  }
  func.func @transform_1(%arg0: i32) -> (i32, i32) {
    %c0_i32 = arith.constant 0 : i32
    %c0_i32_0 = arith.constant 0 : i32
    %c0_i32_1 = arith.constant 0 : i32
    return %c0_i32, %c0_i32_0 : i32, i32
  }
  func.func @transform_2(%arg0: i32) -> (i32, i32) {
    %c0_i32 = arith.constant 0 : i32
    %c0_i32_0 = arith.constant 0 : i32
    %c0_i32_1 = arith.constant 0 : i32
    return %c0_i32, %c0_i32_0 : i32, i32
  }
  func.func @transform_3(%arg0: i32) -> (i32, i32) {
    %c0_i32 = arith.constant 0 : i32
    %c0_i32_0 = arith.constant 0 : i32
    %c0_i32_1 = arith.constant 0 : i32
    return %c0_i32, %c0_i32_0 : i32, i32
  }
}

module attributes {stable_mosaic.version = 11 : i64} {
  func.func @_matmul_bias_kernel(%arg0: i32, %arg1: memref<18x36xf32, #tpu.memory_space<vmem>>, %arg2: memref<36x4xf32, #tpu.memory_space<vmem>>, %arg3: memref<1x4xf32, #tpu.memory_space<vmem>>, %arg4: memref<18x4xf32, #tpu.memory_space<vmem>>) attributes {dimension_semantics = [#tpu.dimension_semantics<arbitrary>], iteration_bounds = array<i64: 1>, scalar_prefetch = 0 : i64, scratch_operands = 0 : i64, tpu.core_type = #tpu.core_type<tc>, window_params = [{pipeline_mode = #tpu.pipeline_mode<synchronous>, transform_indices = @transform_0, window_bounds = array<i64: 18, 36>}, {pipeline_mode = #tpu.pipeline_mode<synchronous>, transform_indices = @transform_1, window_bounds = array<i64: 36, 4>}, {pipeline_mode = #tpu.pipeline_mode<synchronous>, transform_indices = @transform_2, window_bounds = array<i64: 1, 4>}, {pipeline_mode = #tpu.pipeline_mode<synchronous>, transform_indices = @transform_3, window_bounds = array<i64: 18, 4>}]} {
    %c0 = arith.constant 0 : index
    %c0_0 = arith.constant 0 : index
    %0 = vector.load %arg1[%c0, %c0_0] : memref<18x36xf32, #tpu.memory_space<vmem>>, vector<18x36xf32>
    %c0_1 = arith.constant 0 : index
    %c0_2 = arith.constant 0 : index
    %1 = vector.load %arg2[%c0_1, %c0_2] : memref<36x4xf32, #tpu.memory_space<vmem>>, vector<36x4xf32>
    %cst = arith.constant dense<0.000000e+00> : vector<18x4xf32>
    %2 = tpu.matmul %0, %1, %cst {dimension_numbers = #tpu.dot_dimension_numbers<[1], [0], [0], [1], [0, 0, 1, 1], [], []>} : vector<18x36xf32>, vector<36x4xf32>, vector<18x4xf32> -> vector<18x4xf32>
    %c0_3 = arith.constant 0 : index
    %c0_4 = arith.constant 0 : index
    %3 = vector.load %arg3[%c0_3, %c0_4] : memref<1x4xf32, #tpu.memory_space<vmem>>, vector<1x4xf32>
    %4 = vector.broadcast %3 : vector<1x4xf32> to vector<18x4xf32>
    %5 = arith.addf %2, %4 : vector<18x4xf32>
    %c0_5 = arith.constant 0 : index
    %c0_6 = arith.constant 0 : index
    %6 = vector.load %arg4[%c0_5, %c0_6] : memref<18x4xf32, #tpu.memory_space<vmem>>, vector<18x4xf32>
    tpu.vector_store %arg4[%c0_5, %c0_6], %5 {strides = array<i32>} : memref<18x4xf32, #tpu.memory_space<vmem>>, vector<18x4xf32>,
    return
  }
  func.func @transform_0(%arg0: i32) -> (i32, i32) {
    %c0_i32 = arith.constant 0 : i32
    %c0_i32_0 = arith.constant 0 : i32
    %c0_i32_1 = arith.constant 0 : i32
    return %c0_i32, %c0_i32_0 : i32, i32
  }
  func.func @transform_1(%arg0: i32) -> (i32, i32) {
    %c0_i32 = arith.constant 0 : i32
    %c0_i32_0 = arith.constant 0 : i32
    %c0_i32_1 = arith.constant 0 : i32
    return %c0_i32, %c0_i32_0 : i32, i32
  }
  func.func @transform_2(%arg0: i32) -> (i32, i32) {
    %c0_i32 = arith.constant 0 : i32
    %c0_i32_0 = arith.constant 0 : i32
    %c0_i32_1 = arith.constant 0 : i32
    return %c0_i32, %c0_i32_0 : i32, i32
  }
  func.func @transform_3(%arg0: i32) -> (i32, i32) {
    %c0_i32 = arith.constant 0 : i32
    %c0_i32_0 = arith.constant 0 : i32
    %c0_i32_1 = arith.constant 0 : i32
    return %c0_i32, %c0_i32_0 : i32, i32
  }
}

module attributes {stable_mosaic.version = 11 : i64} {
  func.func @_esa_tail_kernel(%arg0: i32, %arg1: memref<256x128xf32, #tpu.memory_space<vmem>>, %arg2: memref<256x32xf32, #tpu.memory_space<vmem>>, %arg3: memref<128x32xf32, #tpu.memory_space<vmem>>, %arg4: memref<1x32xf32, #tpu.memory_space<vmem>>, %arg5: memref<32x128xf32, #tpu.memory_space<vmem>>, %arg6: memref<1x128xf32, #tpu.memory_space<vmem>>, %arg7: memref<256x128xf32, #tpu.memory_space<vmem>>) attributes {dimension_semantics = [#tpu.dimension_semantics<parallel>], iteration_bounds = array<i64: 4>, scalar_prefetch = 0 : i64, scratch_operands = 0 : i64, tpu.core_type = #tpu.core_type<tc>, window_params = [{transform_indices = @transform_0, window_bounds = array<i64: 256, 128>}, {transform_indices = @transform_1, window_bounds = array<i64: 256, 32>}, {pipeline_mode = #tpu.pipeline_mode<synchronous>, transform_indices = @transform_2, window_bounds = array<i64: 128, 32>}, {pipeline_mode = #tpu.pipeline_mode<synchronous>, transform_indices = @transform_3, window_bounds = array<i64: 1, 32>}, {pipeline_mode = #tpu.pipeline_mode<synchronous>, transform_indices = @transform_4, window_bounds = array<i64: 32, 128>}, {pipeline_mode = #tpu.pipeline_mode<synchronous>, transform_indices = @transform_5, window_bounds = array<i64: 1, 128>}, {transform_indices = @transform_6, window_bounds = array<i64: 256, 128>}]} {
    %c0 = arith.constant 0 : index
    %c0_0 = arith.constant 0 : index
    %0 = vector.load %arg1[%c0, %c0_0] : memref<256x128xf32, #tpu.memory_space<vmem>>, vector<256x128xf32>
    %c0_1 = arith.constant 0 : index
    %c0_2 = arith.constant 0 : index
    %1 = vector.load %arg3[%c0_1, %c0_2] : memref<128x32xf32, #tpu.memory_space<vmem>>, vector<128x32xf32>
    %cst = arith.constant dense<0.000000e+00> : vector<256x32xf32>
    %2 = tpu.matmul %0, %1, %cst {dimension_numbers = #tpu.dot_dimension_numbers<[1], [0], [0], [1], [0, 0, 1, 1], [], []>} : vector<256x128xf32>, vector<128x32xf32>, vector<256x32xf32> -> vector<256x32xf32>
    %c0_3 = arith.constant 0 : index
    %c0_4 = arith.constant 0 : index
    %3 = vector.load %arg4[%c0_3, %c0_4] : memref<1x32xf32, #tpu.memory_space<vmem>>, vector<1x32xf32>
    %4 = vector.broadcast %3 : vector<1x32xf32> to vector<256x32xf32>
    %5 = arith.addf %2, %4 : vector<256x32xf32>
    %c0_5 = arith.constant 0 : index
    %c0_6 = arith.constant 0 : index
    %6 = vector.load %arg2[%c0_5, %c0_6] : memref<256x32xf32, #tpu.memory_space<vmem>>, vector<256x32xf32>
    %7 = arith.addf %6, %5 : vector<256x32xf32>
    %c0_7 = arith.constant 0 : index
    %c0_8 = arith.constant 0 : index
    %8 = vector.load %arg5[%c0_7, %c0_8] : memref<32x128xf32, #tpu.memory_space<vmem>>, vector<32x128xf32>
    %cst_9 = arith.constant dense<0.000000e+00> : vector<256x128xf32>
    %9 = tpu.matmul %7, %8, %cst_9 {dimension_numbers = #tpu.dot_dimension_numbers<[1], [0], [0], [1], [0, 0, 1, 1], [], []>} : vector<256x32xf32>, vector<32x128xf32>, vector<256x128xf32> -> vector<256x128xf32>
    %c0_10 = arith.constant 0 : index
    %c0_11 = arith.constant 0 : index
    %10 = vector.load %arg6[%c0_10, %c0_11] : memref<1x128xf32, #tpu.memory_space<vmem>>, vector<1x128xf32>
    %11 = vector.broadcast %10 : vector<1x128xf32> to vector<256x128xf32>
    %12 = arith.addf %9, %11 : vector<256x128xf32>
    %cst_12 = arith.constant 0.000000e+00 : f32
    %13 = vector.broadcast %cst_12 : f32 to vector<256x128xf32>
    %14 = arith.subf %13, %12 : vector<256x128xf32>
    %15 = math.exp %14 : vector<256x128xf32>
    %cst_13 = arith.constant 1.000000e+00 : f32
    %16 = vector.broadcast %cst_13 : f32 to vector<256x128xf32>
    %17 = arith.addf %16, %15 : vector<256x128xf32>
    %cst_14 = arith.constant 1.000000e+00 : f32
    %18 = vector.broadcast %cst_14 : f32 to vector<256x128xf32>
    %19 = arith.divf %18, %17 : vector<256x128xf32>
    %20 = arith.mulf %0, %19 : vector<256x128xf32>
    %c0_15 = arith.constant 0 : index
    %c0_16 = arith.constant 0 : index
    %21 = vector.load %arg7[%c0_15, %c0_16] : memref<256x128xf32, #tpu.memory_space<vmem>>, vector<256x128xf32>
    tpu.vector_store %arg7[%c0_15, %c0_16], %20 {strides = array<i32>} : memref<256x128xf32, #tpu.memory_space<vmem>>, vector<256x128xf32>,
    return
  }
  func.func @transform_0(%arg0: i32) -> (i32, i32) {
    %c0_i32 = arith.constant 0 : i32
    %c0_i32_0 = arith.constant 0 : i32
    return %arg0, %c0_i32 : i32, i32
  }
  func.func @transform_1(%arg0: i32) -> (i32, i32) {
    %c0_i32 = arith.constant 0 : i32
    %c0_i32_0 = arith.constant 0 : i32
    return %arg0, %c0_i32 : i32, i32
  }
  func.func @transform_2(%arg0: i32) -> (i32, i32) {
    %c0_i32 = arith.constant 0 : i32
    %c0_i32_0 = arith.constant 0 : i32
    %c0_i32_1 = arith.constant 0 : i32
    return %c0_i32, %c0_i32_0 : i32, i32
  }
  func.func @transform_3(%arg0: i32) -> (i32, i32) {
    %c0_i32 = arith.constant 0 : i32
    %c0_i32_0 = arith.constant 0 : i32
    %c0_i32_1 = arith.constant 0 : i32
    return %c0_i32, %c0_i32_0 : i32, i32
  }
  func.func @transform_4(%arg0: i32) -> (i32, i32) {
    %c0_i32 = arith.constant 0 : i32
    %c0_i32_0 = arith.constant 0 : i32
    %c0_i32_1 = arith.constant 0 : i32
    return %c0_i32, %c0_i32_0 : i32, i32
  }
  func.func @transform_5(%arg0: i32) -> (i32, i32) {
    %c0_i32 = arith.constant 0 : i32
    %c0_i32_0 = arith.constant 0 : i32
    %c0_i32_1 = arith.constant 0 : i32
    return %c0_i32, %c0_i32_0 : i32, i32
  }
  func.func @transform_6(%arg0: i32) -> (i32, i32) {
    %c0_i32 = arith.constant 0 : i32
    %c0_i32_0 = arith.constant 0 : i32
    return %arg0, %c0_i32 : i32, i32
  }
}

</mosaic_0001>

<llo_original>
// kernel: esa_forward.5
$region0: #{esa_forward.5}
  #allocation0 [shape = 'u32[]', space=smem, size = 0x4, offset = 0x4, fixed_abs, tag = 'smem constant byte address 0x4 - core index']
  #allocation1 [shape = 'u32[72,128]{1,0:T(1,128)}', space=vmem, size = 0x9000, scoped, tag = 'internal scratch']
  %s0 = inlined_call_operand.vmem [shape: f32[1922,144], index: 0, kind: input, shape index: {}]
  %s1 = inlined_call_operand.vmem [shape: f32[144,4], index: 1, kind: input, shape index: {}]
  %s2 = inlined_call_operand.vmem [shape: f32[1,4], index: 2, kind: input, shape index: {}]
  %s3 = inlined_call_operand.vmem [shape: f32[1922,4], index: 3, kind: output, shape index: {}]
  %s4 = sld [smem:[#allocation0]]
  $region22: #{esa_forward.5} parent=0
    _
  %s6 = ssub.s32 1, %s4
  %s7 = scalar_select 0, %s6, %s4
  // Predicated region
  $region2: #{esa_forward.5} parent=0 // pred_check
    _
  $region3: #{esa_forward.5} parent=0 // pred_check_branch
    %9 = sbr.rel (0) target = $region5
  $region4: #{esa_forward.5} parent=0 // pred_region
    _
  $region5: #{esa_forward.5} parent=0 // pred_fallthru
    _
  // Predicated region
  $region6: #{esa_forward.5} parent=0 // pred_check
    _
  $region7: #{esa_forward.5} parent=0 // pred_check_branch
    %11 = sbr.rel (0) target = $region9
  $region8: #{esa_forward.5} parent=0 // pred_region
    _
  $region9: #{esa_forward.5} parent=0 // pred_fallthru
    _
  // Predicated region
  $region10: #{esa_forward.5} parent=0 // pred_check
    _
  $region11: #{esa_forward.5} parent=0 // pred_check_branch
    %13 = sbr.rel (0) target = $region13
  $region12: #{esa_forward.5} parent=0 // pred_region
    _
  $region13: #{esa_forward.5} parent=0 // pred_fallthru
    _
  %v14 = vld [vmem:[%s0] sm:$0xff]
  %v15 = vld [vmem:[%s0 + $0x8] sm:$0xff]
  %v16 = vld [vmem:[%s0 + $0x10] sm:$0xff]
  %v17 = vld [vmem:[%s0 + $0x18] sm:$0xff]
  %v18 = vld [vmem:[%s0 + $0x20] sm:$0xff]
  %v19 = vld [vmem:[%s0 + $0x28] sm:$0xff]
  %v20 = vld [vmem:[%s0 + $0x30] sm:$0xff]
  %v21 = vld [vmem:[%s0 + $0x38] sm:$0xff]
  %v22 = vld [vmem:[%s0 + $0x40] sm:$0xff]
  %v23 = vld [vmem:[%s0 + $0x48] sm:$0xff]
  %v24 = vld [vmem:[%s0 + $0x50] sm:$0xff]
  %v25 = vld [vmem:[%s0 + $0x58] sm:$0xff]
  %v26 = vld [vmem:[%s0 + $0x60] sm:$0xff]
  %v27 = vld [vmem:[%s0 + $0x68] sm:$0xff]
  %v28 = vld [vmem:[%s0 + $0x70] sm:$0xff]
  %v29 = vld [vmem:[%s0 + $0x78] sm:$0xff]
  %v30 = vld [vmem:[%s0 + $0x80] sm:$0xff]
  %v31 = vld [vmem:[%s0 + $0x88] sm:$0xff]
  %v32 = vld [vmem:[%s0 + $0x90] sm:$0xff]
  %v33 = vld [vmem:[%s0 + $0x98] sm:$0xff]
  %v34 = vld [vmem:[%s0 + $0xa0] sm:$0xff]
  %v35 = vld [vmem:[%s0 + $0xa8] sm:$0xff]
  %v36 = vld [vmem:[%s0 + $0xb0] sm:$0xff]
  %v37 = vld [vmem:[%s0 + $0xb8] sm:$0xff]
  %v38 = vld [vmem:[%s0 + $0xc0] sm:$0xff]
  %v39 = vld [vmem:[%s0 + $0xc8] sm:$0xff]
  %v40 = vld [vmem:[%s0 + $0xd0] sm:$0xff]
  %v41 = vld [vmem:[%s0 + $0xd8] sm:$0xff]
  %v42 = vld [vmem:[%s0 + $0xe0] sm:$0xff]
  %v43 = vld [vmem:[%s0 + $0xe8] sm:$0xff]
  %v44 = vld [vmem:[%s0 + $0xf0] sm:$0xff]
  %v45 = vld [vmem:[%s0 + $0xf8] sm:$0xff]
  %v46 = vld [vmem:[%s0 + $0x100] sm:$0xff]
  %v47 = vld [vmem:[%s0 + $0x108] sm:$0xff]
  %v48 = vld [vmem:[%s0 + $0x110] sm:$0xff]
  %v49 = vld [vmem:[%s0 + $0x118] sm:$0xff]
  %v50 = vld [vmem:[%s0 + $0x120] sm:$0xff]
  %v51 = vld [vmem:[%s0 + $0x128] sm:$0xff]
  %v52 = vld [vmem:[%s0 + $0x130] sm:$0xff]
  %v53 = vld [vmem:[%s0 + $0x138] sm:$0xff]
  %v54 = vld [vmem:[%s0 + $0x140] sm:$0xff]
  %v55 = vld [vmem:[%s0 + $0x148] sm:$0xff]
  %v56 = vld [vmem:[%s0 + $0x150] sm:$0xff]
  %v57 = vld [vmem:[%s0 + $0x158] sm:$0xff]
  %v58 = vld [vmem:[%s0 + $0x160] sm:$0xff]
  %v59 = vld [vmem:[%s0 + $0x168] sm:$0xff]
  %v60 = vld [vmem:[%s0 + $0x170] sm:$0xff]
  %v61 = vld [vmem:[%s0 + $0x178] sm:$0xff]
  %v62 = vld [vmem:[%s0 + $0x180] sm:$0xff]
  %v63 = vld [vmem:[%s0 + $0x188] sm:$0xff]
  %v64 = vld [vmem:[%s0 + $0x190] sm:$0xff]
  %v65 = vld [vmem:[%s0 + $0x198] sm:$0xff]
  %v66 = vld [vmem:[%s0 + $0x1a0] sm:$0xff]
  %v67 = vld [vmem:[%s0 + $0x1a8] sm:$0xff]
  %v68 = vld [vmem:[%s0 + $0x1b0] sm:$0xff]
  %v69 = vld [vmem:[%s0 + $0x1b8] sm:$0xff]
  %v70 = vld [vmem:[%s0 + $0x1c0] sm:$0xff]
  %v71 = vld [vmem:[%s0 + $0x1c8] sm:$0xff]
  %v72 = vld [vmem:[%s0 + $0x1d0] sm:$0xff]
  %v73 = vld [vmem:[%s0 + $0x1d8] sm:$0xff]
  %v74 = vld [vmem:[%s0 + $0x1e0] sm:$0xff]
  %v75 = vld [vmem:[%s0 + $0x1e8] sm:$0xff]
  %v76 = vld [vmem:[%s0 + $0x1f0] sm:$0xff]
  %v77 = vld [vmem:[%s0 + $0x1f8] sm:$0xff]
  %v78 = vld [vmem:[%s0 + $0x200] sm:$0xff]
  %v79 = vld [vmem:[%s0 + $0x208] sm:$0xff]
  %v80 = vld [vmem:[%s0 + $0x210] sm:$0xff]
  %v81 = vld [vmem:[%s0 + $0x218] sm:$0xff]
  %v82 = vld [vmem:[%s0 + $0x220] sm:$0xff]
  %v83 = vld [vmem:[%s0 + $0x228] sm:$0xff]
  %v84 = vld [vmem:[%s0 + $0x230] sm:$0xff]
  %v85 = vld [vmem:[%s0 + $0x238] sm:$0xff]
  %v86 = vld [vmem:[%s0 + $0x240] sm:$0xff]
  %v87 = vld [vmem:[%s0 + $0x248] sm:$0xff]
  %v88 = vld [vmem:[%s0 + $0x250] sm:$0xff]
  %v89 = vld [vmem:[%s0 + $0x258] sm:$0xff]
  %v90 = vld [vmem:[%s0 + $0x260] sm:$0xff]
  %v91 = vld [vmem:[%s0 + $0x268] sm:$0xff]
  %v92 = vld [vmem:[%s0 + $0x270] sm:$0xff]
  %v93 = vld [vmem:[%s0 + $0x278] sm:$0xff]
  %v94 = vld [vmem:[%s0 + $0x280] sm:$0xff]
  %v95 = vld [vmem:[%s0 + $0x288] sm:$0xff]
  %v96 = vld [vmem:[%s0 + $0x290] sm:$0xff]
  %v97 = vld [vmem:[%s0 + $0x298] sm:$0xff]
  %v98 = vld [vmem:[%s0 + $0x2a0] sm:$0xff]
  %v99 = vld [vmem:[%s0 + $0x2a8] sm:$0xff]
  %v100 = vld [vmem:[%s0 + $0x2b0] sm:$0xff]
  %v101 = vld [vmem:[%s0 + $0x2b8] sm:$0xff]
  %v102 = vld [vmem:[%s0 + $0x2c0] sm:$0xff]
  %v103 = vld [vmem:[%s0 + $0x2c8] sm:$0xff]
  %v104 = vld [vmem:[%s0 + $0x2d0] sm:$0xff]
  %v105 = vld [vmem:[%s0 + $0x2d8] sm:$0xff]
  %v106 = vld [vmem:[%s0 + $0x2e0] sm:$0xff]
  %v107 = vld [vmem:[%s0 + $0x2e8] sm:$0xff]
  %v108 = vld [vmem:[%s0 + $0x2f0] sm:$0xff]
  %v109 = vld [vmem:[%s0 + $0x2f8] sm:$0xff]
  %v110 = vld [vmem:[%s0 + $0x300] sm:$0xff]
  %v111 = vld [vmem:[%s0 + $0x308] sm:$0xff]
  %v112 = vld [vmem:[%s0 + $0x310] sm:$0xff]
  %v113 = vld [vmem:[%s0 + $0x318] sm:$0xff]
  %v114 = vld [vmem:[%s0 + $0x320] sm:$0xff]
  %v115 = vld [vmem:[%s0 + $0x328] sm:$0xff]
  %v116 = vld [vmem:[%s0 + $0x330] sm:$0xff]
  %v117 = vld [vmem:[%s0 + $0x338] sm:$0xff]
  %v118 = vld [vmem:[%s0 + $0x340] sm:$0xff]
  %v119 = vld [vmem:[%s0 + $0x348] sm:$0xff]
  %v120 = vld [vmem:[%s0 + $0x350] sm:$0xff]
  %v121 = vld [vmem:[%s0 + $0x358] sm:$0xff]
  %v122 = vld [vmem:[%s0 + $0x360] sm:$0xff]
  %v123 = vld [vmem:[%s0 + $0x368] sm:$0xff]
  %v124 = vld [vmem:[%s0 + $0x370] sm:$0xff]
  %v125 = vld [vmem:[%s0 + $0x378] sm:$0xff]
  %v126 = vld [vmem:[%s0 + $0x380] sm:$0xff]
  %v127 = vld [vmem:[%s0 + $0x388] sm:$0xff]
  %v128 = vld [vmem:[%s0 + $0x390] sm:$0xff]
  %v129 = vld [vmem:[%s0 + $0x398] sm:$0xff]
  %v130 = vld [vmem:[%s0 + $0x3a0] sm:$0xff]
  %v131 = vld [vmem:[%s0 + $0x3a8] sm:$0xff]
  %v132 = vld [vmem:[%s0 + $0x3b0] sm:$0xff]
  %v133 = vld [vmem:[%s0 + $0x3b8] sm:$0xff]
  %v134 = vld [vmem:[%s0 + $0x3c0] sm:$0xff]
  %v135 = vld [vmem:[%s0 + $0x3c8] sm:$0xff]
  %v136 = vld [vmem:[%s0 + $0x3d0] sm:$0xff]
  %v137 = vld [vmem:[%s0 + $0x3d8] sm:$0xff]
  %v138 = vld [vmem:[%s0 + $0x3e0] sm:$0xff]
  %v139 = vld [vmem:[%s0 + $0x3e8] sm:$0xff]
  %v140 = vld [vmem:[%s0 + $0x3f0] sm:$0xff]
  %v141 = vld [vmem:[%s0 + $0x3f8] sm:$0xff]
  %v142 = vld [vmem:[%s0 + $0x400] sm:$0xff]
  %v143 = vld [vmem:[%s0 + $0x408] sm:$0xff]
  %v144 = vld [vmem:[%s0 + $0x410] sm:$0xff]
  %v145 = vld [vmem:[%s0 + $0x418] sm:$0xff]
  %v146 = vld [vmem:[%s0 + $0x420] sm:$0xff]
  %v147 = vld [vmem:[%s0 + $0x428] sm:$0xff]
  %v148 = vld [vmem:[%s0 + $0x430] sm:$0xff]
  %v149 = vld [vmem:[%s0 + $0x438] sm:$0xff]
  %v150 = vld [vmem:[%s0 + $0x440] sm:$0xff]
  %v151 = vld [vmem:[%s0 + $0x448] sm:$0xff]
  %v152 = vld [vmem:[%s0 + $0x450] sm:$0xff]
  %v153 = vld [vmem:[%s0 + $0x458] sm:$0xff]
  %v154 = vld [vmem:[%s0 + $0x460] sm:$0xff]
  %v155 = vld [vmem:[%s0 + $0x468] sm:$0xff]
  %v156 = vld [vmem:[%s0 + $0x470] sm:$0xff]
  %v157 = vld [vmem:[%s0 + $0x478] sm:$0xff]
  %v158 = vld [vmem:[%s0 + $0x480] sm:$0xff]
  %v159 = vld [vmem:[%s0 + $0x488] sm:$0xff]
  %v160 = vld [vmem:[%s0 + $0x490] sm:$0xff]
  %v161 = vld [vmem:[%s0 + $0x498] sm:$0xff]
  %v162 = vld [vmem:[%s0 + $0x4a0] sm:$0xff]
  %v163 = vld [vmem:[%s0 + $0x4a8] sm:$0xff]
  %v164 = vld [vmem:[%s0 + $0x4b0] sm:$0xff]
  %v165 = vld [vmem:[%s0 + $0x4b8] sm:$0xff]
  %v166 = vld [vmem:[%s0 + $0x4c0] sm:$0xff]
  %v167 = vld [vmem:[%s0 + $0x4c8] sm:$0xff]
  %v168 = vld [vmem:[%s0 + $0x4d0] sm:$0xff]
  %v169 = vld [vmem:[%s0 + $0x4d8] sm:$0xff]
  %v170 = vld [vmem:[%s0 + $0x4e0] sm:$0xff]
  %v171 = vld [vmem:[%s0 + $0x4e8] sm:$0xff]
  %v172 = vld [vmem:[%s0 + $0x4f0] sm:$0xff]
  %v173 = vld [vmem:[%s0 + $0x4f8] sm:$0xff]
  %v174 = vld [vmem:[%s0 + $0x500] sm:$0xff]
  %v175 = vld [vmem:[%s0 + $0x508] sm:$0xff]
  %v176 = vld [vmem:[%s0 + $0x510] sm:$0xff]
  %v177 = vld [vmem:[%s0 + $0x518] sm:$0xff]
  %v178 = vld [vmem:[%s0 + $0x520] sm:$0xff]
  %v179 = vld [vmem:[%s0 + $0x528] sm:$0xff]
  %v180 = vld [vmem:[%s0 + $0x530] sm:$0xff]
  %v181 = vld [vmem:[%s0 + $0x538] sm:$0xff]
  %v182 = vld [vmem:[%s0 + $0x540] sm:$0xff]
  %v183 = vld [vmem:[%s0 + $0x548] sm:$0xff]
  %v184 = vld [vmem:[%s0 + $0x550] sm:$0xff]
  %v185 = vld [vmem:[%s0 + $0x558] sm:$0xff]
  %v186 = vld [vmem:[%s0 + $0x560] sm:$0xff]
  %v187 = vld [vmem:[%s0 + $0x568] sm:$0xff]
  %v188 = vld [vmem:[%s0 + $0x570] sm:$0xff]
  %v189 = vld [vmem:[%s0 + $0x578] sm:$0xff]
  %v190 = vld [vmem:[%s0 + $0x580] sm:$0xff]
  %v191 = vld [vmem:[%s0 + $0x588] sm:$0xff]
  %v192 = vld [vmem:[%s0 + $0x590] sm:$0xff]
  %v193 = vld [vmem:[%s0 + $0x598] sm:$0xff]
  %v194 = vld [vmem:[%s0 + $0x5a0] sm:$0xff]
  %v195 = vld [vmem:[%s0 + $0x5a8] sm:$0xff]
  %v196 = vld [vmem:[%s0 + $0x5b0] sm:$0xff]
  %v197 = vld [vmem:[%s0 + $0x5b8] sm:$0xff]
  %v198 = vld [vmem:[%s0 + $0x5c0] sm:$0xff]
  %v199 = vld [vmem:[%s0 + $0x5c8] sm:$0xff]
  %v200 = vld [vmem:[%s0 + $0x5d0] sm:$0xff]
  %v201 = vld [vmem:[%s0 + $0x5d8] sm:$0xff]
  %v202 = vld [vmem:[%s0 + $0x5e0] sm:$0xff]
  %v203 = vld [vmem:[%s0 + $0x5e8] sm:$0xff]
  %v204 = vld [vmem:[%s0 + $0x5f0] sm:$0xff]
  %v205 = vld [vmem:[%s0 + $0x5f8] sm:$0xff]
  %v206 = vld [vmem:[%s0 + $0x600] sm:$0xff]
  %v207 = vld [vmem:[%s0 + $0x608] sm:$0xff]
  %v208 = vld [vmem:[%s0 + $0x610] sm:$0xff]
  %v209 = vld [vmem:[%s0 + $0x618] sm:$0xff]
  %v210 = vld [vmem:[%s0 + $0x620] sm:$0xff]
  %v211 = vld [vmem:[%s0 + $0x628] sm:$0xff]
  %v212 = vld [vmem:[%s0 + $0x630] sm:$0xff]
  %v213 = vld [vmem:[%s0 + $0x638] sm:$0xff]
  %v214 = vld [vmem:[%s0 + $0x640] sm:$0xff]
  %v215 = vld [vmem:[%s0 + $0x648] sm:$0xff]
  %v216 = vld [vmem:[%s0 + $0x650] sm:$0xff]
  %v217 = vld [vmem:[%s0 + $0x658] sm:$0xff]
  %v218 = vld [vmem:[%s0 + $0x660] sm:$0xff]
  %v219 = vld [vmem:[%s0 + $0x668] sm:$0xff]
  %v220 = vld [vmem:[%s0 + $0x670] sm:$0xff]
  %v221 = vld [vmem:[%s0 + $0x678] sm:$0xff]
  %v222 = vld [vmem:[%s0 + $0x680] sm:$0xff]
  %v223 = vld [vmem:[%s0 + $0x688] sm:$0xff]
  %v224 = vld [vmem:[%s0 + $0x690] sm:$0xff]
  %v225 = vld [vmem:[%s0 + $0x698] sm:$0xff]
  %v226 = vld [vmem:[%s0 + $0x6a0] sm:$0xff]
  %v227 = vld [vmem:[%s0 + $0x6a8] sm:$0xff]
  %v228 = vld [vmem:[%s0 + $0x6b0] sm:$0xff]
  %v229 = vld [vmem:[%s0 + $0x6b8] sm:$0xff]
  %v230 = vld [vmem:[%s0 + $0x6c0] sm:$0xff]
  %v231 = vld [vmem:[%s0 + $0x6c8] sm:$0xff]
  %v232 = vld [vmem:[%s0 + $0x6d0] sm:$0xff]
  %v233 = vld [vmem:[%s0 + $0x6d8] sm:$0xff]
  %v234 = vld [vmem:[%s0 + $0x6e0] sm:$0xff]
  %v235 = vld [vmem:[%s0 + $0x6e8] sm:$0xff]
  %v236 = vld [vmem:[%s0 + $0x6f0] sm:$0xff]
  %v237 = vld [vmem:[%s0 + $0x6f8] sm:$0xff]
  %v238 = vld [vmem:[%s0 + $0x700] sm:$0xff]
  %v239 = vld [vmem:[%s0 + $0x708] sm:$0xff]
  %v240 = vld [vmem:[%s0 + $0x710] sm:$0xff]
  %v241 = vld [vmem:[%s0 + $0x718] sm:$0xff]
  %v242 = vld [vmem:[%s0 + $0x720] sm:$0xff]
  %v243 = vld [vmem:[%s0 + $0x728] sm:$0xff]
  %v244 = vld [vmem:[%s0 + $0x730] sm:$0xff]
  %v245 = vld [vmem:[%s0 + $0x738] sm:$0xff]
  %v246 = vld [vmem:[%s0 + $0x740] sm:$0xff]
  %v247 = vld [vmem:[%s0 + $0x748] sm:$0xff]
  %v248 = vld [vmem:[%s0 + $0x750] sm:$0xff]
  %v249 = vld [vmem:[%s0 + $0x758] sm:$0xff]
  %v250 = vld [vmem:[%s0 + $0x760] sm:$0xff]
  %v251 = vld [vmem:[%s0 + $0x768] sm:$0xff]
  %v252 = vld [vmem:[%s0 + $0x770] sm:$0xff]
  %v253 = vld [vmem:[%s0 + $0x778] sm:$0xff]
  %v254 = vld [vmem:[%s0 + $0x780] sm:$0xff]
  %v255 = vld [vmem:[%s0 + $0x788] sm:$0xff]
  %v256 = vld [vmem:[%s0 + $0x790] sm:$0xff]
  %v257 = vld [vmem:[%s0 + $0x798] sm:$0xff]
  %v258 = vld [vmem:[%s0 + $0x7a0] sm:$0xff]
  %v259 = vld [vmem:[%s0 + $0x7a8] sm:$0xff]
  %v260 = vld [vmem:[%s0 + $0x7b0] sm:$0xff]
  %v261 = vld [vmem:[%s0 + $0x7b8] sm:$0xff]
  %v262 = vld [vmem:[%s0 + $0x7c0] sm:$0xff]
  %v263 = vld [vmem:[%s0 + $0x7c8] sm:$0xff]
  %v264 = vld [vmem:[%s0 + $0x7d0] sm:$0xff]
  %v265 = vld [vmem:[%s0 + $0x7d8] sm:$0xff]
  %v266 = vld [vmem:[%s0 + $0x7e0] sm:$0xff]
  %v267 = vld [vmem:[%s0 + $0x7e8] sm:$0xff]
  %v268 = vld [vmem:[%s0 + $0x7f0] sm:$0xff]
  %v269 = vld [vmem:[%s0 + $0x7f8] sm:$0xff]
  %v270 = vld [vmem:[%s0 + $0x800] sm:$0xff]
  %v271 = vld [vmem:[%s0 + $0x808] sm:$0xff]
  %v272 = vld [vmem:[%s0 + $0x810] sm:$0xff]
  %v273 = vld [vmem:[%s0 + $0x818] sm:$0xff]
  %v274 = vld [vmem:[%s0 + $0x820] sm:$0xff]
  %v275 = vld [vmem:[%s0 + $0x828] sm:$0xff]
  %v276 = vld [vmem:[%s0 + $0x830] sm:$0xff]
  %v277 = vld [vmem:[%s0 + $0x838] sm:$0xff]
  %v278 = vld [vmem:[%s0 + $0x840] sm:$0xff]
  %v279 = vld [vmem:[%s0 + $0x848] sm:$0xff]
  %v280 = vld [vmem:[%s0 + $0x850] sm:$0xff]
  %v281 = vld [vmem:[%s0 + $0x858] sm:$0xff]
  %v282 = vld [vmem:[%s0 + $0x860] sm:$0xff]
  %v283 = vld [vmem:[%s0 + $0x868] sm:$0xff]
  %v284 = vld [vmem:[%s0 + $0x870] sm:$0xff]
  %v285 = vld [vmem:[%s0 + $0x878] sm:$0xff]
  %v286 = vld [vmem:[%s0 + $0x880] sm:$0xff]
  %v287 = vld [vmem:[%s0 + $0x888] sm:$0xff]
  %v288 = vld [vmem:[%s0 + $0x890] sm:$0xff]
  %v289 = vld [vmem:[%s0 + $0x898] sm:$0xff]
  %v290 = vld [vmem:[%s0 + $0x8a0] sm:$0xff]
  %v291 = vld [vmem:[%s0 + $0x8a8] sm:$0xff]
  %v292 = vld [vmem:[%s0 + $0x8b0] sm:$0xff]
  %v293 = vld [vmem:[%s0 + $0x8b8] sm:$0xff]
  %v294 = vld [vmem:[%s0 + $0x8c0] sm:$0xff]
  %v295 = vld [vmem:[%s0 + $0x8c8] sm:$0xff]
  %v296 = vld [vmem:[%s0 + $0x8d0] sm:$0xff]
  %v297 = vld [vmem:[%s0 + $0x8d8] sm:$0xff]
  %v298 = vld [vmem:[%s0 + $0x8e0] sm:$0xff]
  %v299 = vld [vmem:[%s0 + $0x8e8] sm:$0xff]
  %v300 = vld [vmem:[%s0 + $0x8f0] sm:$0xff]
  %v301 = vld [vmem:[%s0 + $0x8f8] sm:$0xff]
  %v302 = vld [vmem:[%s0 + $0x900] sm:$0xff]
  %v303 = vld [vmem:[%s0 + $0x908] sm:$0xff]
  %v304 = vld [vmem:[%s0 + $0x910] sm:$0xff]
  %v305 = vld [vmem:[%s0 + $0x918] sm:$0xff]
  %v306 = vld [vmem:[%s0 + $0x920] sm:$0xff]
  %v307 = vld [vmem:[%s0 + $0x928] sm:$0xff]
  %v308 = vld [vmem:[%s0 + $0x930] sm:$0xff]
  %v309 = vld [vmem:[%s0 + $0x938] sm:$0xff]
  %v310 = vld [vmem:[%s0 + $0x940] sm:$0xff]
  %v311 = vld [vmem:[%s0 + $0x948] sm:$0xff]
  %v312 = vld [vmem:[%s0 + $0x950] sm:$0xff]
  %v313 = vld [vmem:[%s0 + $0x958] sm:$0xff]
  %v314 = vld [vmem:[%s0 + $0x960] sm:$0xff]
  %v315 = vld [vmem:[%s0 + $0x968] sm:$0xff]
  %v316 = vld [vmem:[%s0 + $0x970] sm:$0xff]
  %v317 = vld [vmem:[%s0 + $0x978] sm:$0xff]
  %v318 = vld [vmem:[%s0 + $0x980] sm:$0xff]
  %v319 = vld [vmem:[%s0 + $0x988] sm:$0xff]
  %v320 = vld [vmem:[%s0 + $0x990] sm:$0xff]
  %v321 = vld [vmem:[%s0 + $0x998] sm:$0xff]
  %v322 = vld [vmem:[%s0 + $0x9a0] sm:$0xff]
  %v323 = vld [vmem:[%s0 + $0x9a8] sm:$0xff]
  %v324 = vld [vmem:[%s0 + $0x9b0] sm:$0xff]
  %v325 = vld [vmem:[%s0 + $0x9b8] sm:$0xff]
  %v326 = vld [vmem:[%s0 + $0x9c0] sm:$0xff]
  %v327 = vld [vmem:[%s0 + $0x9c8] sm:$0xff]
  %v328 = vld [vmem:[%s0 + $0x9d0] sm:$0xff]
  %v329 = vld [vmem:[%s0 + $0x9d8] sm:$0xff]
  %v330 = vld [vmem:[%s0 + $0x9e0] sm:$0xff]
  %v331 = vld [vmem:[%s0 + $0x9e8] sm:$0xff]
  %v332 = vld [vmem:[%s0 + $0x9f0] sm:$0xff]
  %v333 = vld [vmem:[%s0 + $0x9f8] sm:$0xff]
  %v334 = vld [vmem:[%s0 + $0xa00] sm:$0xff]
  %v335 = vld [vmem:[%s0 + $0xa08] sm:$0xff]
  %v336 = vld [vmem:[%s0 + $0xa10] sm:$0xff]
  %v337 = vld [vmem:[%s0 + $0xa18] sm:$0xff]
  %v338 = vld [vmem:[%s0 + $0xa20] sm:$0xff]
  %v339 = vld [vmem:[%s0 + $0xa28] sm:$0xff]
  %v340 = vld [vmem:[%s0 + $0xa30] sm:$0xff]
  %v341 = vld [vmem:[%s0 + $0xa38] sm:$0xff]
  %v342 = vld [vmem:[%s0 + $0xa40] sm:$0xff]
  %v343 = vld [vmem:[%s0 + $0xa48] sm:$0xff]
  %v344 = vld [vmem:[%s0 + $0xa50] sm:$0xff]
  %v345 = vld [vmem:[%s0 + $0xa58] sm:$0xff]
  %v346 = vld [vmem:[%s0 + $0xa60] sm:$0xff]
  %v347 = vld [vmem:[%s0 + $0xa68] sm:$0xff]
  %v348 = vld [vmem:[%s0 + $0xa70] sm:$0xff]
  %v349 = vld [vmem:[%s0 + $0xa78] sm:$0xff]
  %v350 = vld [vmem:[%s0 + $0xa80] sm:$0xff]
  %v351 = vld [vmem:[%s0 + $0xa88] sm:$0xff]
  %v352 = vld [vmem:[%s0 + $0xa90] sm:$0xff]
  %v353 = vld [vmem:[%s0 + $0xa98] sm:$0xff]
  %v354 = vld [vmem:[%s0 + $0xaa0] sm:$0xff]
  %v355 = vld [vmem:[%s0 + $0xaa8] sm:$0xff]
  %v356 = vld [vmem:[%s0 + $0xab0] sm:$0xff]
  %v357 = vld [vmem:[%s0 + $0xab8] sm:$0xff]
  %v358 = vld [vmem:[%s0 + $0xac0] sm:$0xff]
  %v359 = vld [vmem:[%s0 + $0xac8] sm:$0xff]
  %v360 = vld [vmem:[%s0 + $0xad0] sm:$0xff]
  %v361 = vld [vmem:[%s0 + $0xad8] sm:$0xff]
  %v362 = vld [vmem:[%s0 + $0xae0] sm:$0xff]
  %v363 = vld [vmem:[%s0 + $0xae8] sm:$0xff]
  %v364 = vld [vmem:[%s0 + $0xaf0] sm:$0xff]
  %v365 = vld [vmem:[%s0 + $0xaf8] sm:$0xff]
  %v366 = vld [vmem:[%s0 + $0xb00] sm:$0xff]
  %v367 = vld [vmem:[%s0 + $0xb08] sm:$0xff]
  %v368 = vld [vmem:[%s0 + $0xb10] sm:$0xff]
  %v369 = vld [vmem:[%s0 + $0xb18] sm:$0xff]
  %v370 = vld [vmem:[%s0 + $0xb20] sm:$0xff]
  %v371 = vld [vmem:[%s0 + $0xb28] sm:$0xff]
  %v372 = vld [vmem:[%s0 + $0xb30] sm:$0xff]
  %v373 = vld [vmem:[%s0 + $0xb38] sm:$0xff]
  %v374 = vld [vmem:[%s0 + $0xb40] sm:$0xff]
  %v375 = vld [vmem:[%s0 + $0xb48] sm:$0xff]
  %v376 = vld [vmem:[%s0 + $0xb50] sm:$0xff]
  %v377 = vld [vmem:[%s0 + $0xb58] sm:$0xff]
  %v378 = vld [vmem:[%s0 + $0xb60] sm:$0xff]
  %v379 = vld [vmem:[%s0 + $0xb68] sm:$0xff]
  %v380 = vld [vmem:[%s0 + $0xb70] sm:$0xff]
  %v381 = vld [vmem:[%s0 + $0xb78] sm:$0xff]
  %v382 = vld [vmem:[%s0 + $0xb80] sm:$0xff]
  %v383 = vld [vmem:[%s0 + $0xb88] sm:$0xff]
  %v384 = vld [vmem:[%s0 + $0xb90] sm:$0xff]
  %v385 = vld [vmem:[%s0 + $0xb98] sm:$0xff]
  %v386 = vld [vmem:[%s0 + $0xba0] sm:$0xff]
  %v387 = vld [vmem:[%s0 + $0xba8] sm:$0xff]
  %v388 = vld [vmem:[%s0 + $0xbb0] sm:$0xff]
  %v389 = vld [vmem:[%s0 + $0xbb8] sm:$0xff]
  %v390 = vld [vmem:[%s0 + $0xbc0] sm:$0xff]
  %v391 = vld [vmem:[%s0 + $0xbc8] sm:$0xff]
  %v392 = vld [vmem:[%s0 + $0xbd0] sm:$0xff]
  %v393 = vld [vmem:[%s0 + $0xbd8] sm:$0xff]
  %v394 = vld [vmem:[%s0 + $0xbe0] sm:$0xff]
  %v395 = vld [vmem:[%s0 + $0xbe8] sm:$0xff]
  %v396 = vld [vmem:[%s0 + $0xbf0] sm:$0xff]
  %v397 = vld [vmem:[%s0 + $0xbf8] sm:$0xff]
  %v398 = vld [vmem:[%s0 + $0xc00] sm:$0xff]
  %v399 = vld [vmem:[%s0 + $0xc08] sm:$0xff]
  %v400 = vld [vmem:[%s0 + $0xc10] sm:$0xff]
  %v401 = vld [vmem:[%s0 + $0xc18] sm:$0xff]
  %v402 = vld [vmem:[%s0 + $0xc20] sm:$0xff]
  %v403 = vld [vmem:[%s0 + $0xc28] sm:$0xff]
  %v404 = vld [vmem:[%s0 + $0xc30] sm:$0xff]
  %v405 = vld [vmem:[%s0 + $0xc38] sm:$0xff]
  %v406 = vld [vmem:[%s0 + $0xc40] sm:$0xff]
  %v407 = vld [vmem:[%s0 + $0xc48] sm:$0xff]
  %v408 = vld [vmem:[%s0 + $0xc50] sm:$0xff]
  %v409 = vld [vmem:[%s0 + $0xc58] sm:$0xff]
  %v410 = vld [vmem:[%s0 + $0xc60] sm:$0xff]
  %v411 = vld [vmem:[%s0 + $0xc68] sm:$0xff]
  %v412 = vld [vmem:[%s0 + $0xc70] sm:$0xff]
  %v413 = vld [vmem:[%s0 + $0xc78] sm:$0xff]
  %v414 = vld [vmem:[%s0 + $0xc80] sm:$0xff]
  %v415 = vld [vmem:[%s0 + $0xc88] sm:$0xff]
  %v416 = vld [vmem:[%s0 + $0xc90] sm:$0xff]
  %v417 = vld [vmem:[%s0 + $0xc98] sm:$0xff]
  %v418 = vld [vmem:[%s0 + $0xca0] sm:$0xff]
  %v419 = vld [vmem:[%s0 + $0xca8] sm:$0xff]
  %v420 = vld [vmem:[%s0 + $0xcb0] sm:$0xff]
  %v421 = vld [vmem:[%s0 + $0xcb8] sm:$0xff]
  %v422 = vld [vmem:[%s0 + $0xcc0] sm:$0xff]
  %v423 = vld [vmem:[%s0 + $0xcc8] sm:$0xff]
  %v424 = vld [vmem:[%s0 + $0xcd0] sm:$0xff]
  %v425 = vld [vmem:[%s0 + $0xcd8] sm:$0xff]
  %v426 = vld [vmem:[%s0 + $0xce0] sm:$0xff]
  %v427 = vld [vmem:[%s0 + $0xce8] sm:$0xff]
  %v428 = vld [vmem:[%s0 + $0xcf0] sm:$0xff]
  %v429 = vld [vmem:[%s0 + $0xcf8] sm:$0xff]
  %v430 = vld [vmem:[%s0 + $0xd00] sm:$0xff]
  %v431 = vld [vmem:[%s0 + $0xd08] sm:$0xff]
  %v432 = vld [vmem:[%s0 + $0xd10] sm:$0xff]
  %v433 = vld [vmem:[%s0 + $0xd18] sm:$0xff]
  %v434 = vld [vmem:[%s0 + $0xd20] sm:$0xff]
  %v435 = vld [vmem:[%s0 + $0xd28] sm:$0xff]
  %v436 = vld [vmem:[%s0 + $0xd30] sm:$0xff]
  %v437 = vld [vmem:[%s0 + $0xd38] sm:$0xff]
  %v438 = vld [vmem:[%s0 + $0xd40] sm:$0xff]
  %v439 = vld [vmem:[%s0 + $0xd48] sm:$0xff]
  %v440 = vld [vmem:[%s0 + $0xd50] sm:$0xff]
  %v441 = vld [vmem:[%s0 + $0xd58] sm:$0xff]
  %v442 = vld [vmem:[%s0 + $0xd60] sm:$0xff]
  %v443 = vld [vmem:[%s0 + $0xd68] sm:$0xff]
  %v444 = vld [vmem:[%s0 + $0xd70] sm:$0xff]
  %v445 = vld [vmem:[%s0 + $0xd78] sm:$0xff]
  %v446 = vld [vmem:[%s0 + $0xd80] sm:$0xff]
  %v447 = vld [vmem:[%s0 + $0xd88] sm:$0xff]
  %v448 = vld [vmem:[%s0 + $0xd90] sm:$0xff]
  %v449 = vld [vmem:[%s0 + $0xd98] sm:$0xff]
  %v450 = vld [vmem:[%s0 + $0xda0] sm:$0xff]
  %v451 = vld [vmem:[%s0 + $0xda8] sm:$0xff]
  %v452 = vld [vmem:[%s0 + $0xdb0] sm:$0xff]
  %v453 = vld [vmem:[%s0 + $0xdb8] sm:$0xff]
  %v454 = vld [vmem:[%s0 + $0xdc0] sm:$0xff]
  %v455 = vld [vmem:[%s0 + $0xdc8] sm:$0xff]
  %v456 = vld [vmem:[%s0 + $0xdd0] sm:$0xff]
  %v457 = vld [vmem:[%s0 + $0xdd8] sm:$0xff]
  %v458 = vld [vmem:[%s0 + $0xde0] sm:$0xff]
  %v459 = vld [vmem:[%s0 + $0xde8] sm:$0xff]
  %v460 = vld [vmem:[%s0 + $0xdf0] sm:$0xff]
  %v461 = vld [vmem:[%s0 + $0xdf8] sm:$0xff]
  %v462 = vld [vmem:[%s0 + $0xe00] sm:$0xff]
  %v463 = vld [vmem:[%s0 + $0xe08] sm:$0xff]
  %v464 = vld [vmem:[%s0 + $0xe10] sm:$0xff]
  %v465 = vld [vmem:[%s0 + $0xe18] sm:$0xff]
  %v466 = vld [vmem:[%s0 + $0xe20] sm:$0xff]
  %v467 = vld [vmem:[%s0 + $0xe28] sm:$0xff]
  %v468 = vld [vmem:[%s0 + $0xe30] sm:$0xff]
  %v469 = vld [vmem:[%s0 + $0xe38] sm:$0xff]
  %v470 = vld [vmem:[%s0 + $0xe40] sm:$0xff]
  %v471 = vld [vmem:[%s0 + $0xe48] sm:$0xff]
  %v472 = vld [vmem:[%s0 + $0xe50] sm:$0xff]
  %v473 = vld [vmem:[%s0 + $0xe58] sm:$0xff]
  %v474 = vld [vmem:[%s0 + $0xe60] sm:$0xff]
  %v475 = vld [vmem:[%s0 + $0xe68] sm:$0xff]
  %v476 = vld [vmem:[%s0 + $0xe70] sm:$0xff]
  %v477 = vld [vmem:[%s0 + $0xe78] sm:$0xff]
  %v478 = vld [vmem:[%s0 + $0xe80] sm:$0xff]
  %v479 = vld [vmem:[%s0 + $0xe88] sm:$0xff]
  %v480 = vld [vmem:[%s0 + $0xe90] sm:$0xff]
  %v481 = vld [vmem:[%s0 + $0xe98] sm:$0xff]
  %v482 = vld [vmem:[%s0 + $0xea0] sm:$0xff]
  %v483 = vld [vmem:[%s0 + $0xea8] sm:$0xff]
  %v484 = vld [vmem:[%s0 + $0xeb0] sm:$0xff]
  %v485 = vld [vmem:[%s0 + $0xeb8] sm:$0xff]
  %v486 = vld [vmem:[%s0 + $0xec0] sm:$0xff]
  %v487 = vld [vmem:[%s0 + $0xec8] sm:$0xff]
  %v488 = vld [vmem:[%s0 + $0xed0] sm:$0xff]
  %v489 = vld [vmem:[%s0 + $0xed8] sm:$0xff]
  %v490 = vld [vmem:[%s0 + $0xee0] sm:$0xff]
  %v491 = vld [vmem:[%s0 + $0xee8] sm:$0xff]
  %v492 = vld [vmem:[%s0 + $0xef0] sm:$0xff]
  %v493 = vld [vmem:[%s0 + $0xef8] sm:$0xff]
  %v494 = vld [vmem:[%s0 + $0xf00] sm:$0x3]
  %v495 = vld [vmem:[%s0 + $0xf08] sm:$0x3]
  %v496 = vld [vmem:[%s1] sm:$0xff]
  %v497 = vld [vmem:[%s1 + $0x8] sm:$0xff]
  %v498 = vld [vmem:[%s1 + $0x10] sm:$0xff]
  %v499 = vld [vmem:[%s1 + $0x18] sm:$0xff]
  %v500 = vld [vmem:[%s1 + $0x20] sm:$0xff]
  %v501 = vld [vmem:[%s1 + $0x28] sm:$0xff]
  %v502 = vld [vmem:[%s1 + $0x30] sm:$0xff]
  %v503 = vld [vmem:[%s1 + $0x38] sm:$0xff]
  %v504 = vld [vmem:[%s1 + $0x40] sm:$0xff]
  %v505 = vld [vmem:[%s1 + $0x48] sm:$0xff]
  %v506 = vld [vmem:[%s1 + $0x50] sm:$0xff]
  %v507 = vld [vmem:[%s1 + $0x58] sm:$0xff]
  %v508 = vld [vmem:[%s1 + $0x60] sm:$0xff]
  %v509 = vld [vmem:[%s1 + $0x68] sm:$0xff]
  %v510 = vld [vmem:[%s1 + $0x70] sm:$0xff]
  %v511 = vld [vmem:[%s1 + $0x78] sm:$0xff]
  %v512 = vld [vmem:[%s1 + $0x80] sm:$0xff]
  %v513 = vld [vmem:[%s1 + $0x88] sm:$0xff]
  %v514 = vld [vmem:[%s2] sm:$0x1]
  %v516 = vperm.slane %v514, 0
  %vm518 = vcmask 130048
  %v520 = vsel %vm518, %v15, 0
  %v523 = vsel %vm518, %v17, 0
  %v526 = vsel %vm518, %v19, 0
  %v529 = vsel %vm518, %v21, 0
  %v532 = vsel %vm518, %v23, 0
  %v535 = vsel %vm518, %v25, 0
  %v538 = vsel %vm518, %v27, 0
  %v541 = vsel %vm518, %v29, 0
  %v544 = vsel %vm518, %v31, 0
  %v547 = vsel %vm518, %v33, 0
  %v550 = vsel %vm518, %v35, 0
  %v553 = vsel %vm518, %v37, 0
  %v556 = vsel %vm518, %v39, 0
  %v559 = vsel %vm518, %v41, 0
  %v562 = vsel %vm518, %v43, 0
  %v565 = vsel %vm518, %v45, 0
  %v568 = vsel %vm518, %v47, 0
  %v571 = vsel %vm518, %v49, 0
  %v574 = vsel %vm518, %v51, 0
  %v577 = vsel %vm518, %v53, 0
  %v580 = vsel %vm518, %v55, 0
  %v583 = vsel %vm518, %v57, 0
  %v586 = vsel %vm518, %v59, 0
  %v589 = vsel %vm518, %v61, 0
  %v592 = vsel %vm518, %v63, 0
  %v595 = vsel %vm518, %v65, 0
  %v598 = vsel %vm518, %v67, 0
  %v601 = vsel %vm518, %v69, 0
  %v604 = vsel %vm518, %v71, 0
  %v607 = vsel %vm518, %v73, 0
  %v610 = vsel %vm518, %v75, 0
  %v613 = vsel %vm518, %v77, 0
  %v616 = vsel %vm518, %v79, 0
  %v619 = vsel %vm518, %v81, 0
  %v622 = vsel %vm518, %v83, 0
  %v625 = vsel %vm518, %v85, 0
  %v628 = vsel %vm518, %v87, 0
  %v631 = vsel %vm518, %v89, 0
  %v634 = vsel %vm518, %v91, 0
  %v637 = vsel %vm518, %v93, 0
  %v640 = vsel %vm518, %v95, 0
  %v643 = vsel %vm518, %v97, 0
  %v646 = vsel %vm518, %v99, 0
  %v649 = vsel %vm518, %v101, 0
  %v652 = vsel %vm518, %v103, 0
  %v655 = vsel %vm518, %v105, 0
  %v658 = vsel %vm518, %v107, 0
  %v661 = vsel %vm518, %v109, 0
  %v664 = vsel %vm518, %v111, 0
  %v667 = vsel %vm518, %v113, 0
  %v670 = vsel %vm518, %v115, 0
  %v673 = vsel %vm518, %v117, 0
  %v676 = vsel %vm518, %v119, 0
  %v679 = vsel %vm518, %v121, 0
  %v682 = vsel %vm518, %v123, 0
  %v685 = vsel %vm518, %v125, 0
  %v688 = vsel %vm518, %v127, 0
  %v691 = vsel %vm518, %v129, 0
  %v694 = vsel %vm518, %v131, 0
  %v697 = vsel %vm518, %v133, 0
  %v700 = vsel %vm518, %v135, 0
  %v703 = vsel %vm518, %v137, 0
  %v706 = vsel %vm518, %v139, 0
  %v709 = vsel %vm518, %v141, 0
  %v712 = vsel %vm518, %v143, 0
  %v715 = vsel %vm518, %v145, 0
  %v718 = vsel %vm518, %v147, 0
  %v721 = vsel %vm518, %v149, 0
  %v724 = vsel %vm518, %v151, 0
  %v727 = vsel %vm518, %v153, 0
  %v730 = vsel %vm518, %v155, 0
  %v733 = vsel %vm518, %v157, 0
  %v736 = vsel %vm518, %v159, 0
  %v739 = vsel %vm518, %v161, 0
  %v742 = vsel %vm518, %v163, 0
  %v745 = vsel %vm518, %v165, 0
  %v748 = vsel %vm518, %v167, 0
  %v751 = vsel %vm518, %v169, 0
  %v754 = vsel %vm518, %v171, 0
  %v757 = vsel %vm518, %v173, 0
  %v760 = vsel %vm518, %v175, 0
  %v763 = vsel %vm518, %v177, 0
  %v766 = vsel %vm518, %v179, 0
  %v769 = vsel %vm518, %v181, 0
  %v772 = vsel %vm518, %v183, 0
  %v775 = vsel %vm518, %v185, 0
  %v778 = vsel %vm518, %v187, 0
  %v781 = vsel %vm518, %v189, 0
  %v784 = vsel %vm518, %v191, 0
  %v787 = vsel %vm518, %v193, 0
  %v790 = vsel %vm518, %v195, 0
  %v793 = vsel %vm518, %v197, 0
  %v796 = vsel %vm518, %v199, 0
  %v799 = vsel %vm518, %v201, 0
  %v802 = vsel %vm518, %v203, 0
  %v805 = vsel %vm518, %v205, 0
  %v808 = vsel %vm518, %v207, 0
  %v811 = vsel %vm518, %v209, 0
  %v814 = vsel %vm518, %v211, 0
  %v817 = vsel %vm518, %v213, 0
  %v820 = vsel %vm518, %v215, 0
  %v823 = vsel %vm518, %v217, 0
  %v826 = vsel %vm518, %v219, 0
  %v829 = vsel %vm518, %v221, 0
  %v832 = vsel %vm518, %v223, 0
  %v835 = vsel %vm518, %v225, 0
  %v838 = vsel %vm518, %v227, 0
  %v841 = vsel %vm518, %v229, 0
  %v844 = vsel %vm518, %v231, 0
  %v847 = vsel %vm518, %v233, 0
  %v850 = vsel %vm518, %v235, 0
  %v853 = vsel %vm518, %v237, 0
  %v856 = vsel %vm518, %v239, 0
  %v859 = vsel %vm518, %v241, 0
  %v862 = vsel %vm518, %v243, 0
  %v865 = vsel %vm518, %v245, 0
  %v868 = vsel %vm518, %v247, 0
  %v871 = vsel %vm518, %v249, 0
  %v874 = vsel %vm518, %v251, 0
  %v877 = vsel %vm518, %v253, 0
  %v880 = vsel %vm518, %v255, 0
  %v883 = vsel %vm518, %v257, 0
  %v886 = vsel %vm518, %v259, 0
  %v889 = vsel %vm518, %v261, 0
  %v892 = vsel %vm518, %v263, 0
  %v895 = vsel %vm518, %v265, 0
  %v898 = vsel %vm518, %v267, 0
  %v901 = vsel %vm518, %v269, 0
  %v904 = vsel %vm518, %v271, 0
  %v907 = vsel %vm518, %v273, 0
  %v910 = vsel %vm518, %v275, 0
  %v913 = vsel %vm518, %v277, 0
  %v916 = vsel %vm518, %v279, 0
  %v919 = vsel %vm518, %v281, 0
  %v922 = vsel %vm518, %v283, 0
  %v925 = vsel %vm518, %v285, 0
  %v928 = vsel %vm518, %v287, 0
  %v931 = vsel %vm518, %v289, 0
  %v934 = vsel %vm518, %v291, 0
  %v937 = vsel %vm518, %v293, 0
  %v940 = vsel %vm518, %v295, 0
  %v943 = vsel %vm518, %v297, 0
  %v946 = vsel %vm518, %v299, 0
  %v949 = vsel %vm518, %v301, 0
  %v952 = vsel %vm518, %v303, 0
  %v955 = vsel %vm518, %v305, 0
  %v958 = vsel %vm518, %v307, 0
  %v961 = vsel %vm518, %v309, 0
  %v964 = vsel %vm518, %v311, 0
  %v967 = vsel %vm518, %v313, 0
  %v970 = vsel %vm518, %v315, 0
  %v973 = vsel %vm518, %v317, 0
  %v976 = vsel %vm518, %v319, 0
  %v979 = vsel %vm518, %v321, 0
  %v982 = vsel %vm518, %v323, 0
  %v985 = vsel %vm518, %v325, 0
  %v988 = vsel %vm518, %v327, 0
  %v991 = vsel %vm518, %v329, 0
  %v994 = vsel %vm518, %v331, 0
  %v997 = vsel %vm518, %v333, 0
  %v1000 = vsel %vm518, %v335, 0
  %v1003 = vsel %vm518, %v337, 0
  %v1006 = vsel %vm518, %v339, 0
  %v1009 = vsel %vm518, %v341, 0
  %v1012 = vsel %vm518, %v343, 0
  %v1015 = vsel %vm518, %v345, 0
  %v1018 = vsel %vm518, %v347, 0
  %v1021 = vsel %vm518, %v349, 0
  %v1024 = vsel %vm518, %v351, 0
  %v1027 = vsel %vm518, %v353, 0
  %v1030 = vsel %vm518, %v355, 0
  %v1033 = vsel %vm518, %v357, 0
  %v1036 = vsel %vm518, %v359, 0
  %v1039 = vsel %vm518, %v361, 0
  %v1042 = vsel %vm518, %v363, 0
  %v1045 = vsel %vm518, %v365, 0
  %v1048 = vsel %vm518, %v367, 0
  %v1051 = vsel %vm518, %v369, 0
  %v1054 = vsel %vm518, %v371, 0
  %v1057 = vsel %vm518, %v373, 0
  %v1060 = vsel %vm518, %v375, 0
  %v1063 = vsel %vm518, %v377, 0
  %v1066 = vsel %vm518, %v379, 0
  %v1069 = vsel %vm518, %v381, 0
  %v1072 = vsel %vm518, %v383, 0
  %v1075 = vsel %vm518, %v385, 0
  %v1078 = vsel %vm518, %v387, 0
  %v1081 = vsel %vm518, %v389, 0
  %v1084 = vsel %vm518, %v391, 0
  %v1087 = vsel %vm518, %v393, 0
  %v1090 = vsel %vm518, %v395, 0
  %v1093 = vsel %vm518, %v397, 0
  %v1096 = vsel %vm518, %v399, 0
  %v1099 = vsel %vm518, %v401, 0
  %v1102 = vsel %vm518, %v403, 0
  %v1105 = vsel %vm518, %v405, 0
  %v1108 = vsel %vm518, %v407, 0
  %v1111 = vsel %vm518, %v409, 0
  %v1114 = vsel %vm518, %v411, 0
  %v1117 = vsel %vm518, %v413, 0
  %v1120 = vsel %vm518, %v415, 0
  %v1123 = vsel %vm518, %v417, 0
  %v1126 = vsel %vm518, %v419, 0
  %v1129 = vsel %vm518, %v421, 0
  %v1132 = vsel %vm518, %v423, 0
  %v1135 = vsel %vm518, %v425, 0
  %v1138 = vsel %vm518, %v427, 0
  %v1141 = vsel %vm518, %v429, 0
  %v1144 = vsel %vm518, %v431, 0
  %v1147 = vsel %vm518, %v433, 0
  %v1150 = vsel %vm518, %v435, 0
  %v1153 = vsel %vm518, %v437, 0
  %v1156 = vsel %vm518, %v439, 0
  %v1159 = vsel %vm518, %v441, 0
  %v1162 = vsel %vm518, %v443, 0
  %v1165 = vsel %vm518, %v445, 0
  %v1168 = vsel %vm518, %v447, 0
  %v1171 = vsel %vm518, %v449, 0
  %v1174 = vsel %vm518, %v451, 0
  %v1177 = vsel %vm518, %v453, 0
  %v1180 = vsel %vm518, %v455, 0
  %v1183 = vsel %vm518, %v457, 0
  %v1186 = vsel %vm518, %v459, 0
  %v1189 = vsel %vm518, %v461, 0
  %v1192 = vsel %vm518, %v463, 0
  %v1195 = vsel %vm518, %v465, 0
  %v1198 = vsel %vm518, %v467, 0
  %v1201 = vsel %vm518, %v469, 0
  %v1204 = vsel %vm518, %v471, 0
  %v1207 = vsel %vm518, %v473, 0
  %v1210 = vsel %vm518, %v475, 0
  %v1213 = vsel %vm518, %v477, 0
  %v1216 = vsel %vm518, %v479, 0
  %v1219 = vsel %vm518, %v481, 0
  %v1222 = vsel %vm518, %v483, 0
  %v1225 = vsel %vm518, %v485, 0
  %v1228 = vsel %vm518, %v487, 0
  %v1231 = vsel %vm518, %v489, 0
  %v1234 = vsel %vm518, %v491, 0
  %v1237 = vsel %vm518, %v493, 0
  %v1240 = vsel %vm518, %v495, 0
  %1242 = vmatpush.msra.mxu0 %v511
  %1243 = vmatpush.msra.mxu0 %v510
  %1244 = vmatpush.msra.mxu0 %v509
  %1245 = vmatpush.msra.mxu0 %v508
  %1246 = vmatpush.msra.mxu0 %v507
  %1247 = vmatpush.msra.mxu0 %v506
  %1248 = vmatpush.msra.mxu0 %v505
  %1249 = vmatpush.msra.mxu0 %v504
  %1250 = vmatpush.msra.mxu0 %v503
  %1251 = vmatpush.msra.mxu0 %v502
  %1252 = vmatpush.msra.mxu0 %v501
  %1253 = vmatpush.msra.mxu0 %v500
  %1254 = vmatpush.msra.mxu0 %v499
  %1255 = vmatpush.msra.mxu0 %v498
  %1256 = vmatpush.msra.mxu0 %v497
  %1257 = vmatpush.msra.mxu0 %v496
  %1258 = vmatmul.f32.gmra.mxu0 %v14
  %v1259 = vpop.f32.mrf.mxu0
  %v1260 = vadd.f32 %v516, %v1259
  %1261 = vmatmul.f32.gmra.mxu0 %v16
  %v1262 = vpop.f32.mrf.mxu0
  %v1263 = vadd.f32 %v516, %v1262
  %1264 = vmatmul.f32.gmra.mxu0 %v18
  %v1265 = vpop.f32.mrf.mxu0
  %v1266 = vadd.f32 %v516, %v1265
  %1267 = vmatmul.f32.gmra.mxu0 %v20
  %v1268 = vpop.f32.mrf.mxu0
  %v1269 = vadd.f32 %v516, %v1268
  %1270 = vmatmul.f32.gmra.mxu0 %v22
  %v1271 = vpop.f32.mrf.mxu0
  %v1272 = vadd.f32 %v516, %v1271
  %1273 = vmatmul.f32.gmra.mxu0 %v24
  %v1274 = vpop.f32.mrf.mxu0
  %v1275 = vadd.f32 %v516, %v1274
  %1276 = vmatmul.f32.gmra.mxu0 %v26
  %v1277 = vpop.f32.mrf.mxu0
  %v1278 = vadd.f32 %v516, %v1277
  %1279 = vmatmul.f32.gmra.mxu0 %v28
  %v1280 = vpop.f32.mrf.mxu0
  %v1281 = vadd.f32 %v516, %v1280
  %1282 = vmatmul.f32.gmra.mxu0 %v30
  %v1283 = vpop.f32.mrf.mxu0
  %v1284 = vadd.f32 %v516, %v1283
  %1285 = vmatmul.f32.gmra.mxu0 %v32
  %v1286 = vpop.f32.mrf.mxu0
  %v1287 = vadd.f32 %v516, %v1286
  %1288 = vmatmul.f32.gmra.mxu0 %v34
  %v1289 = vpop.f32.mrf.mxu0
  %v1290 = vadd.f32 %v516, %v1289
  %1291 = vmatmul.f32.gmra.mxu0 %v36
  %v1292 = vpop.f32.mrf.mxu0
  %v1293 = vadd.f32 %v516, %v1292
  %1294 = vmatmul.f32.gmra.mxu0 %v38
  %v1295 = vpop.f32.mrf.mxu0
  %v1296 = vadd.f32 %v516, %v1295
  %1297 = vmatmul.f32.gmra.mxu0 %v40
  %v1298 = vpop.f32.mrf.mxu0
  %v1299 = vadd.f32 %v516, %v1298
  %1300 = vmatmul.f32.gmra.mxu0 %v42
  %v1301 = vpop.f32.mrf.mxu0
  %v1302 = vadd.f32 %v516, %v1301
  %1303 = vmatmul.f32.gmra.mxu0 %v44
  %v1304 = vpop.f32.mrf.mxu0
  %v1305 = vadd.f32 %v516, %v1304
  %1306 = vmatmul.f32.gmra.mxu0 %v46
  %v1307 = vpop.f32.mrf.mxu0
  %v1308 = vadd.f32 %v516, %v1307
  %1309 = vmatmul.f32.gmra.mxu0 %v48
  %v1310 = vpop.f32.mrf.mxu0
  %v1311 = vadd.f32 %v516, %v1310
  %1312 = vmatmul.f32.gmra.mxu0 %v50
  %v1313 = vpop.f32.mrf.mxu0
  %v1314 = vadd.f32 %v516, %v1313
  %1315 = vmatmul.f32.gmra.mxu0 %v52
  %v1316 = vpop.f32.mrf.mxu0
  %v1317 = vadd.f32 %v516, %v1316
  %1318 = vmatmul.f32.gmra.mxu0 %v54
  %v1319 = vpop.f32.mrf.mxu0
  %v1320 = vadd.f32 %v516, %v1319
  %1321 = vmatmul.f32.gmra.mxu0 %v56
  %v1322 = vpop.f32.mrf.mxu0
  %v1323 = vadd.f32 %v516, %v1322
  %1324 = vmatmul.f32.gmra.mxu0 %v58
  %v1325 = vpop.f32.mrf.mxu0
  %v1326 = vadd.f32 %v516, %v1325
  %1327 = vmatmul.f32.gmra.mxu0 %v60
  %v1328 = vpop.f32.mrf.mxu0
  %v1329 = vadd.f32 %v516, %v1328
  %1330 = vmatmul.f32.gmra.mxu0 %v62
  %v1331 = vpop.f32.mrf.mxu0
  %v1332 = vadd.f32 %v516, %v1331
  %1333 = vmatmul.f32.gmra.mxu0 %v64
  %v1334 = vpop.f32.mrf.mxu0
  %v1335 = vadd.f32 %v516, %v1334
  %1336 = vmatmul.f32.gmra.mxu0 %v66
  %v1337 = vpop.f32.mrf.mxu0
  %v1338 = vadd.f32 %v516, %v1337
  %1339 = vmatmul.f32.gmra.mxu0 %v68
  %v1340 = vpop.f32.mrf.mxu0
  %v1341 = vadd.f32 %v516, %v1340
  %1342 = vmatmul.f32.gmra.mxu0 %v70
  %v1343 = vpop.f32.mrf.mxu0
  %v1344 = vadd.f32 %v516, %v1343
  %1345 = vmatmul.f32.gmra.mxu0 %v72
  %v1346 = vpop.f32.mrf.mxu0
  %v1347 = vadd.f32 %v516, %v1346
  %1348 = vmatmul.f32.gmra.mxu0 %v74
  %v1349 = vpop.f32.mrf.mxu0
  %v1350 = vadd.f32 %v516, %v1349
  %1351 = vmatmul.f32.gmra.mxu0 %v76
  %v1352 = vpop.f32.mrf.mxu0
  %v1353 = vadd.f32 %v516, %v1352
  %1354 = vmatmul.f32.gmra.mxu0 %v78
  %v1355 = vpop.f32.mrf.mxu0
  %v1356 = vadd.f32 %v516, %v1355
  %1357 = vmatmul.f32.gmra.mxu0 %v80
  %v1358 = vpop.f32.mrf.mxu0
  %v1359 = vadd.f32 %v516, %v1358
  %1360 = vmatmul.f32.gmra.mxu0 %v82
  %v1361 = vpop.f32.mrf.mxu0
  %v1362 = vadd.f32 %v516, %v1361
  %1363 = vmatmul.f32.gmra.mxu0 %v84
  %v1364 = vpop.f32.mrf.mxu0
  %v1365 = vadd.f32 %v516, %v1364
  %1366 = vmatmul.f32.gmra.mxu0 %v86
  %v1367 = vpop.f32.mrf.mxu0
  %v1368 = vadd.f32 %v516, %v1367
  %1369 = vmatmul.f32.gmra.mxu0 %v88
  %v1370 = vpop.f32.mrf.mxu0
  %v1371 = vadd.f32 %v516, %v1370
  %1372 = vmatmul.f32.gmra.mxu0 %v90
  %v1373 = vpop.f32.mrf.mxu0
  %v1374 = vadd.f32 %v516, %v1373
  %1375 = vmatmul.f32.gmra.mxu0 %v92
  %v1376 = vpop.f32.mrf.mxu0
  %v1377 = vadd.f32 %v516, %v1376
  %1378 = vmatmul.f32.gmra.mxu0 %v94
  %v1379 = vpop.f32.mrf.mxu0
  %v1380 = vadd.f32 %v516, %v1379
  %1381 = vmatmul.f32.gmra.mxu0 %v96
  %v1382 = vpop.f32.mrf.mxu0
  %v1383 = vadd.f32 %v516, %v1382
  %1384 = vmatmul.f32.gmra.mxu0 %v98
  %v1385 = vpop.f32.mrf.mxu0
  %v1386 = vadd.f32 %v516, %v1385
  %1387 = vmatmul.f32.gmra.mxu0 %v100
  %v1388 = vpop.f32.mrf.mxu0
  %v1389 = vadd.f32 %v516, %v1388
  %1390 = vmatmul.f32.gmra.mxu0 %v102
  %v1391 = vpop.f32.mrf.mxu0
  %v1392 = vadd.f32 %v516, %v1391
  %1393 = vmatmul.f32.gmra.mxu0 %v104
  %v1394 = vpop.f32.mrf.mxu0
  %v1395 = vadd.f32 %v516, %v1394
  %1396 = vmatmul.f32.gmra.mxu0 %v106
  %v1397 = vpop.f32.mrf.mxu0
  %v1398 = vadd.f32 %v516, %v1397
  %1399 = vmatmul.f32.gmra.mxu0 %v108
  %v1400 = vpop.f32.mrf.mxu0
  %v1401 = vadd.f32 %v516, %v1400
  %1402 = vmatmul.f32.gmra.mxu0 %v110
  %v1403 = vpop.f32.mrf.mxu0
  %v1404 = vadd.f32 %v516, %v1403
  %1405 = vmatmul.f32.gmra.mxu0 %v112
  %v1406 = vpop.f32.mrf.mxu0
  %v1407 = vadd.f32 %v516, %v1406
  %1408 = vmatmul.f32.gmra.mxu0 %v114
  %v1409 = vpop.f32.mrf.mxu0
  %v1410 = vadd.f32 %v516, %v1409
  %1411 = vmatmul.f32.gmra.mxu0 %v116
  %v1412 = vpop.f32.mrf.mxu0
  %v1413 = vadd.f32 %v516, %v1412
  %1414 = vmatmul.f32.gmra.mxu0 %v118
  %v1415 = vpop.f32.mrf.mxu0
  %v1416 = vadd.f32 %v516, %v1415
  %1417 = vmatmul.f32.gmra.mxu0 %v120
  %v1418 = vpop.f32.mrf.mxu0
  %v1419 = vadd.f32 %v516, %v1418
  %1420 = vmatmul.f32.gmra.mxu0 %v122
  %v1421 = vpop.f32.mrf.mxu0
  %v1422 = vadd.f32 %v516, %v1421
  %1423 = vmatmul.f32.gmra.mxu0 %v124
  %v1424 = vpop.f32.mrf.mxu0
  %v1425 = vadd.f32 %v516, %v1424
  %1426 = vmatmul.f32.gmra.mxu0 %v126
  %v1427 = vpop.f32.mrf.mxu0
  %v1428 = vadd.f32 %v516, %v1427
  %1429 = vmatmul.f32.gmra.mxu0 %v128
  %v1430 = vpop.f32.mrf.mxu0
  %v1431 = vadd.f32 %v516, %v1430
  %1432 = vmatmul.f32.gmra.mxu0 %v130
  %v1433 = vpop.f32.mrf.mxu0
  %v1434 = vadd.f32 %v516, %v1433
  %1435 = vmatmul.f32.gmra.mxu0 %v132
  %v1436 = vpop.f32.mrf.mxu0
  %v1437 = vadd.f32 %v516, %v1436
  %1438 = vmatmul.f32.gmra.mxu0 %v134
  %v1439 = vpop.f32.mrf.mxu0
  %v1440 = vadd.f32 %v516, %v1439
  %1441 = vmatmul.f32.gmra.mxu0 %v136
  %v1442 = vpop.f32.mrf.mxu0
  %v1443 = vadd.f32 %v516, %v1442
  %1444 = vmatmul.f32.gmra.mxu0 %v138
  %v1445 = vpop.f32.mrf.mxu0
  %v1446 = vadd.f32 %v516, %v1445
  %1447 = vmatmul.f32.gmra.mxu0 %v140
  %v1448 = vpop.f32.mrf.mxu0
  %v1449 = vadd.f32 %v516, %v1448
  %1450 = vmatmul.f32.gmra.mxu0 %v142
  %v1451 = vpop.f32.mrf.mxu0
  %v1452 = vadd.f32 %v516, %v1451
  %1453 = vmatmul.f32.gmra.mxu0 %v144
  %v1454 = vpop.f32.mrf.mxu0
  %v1455 = vadd.f32 %v516, %v1454
  %1456 = vmatmul.f32.gmra.mxu0 %v146
  %v1457 = vpop.f32.mrf.mxu0
  %v1458 = vadd.f32 %v516, %v1457
  %1459 = vmatmul.f32.gmra.mxu0 %v148
  %v1460 = vpop.f32.mrf.mxu0
  %v1461 = vadd.f32 %v516, %v1460
  %1462 = vmatmul.f32.gmra.mxu0 %v150
  %v1463 = vpop.f32.mrf.mxu0
  %v1464 = vadd.f32 %v516, %v1463
  %1465 = vmatmul.f32.gmra.mxu0 %v152
  %v1466 = vpop.f32.mrf.mxu0
  %v1467 = vadd.f32 %v516, %v1466
  %1468 = vmatmul.f32.gmra.mxu0 %v154
  %v1469 = vpop.f32.mrf.mxu0
  %v1470 = vadd.f32 %v516, %v1469
  %1471 = vmatmul.f32.gmra.mxu0 %v156
  %v1472 = vpop.f32.mrf.mxu0
  %v1473 = vadd.f32 %v516, %v1472
  %1474 = vmatmul.f32.gmra.mxu0 %v158
  %v1475 = vpop.f32.mrf.mxu0
  %v1476 = vadd.f32 %v516, %v1475
  %1477 = vmatmul.f32.gmra.mxu0 %v160
  %v1478 = vpop.f32.mrf.mxu0
  %v1479 = vadd.f32 %v516, %v1478
  %1480 = vmatmul.f32.gmra.mxu0 %v162
  %v1481 = vpop.f32.mrf.mxu0
  %v1482 = vadd.f32 %v516, %v1481
  %1483 = vmatmul.f32.gmra.mxu0 %v164
  %v1484 = vpop.f32.mrf.mxu0
  %v1485 = vadd.f32 %v516, %v1484
  %1486 = vmatmul.f32.gmra.mxu0 %v166
  %v1487 = vpop.f32.mrf.mxu0
  %v1488 = vadd.f32 %v516, %v1487
  %1489 = vmatmul.f32.gmra.mxu0 %v168
  %v1490 = vpop.f32.mrf.mxu0
  %v1491 = vadd.f32 %v516, %v1490
  %1492 = vmatmul.f32.gmra.mxu0 %v170
  %v1493 = vpop.f32.mrf.mxu0
  %v1494 = vadd.f32 %v516, %v1493
  %1495 = vmatmul.f32.gmra.mxu0 %v172
  %v1496 = vpop.f32.mrf.mxu0
  %v1497 = vadd.f32 %v516, %v1496
  %1498 = vmatmul.f32.gmra.mxu0 %v174
  %v1499 = vpop.f32.mrf.mxu0
  %v1500 = vadd.f32 %v516, %v1499
  %1501 = vmatmul.f32.gmra.mxu0 %v176
  %v1502 = vpop.f32.mrf.mxu0
  %v1503 = vadd.f32 %v516, %v1502
  %1504 = vmatmul.f32.gmra.mxu0 %v178
  %v1505 = vpop.f32.mrf.mxu0
  %v1506 = vadd.f32 %v516, %v1505
  %1507 = vmatmul.f32.gmra.mxu0 %v180
  %v1508 = vpop.f32.mrf.mxu0
  %v1509 = vadd.f32 %v516, %v1508
  %1510 = vmatmul.f32.gmra.mxu0 %v182
  %v1511 = vpop.f32.mrf.mxu0
  %v1512 = vadd.f32 %v516, %v1511
  %1513 = vmatmul.f32.gmra.mxu0 %v184
  %v1514 = vpop.f32.mrf.mxu0
  %v1515 = vadd.f32 %v516, %v1514
  %1516 = vmatmul.f32.gmra.mxu0 %v186
  %v1517 = vpop.f32.mrf.mxu0
  %v1518 = vadd.f32 %v516, %v1517
  %1519 = vmatmul.f32.gmra.mxu0 %v188
  %v1520 = vpop.f32.mrf.mxu0
  %v1521 = vadd.f32 %v516, %v1520
  %1522 = vmatmul.f32.gmra.mxu0 %v190
  %v1523 = vpop.f32.mrf.mxu0
  %v1524 = vadd.f32 %v516, %v1523
  %1525 = vmatmul.f32.gmra.mxu0 %v192
  %v1526 = vpop.f32.mrf.mxu0
  %v1527 = vadd.f32 %v516, %v1526
  %1528 = vmatmul.f32.gmra.mxu0 %v194
  %v1529 = vpop.f32.mrf.mxu0
  %v1530 = vadd.f32 %v516, %v1529
  %1531 = vmatmul.f32.gmra.mxu0 %v196
  %v1532 = vpop.f32.mrf.mxu0
  %v1533 = vadd.f32 %v516, %v1532
  %1534 = vmatmul.f32.gmra.mxu0 %v198
  %v1535 = vpop.f32.mrf.mxu0
  %v1536 = vadd.f32 %v516, %v1535
  %1537 = vmatmul.f32.gmra.mxu0 %v200
  %v1538 = vpop.f32.mrf.mxu0
  %v1539 = vadd.f32 %v516, %v1538
  %1540 = vmatmul.f32.gmra.mxu0 %v202
  %v1541 = vpop.f32.mrf.mxu0
  %v1542 = vadd.f32 %v516, %v1541
  %1543 = vmatmul.f32.gmra.mxu0 %v204
  %v1544 = vpop.f32.mrf.mxu0
  %v1545 = vadd.f32 %v516, %v1544
  %1546 = vmatmul.f32.gmra.mxu0 %v206
  %v1547 = vpop.f32.mrf.mxu0
  %v1548 = vadd.f32 %v516, %v1547
  %1549 = vmatmul.f32.gmra.mxu0 %v208
  %v1550 = vpop.f32.mrf.mxu0
  %v1551 = vadd.f32 %v516, %v1550
  %1552 = vmatmul.f32.gmra.mxu0 %v210
  %v1553 = vpop.f32.mrf.mxu0
  %v1554 = vadd.f32 %v516, %v1553
  %1555 = vmatmul.f32.gmra.mxu0 %v212
  %v1556 = vpop.f32.mrf.mxu0
  %v1557 = vadd.f32 %v516, %v1556
  %1558 = vmatmul.f32.gmra.mxu0 %v214
  %v1559 = vpop.f32.mrf.mxu0
  %v1560 = vadd.f32 %v516, %v1559
  %1561 = vmatmul.f32.gmra.mxu0 %v216
  %v1562 = vpop.f32.mrf.mxu0
  %v1563 = vadd.f32 %v516, %v1562
  %1564 = vmatmul.f32.gmra.mxu0 %v218
  %v1565 = vpop.f32.mrf.mxu0
  %v1566 = vadd.f32 %v516, %v1565
  %1567 = vmatmul.f32.gmra.mxu0 %v220
  %v1568 = vpop.f32.mrf.mxu0
  %v1569 = vadd.f32 %v516, %v1568
  %1570 = vmatmul.f32.gmra.mxu0 %v222
  %v1571 = vpop.f32.mrf.mxu0
  %v1572 = vadd.f32 %v516, %v1571
  %1573 = vmatmul.f32.gmra.mxu0 %v224
  %v1574 = vpop.f32.mrf.mxu0
  %v1575 = vadd.f32 %v516, %v1574
  %1576 = vmatmul.f32.gmra.mxu0 %v226
  %v1577 = vpop.f32.mrf.mxu0
  %v1578 = vadd.f32 %v516, %v1577
  %1579 = vmatmul.f32.gmra.mxu0 %v228
  %v1580 = vpop.f32.mrf.mxu0
  %v1581 = vadd.f32 %v516, %v1580
  %1582 = vmatmul.f32.gmra.mxu0 %v230
  %v1583 = vpop.f32.mrf.mxu0
  %v1584 = vadd.f32 %v516, %v1583
  %1585 = vmatmul.f32.gmra.mxu0 %v232
  %v1586 = vpop.f32.mrf.mxu0
  %v1587 = vadd.f32 %v516, %v1586
  %1588 = vmatmul.f32.gmra.mxu0 %v234
  %v1589 = vpop.f32.mrf.mxu0
  %v1590 = vadd.f32 %v516, %v1589
  %1591 = vmatmul.f32.gmra.mxu0 %v236
  %v1592 = vpop.f32.mrf.mxu0
  %v1593 = vadd.f32 %v516, %v1592
  %1594 = vmatmul.f32.gmra.mxu0 %v238
  %v1595 = vpop.f32.mrf.mxu0
  %v1596 = vadd.f32 %v516, %v1595
  %1597 = vmatmul.f32.gmra.mxu0 %v240
  %v1598 = vpop.f32.mrf.mxu0
  %v1599 = vadd.f32 %v516, %v1598
  %1600 = vmatmul.f32.gmra.mxu0 %v242
  %v1601 = vpop.f32.mrf.mxu0
  %v1602 = vadd.f32 %v516, %v1601
  %1603 = vmatmul.f32.gmra.mxu0 %v244
  %v1604 = vpop.f32.mrf.mxu0
  %v1605 = vadd.f32 %v516, %v1604
  %1606 = vmatmul.f32.gmra.mxu0 %v246
  %v1607 = vpop.f32.mrf.mxu0
  %v1608 = vadd.f32 %v516, %v1607
  %1609 = vmatmul.f32.gmra.mxu0 %v248
  %v1610 = vpop.f32.mrf.mxu0
  %v1611 = vadd.f32 %v516, %v1610
  %1612 = vmatmul.f32.gmra.mxu0 %v250
  %v1613 = vpop.f32.mrf.mxu0
  %v1614 = vadd.f32 %v516, %v1613
  %1615 = vmatmul.f32.gmra.mxu0 %v252
  %v1616 = vpop.f32.mrf.mxu0
  %v1617 = vadd.f32 %v516, %v1616
  %1618 = vmatmul.f32.gmra.mxu0 %v254
  %v1619 = vpop.f32.mrf.mxu0
  %v1620 = vadd.f32 %v516, %v1619
  %1621 = vmatmul.f32.gmra.mxu0 %v256
  %v1622 = vpop.f32.mrf.mxu0
  %v1623 = vadd.f32 %v516, %v1622
  %1624 = vmatmul.f32.gmra.mxu0 %v258
  %v1625 = vpop.f32.mrf.mxu0
  %v1626 = vadd.f32 %v516, %v1625
  %1627 = vmatmul.f32.gmra.mxu0 %v260
  %v1628 = vpop.f32.mrf.mxu0
  %v1629 = vadd.f32 %v516, %v1628
  %1630 = vmatmul.f32.gmra.mxu0 %v262
  %v1631 = vpop.f32.mrf.mxu0
  %v1632 = vadd.f32 %v516, %v1631
  %1633 = vmatmul.f32.gmra.mxu0 %v264
  %v1634 = vpop.f32.mrf.mxu0
  %v1635 = vadd.f32 %v516, %v1634
  %1636 = vmatmul.f32.gmra.mxu0 %v266
  %v1637 = vpop.f32.mrf.mxu0
  %v1638 = vadd.f32 %v516, %v1637
  %1639 = vmatmul.f32.gmra.mxu0 %v268
  %v1640 = vpop.f32.mrf.mxu0
  %v1641 = vadd.f32 %v516, %v1640
  %1642 = vmatmul.f32.gmra.mxu0 %v270
  %v1643 = vpop.f32.mrf.mxu0
  %v1644 = vadd.f32 %v516, %v1643
  %1645 = vmatmul.f32.gmra.mxu0 %v272
  %v1646 = vpop.f32.mrf.mxu0
  %v1647 = vadd.f32 %v516, %v1646
  %1648 = vmatmul.f32.gmra.mxu0 %v274
  %v1649 = vpop.f32.mrf.mxu0
  %v1650 = vadd.f32 %v516, %v1649
  %1651 = vmatmul.f32.gmra.mxu0 %v276
  %v1652 = vpop.f32.mrf.mxu0
  %v1653 = vadd.f32 %v516, %v1652
  %1654 = vmatmul.f32.gmra.mxu0 %v278
  %v1655 = vpop.f32.mrf.mxu0
  %v1656 = vadd.f32 %v516, %v1655
  %1657 = vmatmul.f32.gmra.mxu0 %v280
  %v1658 = vpop.f32.mrf.mxu0
  %v1659 = vadd.f32 %v516, %v1658
  %1660 = vmatmul.f32.gmra.mxu0 %v282
  %v1661 = vpop.f32.mrf.mxu0
  %v1662 = vadd.f32 %v516, %v1661
  %1663 = vmatmul.f32.gmra.mxu0 %v284
  %v1664 = vpop.f32.mrf.mxu0
  %v1665 = vadd.f32 %v516, %v1664
  %1666 = vmatmul.f32.gmra.mxu0 %v286
  %v1667 = vpop.f32.mrf.mxu0
  %v1668 = vadd.f32 %v516, %v1667
  %1669 = vmatmul.f32.gmra.mxu0 %v288
  %v1670 = vpop.f32.mrf.mxu0
  %v1671 = vadd.f32 %v516, %v1670
  %1672 = vmatmul.f32.gmra.mxu0 %v290
  %v1673 = vpop.f32.mrf.mxu0
  %v1674 = vadd.f32 %v516, %v1673
  %1675 = vmatmul.f32.gmra.mxu0 %v292
  %v1676 = vpop.f32.mrf.mxu0
  %v1677 = vadd.f32 %v516, %v1676
  %1678 = vmatmul.f32.gmra.mxu0 %v294
  %v1679 = vpop.f32.mrf.mxu0
  %v1680 = vadd.f32 %v516, %v1679
  %1681 = vmatmul.f32.gmra.mxu0 %v296
  %v1682 = vpop.f32.mrf.mxu0
  %v1683 = vadd.f32 %v516, %v1682
  %1684 = vmatmul.f32.gmra.mxu0 %v298
  %v1685 = vpop.f32.mrf.mxu0
  %v1686 = vadd.f32 %v516, %v1685
  %1687 = vmatmul.f32.gmra.mxu0 %v300
  %v1688 = vpop.f32.mrf.mxu0
  %v1689 = vadd.f32 %v516, %v1688
  %1690 = vmatmul.f32.gmra.mxu0 %v302
  %v1691 = vpop.f32.mrf.mxu0
  %v1692 = vadd.f32 %v516, %v1691
  %1693 = vmatmul.f32.gmra.mxu0 %v304
  %v1694 = vpop.f32.mrf.mxu0
  %v1695 = vadd.f32 %v516, %v1694
  %1696 = vmatmul.f32.gmra.mxu0 %v306
  %v1697 = vpop.f32.mrf.mxu0
  %v1698 = vadd.f32 %v516, %v1697
  %1699 = vmatmul.f32.gmra.mxu0 %v308
  %v1700 = vpop.f32.mrf.mxu0
  %v1701 = vadd.f32 %v516, %v1700
  %1702 = vmatmul.f32.gmra.mxu0 %v310
  %v1703 = vpop.f32.mrf.mxu0
  %v1704 = vadd.f32 %v516, %v1703
  %1705 = vmatmul.f32.gmra.mxu0 %v312
  %v1706 = vpop.f32.mrf.mxu0
  %v1707 = vadd.f32 %v516, %v1706
  %1708 = vmatmul.f32.gmra.mxu0 %v314
  %v1709 = vpop.f32.mrf.mxu0
  %v1710 = vadd.f32 %v516, %v1709
  %1711 = vmatmul.f32.gmra.mxu0 %v316
  %v1712 = vpop.f32.mrf.mxu0
  %v1713 = vadd.f32 %v516, %v1712
  %1714 = vmatmul.f32.gmra.mxu0 %v318
  %v1715 = vpop.f32.mrf.mxu0
  %v1716 = vadd.f32 %v516, %v1715
  %1717 = vmatmul.f32.gmra.mxu0 %v320
  %v1718 = vpop.f32.mrf.mxu0
  %v1719 = vadd.f32 %v516, %v1718
  %1720 = vmatmul.f32.gmra.mxu0 %v322
  %v1721 = vpop.f32.mrf.mxu0
  %v1722 = vadd.f32 %v516, %v1721
  %1723 = vmatmul.f32.gmra.mxu0 %v324
  %v1724 = vpop.f32.mrf.mxu0
  %v1725 = vadd.f32 %v516, %v1724
  %1726 = vmatmul.f32.gmra.mxu0 %v326
  %v1727 = vpop.f32.mrf.mxu0
  %v1728 = vadd.f32 %v516, %v1727
  %1729 = vmatmul.f32.gmra.mxu0 %v328
  %v1730 = vpop.f32.mrf.mxu0
  %v1731 = vadd.f32 %v516, %v1730
  %1732 = vmatmul.f32.gmra.mxu0 %v330
  %v1733 = vpop.f32.mrf.mxu0
  %v1734 = vadd.f32 %v516, %v1733
  %1735 = vmatmul.f32.gmra.mxu0 %v332
  %v1736 = vpop.f32.mrf.mxu0
  %v1737 = vadd.f32 %v516, %v1736
  %1738 = vmatmul.f32.gmra.mxu0 %v334
  %v1739 = vpop.f32.mrf.mxu0
  %v1740 = vadd.f32 %v516, %v1739
  %1741 = vmatmul.f32.gmra.mxu0 %v336
  %v1742 = vpop.f32.mrf.mxu0
  %v1743 = vadd.f32 %v516, %v1742
  %1744 = vmatmul.f32.gmra.mxu0 %v338
  %v1745 = vpop.f32.mrf.mxu0
  %v1746 = vadd.f32 %v516, %v1745
  %1747 = vmatmul.f32.gmra.mxu0 %v340
  %v1748 = vpop.f32.mrf.mxu0
  %v1749 = vadd.f32 %v516, %v1748
  %1750 = vmatmul.f32.gmra.mxu0 %v342
  %v1751 = vpop.f32.mrf.mxu0
  %v1752 = vadd.f32 %v516, %v1751
  %1753 = vmatmul.f32.gmra.mxu0 %v344
  %v1754 = vpop.f32.mrf.mxu0
  %v1755 = vadd.f32 %v516, %v1754
  %1756 = vmatmul.f32.gmra.mxu0 %v346
  %v1757 = vpop.f32.mrf.mxu0
  %v1758 = vadd.f32 %v516, %v1757
  %1759 = vmatmul.f32.gmra.mxu0 %v348
  %v1760 = vpop.f32.mrf.mxu0
  %v1761 = vadd.f32 %v516, %v1760
  %1762 = vmatmul.f32.gmra.mxu0 %v350
  %v1763 = vpop.f32.mrf.mxu0
  %v1764 = vadd.f32 %v516, %v1763
  %1765 = vmatmul.f32.gmra.mxu0 %v352
  %v1766 = vpop.f32.mrf.mxu0
  %v1767 = vadd.f32 %v516, %v1766
  %1768 = vmatmul.f32.gmra.mxu0 %v354
  %v1769 = vpop.f32.mrf.mxu0
  %v1770 = vadd.f32 %v516, %v1769
  %1771 = vmatmul.f32.gmra.mxu0 %v356
  %v1772 = vpop.f32.mrf.mxu0
  %v1773 = vadd.f32 %v516, %v1772
  %1774 = vmatmul.f32.gmra.mxu0 %v358
  %v1775 = vpop.f32.mrf.mxu0
  %v1776 = vadd.f32 %v516, %v1775
  %1777 = vmatmul.f32.gmra.mxu0 %v360
  %v1778 = vpop.f32.mrf.mxu0
  %v1779 = vadd.f32 %v516, %v1778
  %1780 = vmatmul.f32.gmra.mxu0 %v362
  %v1781 = vpop.f32.mrf.mxu0
  %v1782 = vadd.f32 %v516, %v1781
  %1783 = vmatmul.f32.gmra.mxu0 %v364
  %v1784 = vpop.f32.mrf.mxu0
  %v1785 = vadd.f32 %v516, %v1784
  %1786 = vmatmul.f32.gmra.mxu0 %v366
  %v1787 = vpop.f32.mrf.mxu0
  %v1788 = vadd.f32 %v516, %v1787
  %1789 = vmatmul.f32.gmra.mxu0 %v368
  %v1790 = vpop.f32.mrf.mxu0
  %v1791 = vadd.f32 %v516, %v1790
  %1792 = vmatmul.f32.gmra.mxu0 %v370
  %v1793 = vpop.f32.mrf.mxu0
  %v1794 = vadd.f32 %v516, %v1793
  %1795 = vmatmul.f32.gmra.mxu0 %v372
  %v1796 = vpop.f32.mrf.mxu0
  %v1797 = vadd.f32 %v516, %v1796
  %1798 = vmatmul.f32.gmra.mxu0 %v374
  %v1799 = vpop.f32.mrf.mxu0
  %v1800 = vadd.f32 %v516, %v1799
  %1801 = vmatmul.f32.gmra.mxu0 %v376
  %v1802 = vpop.f32.mrf.mxu0
  %v1803 = vadd.f32 %v516, %v1802
  %1804 = vmatmul.f32.gmra.mxu0 %v378
  %v1805 = vpop.f32.mrf.mxu0
  %v1806 = vadd.f32 %v516, %v1805
  %1807 = vmatmul.f32.gmra.mxu0 %v380
  %v1808 = vpop.f32.mrf.mxu0
  %v1809 = vadd.f32 %v516, %v1808
  %1810 = vmatmul.f32.gmra.mxu0 %v382
  %v1811 = vpop.f32.mrf.mxu0
  %v1812 = vadd.f32 %v516, %v1811
  %1813 = vmatmul.f32.gmra.mxu0 %v384
  %v1814 = vpop.f32.mrf.mxu0
  %v1815 = vadd.f32 %v516, %v1814
  %1816 = vmatmul.f32.gmra.mxu0 %v386
  %v1817 = vpop.f32.mrf.mxu0
  %v1818 = vadd.f32 %v516, %v1817
  %1819 = vmatmul.f32.gmra.mxu0 %v388
  %v1820 = vpop.f32.mrf.mxu0
  %v1821 = vadd.f32 %v516, %v1820
  %1822 = vmatmul.f32.gmra.mxu0 %v390
  %v1823 = vpop.f32.mrf.mxu0
  %v1824 = vadd.f32 %v516, %v1823
  %1825 = vmatmul.f32.gmra.mxu0 %v392
  %v1826 = vpop.f32.mrf.mxu0
  %v1827 = vadd.f32 %v516, %v1826
  %1828 = vmatmul.f32.gmra.mxu0 %v394
  %v1829 = vpop.f32.mrf.mxu0
  %v1830 = vadd.f32 %v516, %v1829
  %1831 = vmatmul.f32.gmra.mxu0 %v396
  %v1832 = vpop.f32.mrf.mxu0
  %v1833 = vadd.f32 %v516, %v1832
  %1834 = vmatmul.f32.gmra.mxu0 %v398
  %v1835 = vpop.f32.mrf.mxu0
  %v1836 = vadd.f32 %v516, %v1835
  %1837 = vmatmul.f32.gmra.mxu0 %v400
  %v1838 = vpop.f32.mrf.mxu0
  %v1839 = vadd.f32 %v516, %v1838
  %1840 = vmatmul.f32.gmra.mxu0 %v402
  %v1841 = vpop.f32.mrf.mxu0
  %v1842 = vadd.f32 %v516, %v1841
  %1843 = vmatmul.f32.gmra.mxu0 %v404
  %v1844 = vpop.f32.mrf.mxu0
  %v1845 = vadd.f32 %v516, %v1844
  %1846 = vmatmul.f32.gmra.mxu0 %v406
  %v1847 = vpop.f32.mrf.mxu0
  %v1848 = vadd.f32 %v516, %v1847
  %1849 = vmatmul.f32.gmra.mxu0 %v408
  %v1850 = vpop.f32.mrf.mxu0
  %v1851 = vadd.f32 %v516, %v1850
  %1852 = vmatmul.f32.gmra.mxu0 %v410
  %v1853 = vpop.f32.mrf.mxu0
  %v1854 = vadd.f32 %v516, %v1853
  %1855 = vmatmul.f32.gmra.mxu0 %v412
  %v1856 = vpop.f32.mrf.mxu0
  %v1857 = vadd.f32 %v516, %v1856
  %1858 = vmatmul.f32.gmra.mxu0 %v414
  %v1859 = vpop.f32.mrf.mxu0
  %v1860 = vadd.f32 %v516, %v1859
  %1861 = vmatmul.f32.gmra.mxu0 %v416
  %v1862 = vpop.f32.mrf.mxu0
  %v1863 = vadd.f32 %v516, %v1862
  %1864 = vmatmul.f32.gmra.mxu0 %v418
  %v1865 = vpop.f32.mrf.mxu0
  %v1866 = vadd.f32 %v516, %v1865
  %1867 = vmatmul.f32.gmra.mxu0 %v420
  %v1868 = vpop.f32.mrf.mxu0
  %v1869 = vadd.f32 %v516, %v1868
  %1870 = vmatmul.f32.gmra.mxu0 %v422
  %v1871 = vpop.f32.mrf.mxu0
  %v1872 = vadd.f32 %v516, %v1871
  %1873 = vmatmul.f32.gmra.mxu0 %v424
  %v1874 = vpop.f32.mrf.mxu0
  %v1875 = vadd.f32 %v516, %v1874
  %1876 = vmatmul.f32.gmra.mxu0 %v426
  %v1877 = vpop.f32.mrf.mxu0
  %v1878 = vadd.f32 %v516, %v1877
  %1879 = vmatmul.f32.gmra.mxu0 %v428
  %v1880 = vpop.f32.mrf.mxu0
  %v1881 = vadd.f32 %v516, %v1880
  %1882 = vmatmul.f32.gmra.mxu0 %v430
  %v1883 = vpop.f32.mrf.mxu0
  %v1884 = vadd.f32 %v516, %v1883
  %1885 = vmatmul.f32.gmra.mxu0 %v432
  %v1886 = vpop.f32.mrf.mxu0
  %v1887 = vadd.f32 %v516, %v1886
  %1888 = vmatmul.f32.gmra.mxu0 %v434
  %v1889 = vpop.f32.mrf.mxu0
  %v1890 = vadd.f32 %v516, %v1889
  %1891 = vmatmul.f32.gmra.mxu0 %v436
  %v1892 = vpop.f32.mrf.mxu0
  %v1893 = vadd.f32 %v516, %v1892
  %1894 = vmatmul.f32.gmra.mxu0 %v438
  %v1895 = vpop.f32.mrf.mxu0
  %v1896 = vadd.f32 %v516, %v1895
  %1897 = vmatmul.f32.gmra.mxu0 %v440
  %v1898 = vpop.f32.mrf.mxu0
  %v1899 = vadd.f32 %v516, %v1898
  %1900 = vmatmul.f32.gmra.mxu0 %v442
  %v1901 = vpop.f32.mrf.mxu0
  %v1902 = vadd.f32 %v516, %v1901
  %1903 = vmatmul.f32.gmra.mxu0 %v444
  %v1904 = vpop.f32.mrf.mxu0
  %v1905 = vadd.f32 %v516, %v1904
  %1906 = vmatmul.f32.gmra.mxu0 %v446
  %v1907 = vpop.f32.mrf.mxu0
  %v1908 = vadd.f32 %v516, %v1907
  %1909 = vmatmul.f32.gmra.mxu0 %v448
  %v1910 = vpop.f32.mrf.mxu0
  %v1911 = vadd.f32 %v516, %v1910
  %1912 = vmatmul.f32.gmra.mxu0 %v450
  %v1913 = vpop.f32.mrf.mxu0
  %v1914 = vadd.f32 %v516, %v1913
  %1915 = vmatmul.f32.gmra.mxu0 %v452
  %v1916 = vpop.f32.mrf.mxu0
  %v1917 = vadd.f32 %v516, %v1916
  %1918 = vmatmul.f32.gmra.mxu0 %v454
  %v1919 = vpop.f32.mrf.mxu0
  %v1920 = vadd.f32 %v516, %v1919
  %1921 = vmatmul.f32.gmra.mxu0 %v456
  %v1922 = vpop.f32.mrf.mxu0
  %v1923 = vadd.f32 %v516, %v1922
  %1924 = vmatmul.f32.gmra.mxu0 %v458
  %v1925 = vpop.f32.mrf.mxu0
  %v1926 = vadd.f32 %v516, %v1925
  %1927 = vmatmul.f32.gmra.mxu0 %v460
  %v1928 = vpop.f32.mrf.mxu0
  %v1929 = vadd.f32 %v516, %v1928
  %1930 = vmatmul.f32.gmra.mxu0 %v462
  %v1931 = vpop.f32.mrf.mxu0
  %v1932 = vadd.f32 %v516, %v1931
  %1933 = vmatmul.f32.gmra.mxu0 %v464
  %v1934 = vpop.f32.mrf.mxu0
  %v1935 = vadd.f32 %v516, %v1934
  %1936 = vmatmul.f32.gmra.mxu0 %v466
  %v1937 = vpop.f32.mrf.mxu0
  %v1938 = vadd.f32 %v516, %v1937
  %1939 = vmatmul.f32.gmra.mxu0 %v468
  %v1940 = vpop.f32.mrf.mxu0
  %v1941 = vadd.f32 %v516, %v1940
  %1942 = vmatmul.f32.gmra.mxu0 %v470
  %v1943 = vpop.f32.mrf.mxu0
  %v1944 = vadd.f32 %v516, %v1943
  %1945 = vmatmul.f32.gmra.mxu0 %v472
  %v1946 = vpop.f32.mrf.mxu0
  %v1947 = vadd.f32 %v516, %v1946
  %1948 = vmatmul.f32.gmra.mxu0 %v474
  %v1949 = vpop.f32.mrf.mxu0
  %v1950 = vadd.f32 %v516, %v1949
  %1951 = vmatmul.f32.gmra.mxu0 %v476
  %v1952 = vpop.f32.mrf.mxu0
  %v1953 = vadd.f32 %v516, %v1952
  %1954 = vmatmul.f32.gmra.mxu0 %v478
  %v1955 = vpop.f32.mrf.mxu0
  %v1956 = vadd.f32 %v516, %v1955
  %1957 = vmatmul.f32.gmra.mxu0 %v480
  %v1958 = vpop.f32.mrf.mxu0
  %v1959 = vadd.f32 %v516, %v1958
  %1960 = vmatmul.f32.gmra.mxu0 %v482
  %v1961 = vpop.f32.mrf.mxu0
  %v1962 = vadd.f32 %v516, %v1961
  %1963 = vmatmul.f32.gmra.mxu0 %v484
  %v1964 = vpop.f32.mrf.mxu0
  %v1965 = vadd.f32 %v516, %v1964
  %1966 = vmatmul.f32.gmra.mxu0 %v486
  %v1967 = vpop.f32.mrf.mxu0
  %v1968 = vadd.f32 %v516, %v1967
  %1969 = vmatmul.f32.gmra.mxu0 %v488
  %v1970 = vpop.f32.mrf.mxu0
  %v1971 = vadd.f32 %v516, %v1970
  %1972 = vmatmul.f32.gmra.mxu0 %v490
  %v1973 = vpop.f32.mrf.mxu0
  %v1974 = vadd.f32 %v516, %v1973
  %1975 = vmatmul.f32.gmra.mxu0 %v492
  %v1976 = vpop.f32.mrf.mxu0
  %v1977 = vadd.f32 %v516, %v1976
  %1978 = vmatmul.f32.gmra.mxu0 %v494
  %v1979 = vpop.f32.mrf.mxu0
  %v1980 = vadd.f32 %v516, %v1979
  %1981 = vdwg.mxu0
  %1982 = vmatpush.msra.mxu0 0.0
  %1983 = vmatpush.msra.mxu0 0.0
  %1984 = vmatpush.msra.mxu0 0.0
  %1985 = vmatpush.msra.mxu0 0.0
  %1986 = vmatpush.msra.mxu0 0.0
  %1987 = vmatpush.msra.mxu0 0.0
  %1988 = vmatpush.msra.mxu0 0.0
  %1989 = vmatpush.msra.mxu0 0.0
  %1990 = vmatpush.msra.mxu0 0.0
  %1991 = vmatpush.msra.mxu0 0.0
  %1992 = vmatpush.msra.mxu0 0.0
  %1993 = vmatpush.msra.mxu0 0.0
  %1994 = vmatpush.msra.mxu0 0.0
  %1995 = vmatpush.msra.mxu0 0.0
  %1996 = vmatpush.msra.mxu0 %v513
  %1997 = vmatpush.msra.mxu0 %v512
  %1998 = vmatmul.f32.gmra.mxu0 %v520
  %v1999 = vpop.f32.mrf.mxu0
  %v2000 = vadd.f32 %v1260, %v1999
  %2001 = vmatmul.f32.gmra.mxu0 %v523
  %v2002 = vpop.f32.mrf.mxu0
  %v2003 = vadd.f32 %v1263, %v2002
  %2004 = vmatmul.f32.gmra.mxu0 %v526
  %v2005 = vpop.f32.mrf.mxu0
  %v2006 = vadd.f32 %v1266, %v2005
  %2007 = vmatmul.f32.gmra.mxu0 %v529
  %v2008 = vpop.f32.mrf.mxu0
  %v2009 = vadd.f32 %v1269, %v2008
  %2010 = vmatmul.f32.gmra.mxu0 %v532
  %v2011 = vpop.f32.mrf.mxu0
  %v2012 = vadd.f32 %v1272, %v2011
  %2013 = vmatmul.f32.gmra.mxu0 %v535
  %v2014 = vpop.f32.mrf.mxu0
  %v2015 = vadd.f32 %v1275, %v2014
  %2016 = vmatmul.f32.gmra.mxu0 %v538
  %v2017 = vpop.f32.mrf.mxu0
  %v2018 = vadd.f32 %v1278, %v2017
  %2019 = vmatmul.f32.gmra.mxu0 %v541
  %v2020 = vpop.f32.mrf.mxu0
  %v2021 = vadd.f32 %v1281, %v2020
  %2022 = vmatmul.f32.gmra.mxu0 %v544
  %v2023 = vpop.f32.mrf.mxu0
  %v2024 = vadd.f32 %v1284, %v2023
  %2025 = vmatmul.f32.gmra.mxu0 %v547
  %v2026 = vpop.f32.mrf.mxu0
  %v2027 = vadd.f32 %v1287, %v2026
  %2028 = vmatmul.f32.gmra.mxu0 %v550
  %v2029 = vpop.f32.mrf.mxu0
  %v2030 = vadd.f32 %v1290, %v2029
  %2031 = vmatmul.f32.gmra.mxu0 %v553
  %v2032 = vpop.f32.mrf.mxu0
  %v2033 = vadd.f32 %v1293, %v2032
  %2034 = vmatmul.f32.gmra.mxu0 %v556
  %v2035 = vpop.f32.mrf.mxu0
  %v2036 = vadd.f32 %v1296, %v2035
  %2037 = vmatmul.f32.gmra.mxu0 %v559
  %v2038 = vpop.f32.mrf.mxu0
  %v2039 = vadd.f32 %v1299, %v2038
  %2040 = vmatmul.f32.gmra.mxu0 %v562
  %v2041 = vpop.f32.mrf.mxu0
  %v2042 = vadd.f32 %v1302, %v2041
  %2043 = vmatmul.f32.gmra.mxu0 %v565
  %v2044 = vpop.f32.mrf.mxu0
  %v2045 = vadd.f32 %v1305, %v2044
  %2046 = vmatmul.f32.gmra.mxu0 %v568
  %v2047 = vpop.f32.mrf.mxu0
  %v2048 = vadd.f32 %v1308, %v2047
  %2049 = vmatmul.f32.gmra.mxu0 %v571
  %v2050 = vpop.f32.mrf.mxu0
  %v2051 = vadd.f32 %v1311, %v2050
  %2052 = vmatmul.f32.gmra.mxu0 %v574
  %v2053 = vpop.f32.mrf.mxu0
  %v2054 = vadd.f32 %v1314, %v2053
  %2055 = vmatmul.f32.gmra.mxu0 %v577
  %v2056 = vpop.f32.mrf.mxu0
  %v2057 = vadd.f32 %v1317, %v2056
  %2058 = vmatmul.f32.gmra.mxu0 %v580
  %v2059 = vpop.f32.mrf.mxu0
  %v2060 = vadd.f32 %v1320, %v2059
  %2061 = vmatmul.f32.gmra.mxu0 %v583
  %v2062 = vpop.f32.mrf.mxu0
  %v2063 = vadd.f32 %v1323, %v2062
  %2064 = vmatmul.f32.gmra.mxu0 %v586
  %v2065 = vpop.f32.mrf.mxu0
  %v2066 = vadd.f32 %v1326, %v2065
  %2067 = vmatmul.f32.gmra.mxu0 %v589
  %v2068 = vpop.f32.mrf.mxu0
  %v2069 = vadd.f32 %v1329, %v2068
  %2070 = vmatmul.f32.gmra.mxu0 %v592
  %v2071 = vpop.f32.mrf.mxu0
  %v2072 = vadd.f32 %v1332, %v2071
  %2073 = vmatmul.f32.gmra.mxu0 %v595
  %v2074 = vpop.f32.mrf.mxu0
  %v2075 = vadd.f32 %v1335, %v2074
  %2076 = vmatmul.f32.gmra.mxu0 %v598
  %v2077 = vpop.f32.mrf.mxu0
  %v2078 = vadd.f32 %v1338, %v2077
  %2079 = vmatmul.f32.gmra.mxu0 %v601
  %v2080 = vpop.f32.mrf.mxu0
  %v2081 = vadd.f32 %v1341, %v2080
  %2082 = vmatmul.f32.gmra.mxu0 %v604
  %v2083 = vpop.f32.mrf.mxu0
  %v2084 = vadd.f32 %v1344, %v2083
  %2085 = vmatmul.f32.gmra.mxu0 %v607
  %v2086 = vpop.f32.mrf.mxu0
  %v2087 = vadd.f32 %v1347, %v2086
  %2088 = vmatmul.f32.gmra.mxu0 %v610
  %v2089 = vpop.f32.mrf.mxu0
  %v2090 = vadd.f32 %v1350, %v2089
  %2091 = vmatmul.f32.gmra.mxu0 %v613
  %v2092 = vpop.f32.mrf.mxu0
  %v2093 = vadd.f32 %v1353, %v2092
  %2094 = vmatmul.f32.gmra.mxu0 %v616
  %v2095 = vpop.f32.mrf.mxu0
  %v2096 = vadd.f32 %v1356, %v2095
  %2097 = vmatmul.f32.gmra.mxu0 %v619
  %v2098 = vpop.f32.mrf.mxu0
  %v2099 = vadd.f32 %v1359, %v2098
  %2100 = vmatmul.f32.gmra.mxu0 %v622
  %v2101 = vpop.f32.mrf.mxu0
  %v2102 = vadd.f32 %v1362, %v2101
  %2103 = vmatmul.f32.gmra.mxu0 %v625
  %v2104 = vpop.f32.mrf.mxu0
  %v2105 = vadd.f32 %v1365, %v2104
  %2106 = vmatmul.f32.gmra.mxu0 %v628
  %v2107 = vpop.f32.mrf.mxu0
  %v2108 = vadd.f32 %v1368, %v2107
  %2109 = vmatmul.f32.gmra.mxu0 %v631
  %v2110 = vpop.f32.mrf.mxu0
  %v2111 = vadd.f32 %v1371, %v2110
  %2112 = vmatmul.f32.gmra.mxu0 %v634
  %v2113 = vpop.f32.mrf.mxu0
  %v2114 = vadd.f32 %v1374, %v2113
  %2115 = vmatmul.f32.gmra.mxu0 %v637
  %v2116 = vpop.f32.mrf.mxu0
  %v2117 = vadd.f32 %v1377, %v2116
  %2118 = vmatmul.f32.gmra.mxu0 %v640
  %v2119 = vpop.f32.mrf.mxu0
  %v2120 = vadd.f32 %v1380, %v2119
  %2121 = vmatmul.f32.gmra.mxu0 %v643
  %v2122 = vpop.f32.mrf.mxu0
  %v2123 = vadd.f32 %v1383, %v2122
  %2124 = vmatmul.f32.gmra.mxu0 %v646
  %v2125 = vpop.f32.mrf.mxu0
  %v2126 = vadd.f32 %v1386, %v2125
  %2127 = vmatmul.f32.gmra.mxu0 %v649
  %v2128 = vpop.f32.mrf.mxu0
  %v2129 = vadd.f32 %v1389, %v2128
  %2130 = vmatmul.f32.gmra.mxu0 %v652
  %v2131 = vpop.f32.mrf.mxu0
  %v2132 = vadd.f32 %v1392, %v2131
  %2133 = vmatmul.f32.gmra.mxu0 %v655
  %v2134 = vpop.f32.mrf.mxu0
  %v2135 = vadd.f32 %v1395, %v2134
  %2136 = vmatmul.f32.gmra.mxu0 %v658
  %v2137 = vpop.f32.mrf.mxu0
  %v2138 = vadd.f32 %v1398, %v2137
  %2139 = vmatmul.f32.gmra.mxu0 %v661
  %v2140 = vpop.f32.mrf.mxu0
  %v2141 = vadd.f32 %v1401, %v2140
  %2142 = vmatmul.f32.gmra.mxu0 %v664
  %v2143 = vpop.f32.mrf.mxu0
  %v2144 = vadd.f32 %v1404, %v2143
  %2145 = vmatmul.f32.gmra.mxu0 %v667
  %v2146 = vpop.f32.mrf.mxu0
  %v2147 = vadd.f32 %v1407, %v2146
  %2148 = vmatmul.f32.gmra.mxu0 %v670
  %v2149 = vpop.f32.mrf.mxu0
  %v2150 = vadd.f32 %v1410, %v2149
  %2151 = vmatmul.f32.gmra.mxu0 %v673
  %v2152 = vpop.f32.mrf.mxu0
  %v2153 = vadd.f32 %v1413, %v2152
  %2154 = vmatmul.f32.gmra.mxu0 %v676
  %v2155 = vpop.f32.mrf.mxu0
  %v2156 = vadd.f32 %v1416, %v2155
  %2157 = vmatmul.f32.gmra.mxu0 %v679
  %v2158 = vpop.f32.mrf.mxu0
  %v2159 = vadd.f32 %v1419, %v2158
  %2160 = vmatmul.f32.gmra.mxu0 %v682
  %v2161 = vpop.f32.mrf.mxu0
  %v2162 = vadd.f32 %v1422, %v2161
  %2163 = vmatmul.f32.gmra.mxu0 %v685
  %v2164 = vpop.f32.mrf.mxu0
  %v2165 = vadd.f32 %v1425, %v2164
  %2166 = vmatmul.f32.gmra.mxu0 %v688
  %v2167 = vpop.f32.mrf.mxu0
  %v2168 = vadd.f32 %v1428, %v2167
  %2169 = vmatmul.f32.gmra.mxu0 %v691
  %v2170 = vpop.f32.mrf.mxu0
  %v2171 = vadd.f32 %v1431, %v2170
  %2172 = vmatmul.f32.gmra.mxu0 %v694
  %v2173 = vpop.f32.mrf.mxu0
  %v2174 = vadd.f32 %v1434, %v2173
  %2175 = vmatmul.f32.gmra.mxu0 %v697
  %v2176 = vpop.f32.mrf.mxu0
  %v2177 = vadd.f32 %v1437, %v2176
  %2178 = vmatmul.f32.gmra.mxu0 %v700
  %v2179 = vpop.f32.mrf.mxu0
  %v2180 = vadd.f32 %v1440, %v2179
  %2181 = vmatmul.f32.gmra.mxu0 %v703
  %v2182 = vpop.f32.mrf.mxu0
  %v2183 = vadd.f32 %v1443, %v2182
  %2184 = vmatmul.f32.gmra.mxu0 %v706
  %v2185 = vpop.f32.mrf.mxu0
  %v2186 = vadd.f32 %v1446, %v2185
  %2187 = vmatmul.f32.gmra.mxu0 %v709
  %v2188 = vpop.f32.mrf.mxu0
  %v2189 = vadd.f32 %v1449, %v2188
  %2190 = vmatmul.f32.gmra.mxu0 %v712
  %v2191 = vpop.f32.mrf.mxu0
  %v2192 = vadd.f32 %v1452, %v2191
  %2193 = vmatmul.f32.gmra.mxu0 %v715
  %v2194 = vpop.f32.mrf.mxu0
  %v2195 = vadd.f32 %v1455, %v2194
  %2196 = vmatmul.f32.gmra.mxu0 %v718
  %v2197 = vpop.f32.mrf.mxu0
  %v2198 = vadd.f32 %v1458, %v2197
  %2199 = vmatmul.f32.gmra.mxu0 %v721
  %v2200 = vpop.f32.mrf.mxu0
  %v2201 = vadd.f32 %v1461, %v2200
  %2202 = vmatmul.f32.gmra.mxu0 %v724
  %v2203 = vpop.f32.mrf.mxu0
  %v2204 = vadd.f32 %v1464, %v2203
  %2205 = vmatmul.f32.gmra.mxu0 %v727
  %v2206 = vpop.f32.mrf.mxu0
  %v2207 = vadd.f32 %v1467, %v2206
  %2208 = vmatmul.f32.gmra.mxu0 %v730
  %v2209 = vpop.f32.mrf.mxu0
  %v2210 = vadd.f32 %v1470, %v2209
  %2211 = vmatmul.f32.gmra.mxu0 %v733
  %v2212 = vpop.f32.mrf.mxu0
  %v2213 = vadd.f32 %v1473, %v2212
  %2214 = vmatmul.f32.gmra.mxu0 %v736
  %v2215 = vpop.f32.mrf.mxu0
  %v2216 = vadd.f32 %v1476, %v2215
  %2217 = vmatmul.f32.gmra.mxu0 %v739
  %v2218 = vpop.f32.mrf.mxu0
  %v2219 = vadd.f32 %v1479, %v2218
  %2220 = vmatmul.f32.gmra.mxu0 %v742
  %v2221 = vpop.f32.mrf.mxu0
  %v2222 = vadd.f32 %v1482, %v2221
  %2223 = vmatmul.f32.gmra.mxu0 %v745
  %v2224 = vpop.f32.mrf.mxu0
  %v2225 = vadd.f32 %v1485, %v2224
  %2226 = vmatmul.f32.gmra.mxu0 %v748
  %v2227 = vpop.f32.mrf.mxu0
  %v2228 = vadd.f32 %v1488, %v2227
  %2229 = vmatmul.f32.gmra.mxu0 %v751
  %v2230 = vpop.f32.mrf.mxu0
  %v2231 = vadd.f32 %v1491, %v2230
  %2232 = vmatmul.f32.gmra.mxu0 %v754
  %v2233 = vpop.f32.mrf.mxu0
  %v2234 = vadd.f32 %v1494, %v2233
  %2235 = vmatmul.f32.gmra.mxu0 %v757
  %v2236 = vpop.f32.mrf.mxu0
  %v2237 = vadd.f32 %v1497, %v2236
  %2238 = vmatmul.f32.gmra.mxu0 %v760
  %v2239 = vpop.f32.mrf.mxu0
  %v2240 = vadd.f32 %v1500, %v2239
  %2241 = vmatmul.f32.gmra.mxu0 %v763
  %v2242 = vpop.f32.mrf.mxu0
  %v2243 = vadd.f32 %v1503, %v2242
  %2244 = vmatmul.f32.gmra.mxu0 %v766
  %v2245 = vpop.f32.mrf.mxu0
  %v2246 = vadd.f32 %v1506, %v2245
  %2247 = vmatmul.f32.gmra.mxu0 %v769
  %v2248 = vpop.f32.mrf.mxu0
  %v2249 = vadd.f32 %v1509, %v2248
  %2250 = vmatmul.f32.gmra.mxu0 %v772
  %v2251 = vpop.f32.mrf.mxu0
  %v2252 = vadd.f32 %v1512, %v2251
  %2253 = vmatmul.f32.gmra.mxu0 %v775
  %v2254 = vpop.f32.mrf.mxu0
  %v2255 = vadd.f32 %v1515, %v2254
  %2256 = vmatmul.f32.gmra.mxu0 %v778
  %v2257 = vpop.f32.mrf.mxu0
  %v2258 = vadd.f32 %v1518, %v2257
  %2259 = vmatmul.f32.gmra.mxu0 %v781
  %v2260 = vpop.f32.mrf.mxu0
  %v2261 = vadd.f32 %v1521, %v2260
  %2262 = vmatmul.f32.gmra.mxu0 %v784
  %v2263 = vpop.f32.mrf.mxu0
  %v2264 = vadd.f32 %v1524, %v2263
  %2265 = vmatmul.f32.gmra.mxu0 %v787
  %v2266 = vpop.f32.mrf.mxu0
  %v2267 = vadd.f32 %v1527, %v2266
  %2268 = vmatmul.f32.gmra.mxu0 %v790
  %v2269 = vpop.f32.mrf.mxu0
  %v2270 = vadd.f32 %v1530, %v2269
  %2271 = vmatmul.f32.gmra.mxu0 %v793
  %v2272 = vpop.f32.mrf.mxu0
  %v2273 = vadd.f32 %v1533, %v2272
  %2274 = vmatmul.f32.gmra.mxu0 %v796
  %v2275 = vpop.f32.mrf.mxu0
  %v2276 = vadd.f32 %v1536, %v2275
  %2277 = vmatmul.f32.gmra.mxu0 %v799
  %v2278 = vpop.f32.mrf.mxu0
  %v2279 = vadd.f32 %v1539, %v2278
  %2280 = vmatmul.f32.gmra.mxu0 %v802
  %v2281 = vpop.f32.mrf.mxu0
  %v2282 = vadd.f32 %v1542, %v2281
  %2283 = vmatmul.f32.gmra.mxu0 %v805
  %v2284 = vpop.f32.mrf.mxu0
  %v2285 = vadd.f32 %v1545, %v2284
  %2286 = vmatmul.f32.gmra.mxu0 %v808
  %v2287 = vpop.f32.mrf.mxu0
  %v2288 = vadd.f32 %v1548, %v2287
  %2289 = vmatmul.f32.gmra.mxu0 %v811
  %v2290 = vpop.f32.mrf.mxu0
  %v2291 = vadd.f32 %v1551, %v2290
  %2292 = vmatmul.f32.gmra.mxu0 %v814
  %v2293 = vpop.f32.mrf.mxu0
  %v2294 = vadd.f32 %v1554, %v2293
  %2295 = vmatmul.f32.gmra.mxu0 %v817
  %v2296 = vpop.f32.mrf.mxu0
  %v2297 = vadd.f32 %v1557, %v2296
  %2298 = vmatmul.f32.gmra.mxu0 %v820
  %v2299 = vpop.f32.mrf.mxu0
  %v2300 = vadd.f32 %v1560, %v2299
  %2301 = vmatmul.f32.gmra.mxu0 %v823
  %v2302 = vpop.f32.mrf.mxu0
  %v2303 = vadd.f32 %v1563, %v2302
  %2304 = vmatmul.f32.gmra.mxu0 %v826
  %v2305 = vpop.f32.mrf.mxu0
  %v2306 = vadd.f32 %v1566, %v2305
  %2307 = vmatmul.f32.gmra.mxu0 %v829
  %v2308 = vpop.f32.mrf.mxu0
  %v2309 = vadd.f32 %v1569, %v2308
  %2310 = vmatmul.f32.gmra.mxu0 %v832
  %v2311 = vpop.f32.mrf.mxu0
  %v2312 = vadd.f32 %v1572, %v2311
  %2313 = vmatmul.f32.gmra.mxu0 %v835
  %v2314 = vpop.f32.mrf.mxu0
  %v2315 = vadd.f32 %v1575, %v2314
  %2316 = vmatmul.f32.gmra.mxu0 %v838
  %v2317 = vpop.f32.mrf.mxu0
  %v2318 = vadd.f32 %v1578, %v2317
  %2319 = vmatmul.f32.gmra.mxu0 %v841
  %v2320 = vpop.f32.mrf.mxu0
  %v2321 = vadd.f32 %v1581, %v2320
  %2322 = vmatmul.f32.gmra.mxu0 %v844
  %v2323 = vpop.f32.mrf.mxu0
  %v2324 = vadd.f32 %v1584, %v2323
  %2325 = vmatmul.f32.gmra.mxu0 %v847
  %v2326 = vpop.f32.mrf.mxu0
  %v2327 = vadd.f32 %v1587, %v2326
  %2328 = vmatmul.f32.gmra.mxu0 %v850
  %v2329 = vpop.f32.mrf.mxu0
  %v2330 = vadd.f32 %v1590, %v2329
  %2331 = vmatmul.f32.gmra.mxu0 %v853
  %v2332 = vpop.f32.mrf.mxu0
  %v2333 = vadd.f32 %v1593, %v2332
  %2334 = vmatmul.f32.gmra.mxu0 %v856
  %v2335 = vpop.f32.mrf.mxu0
  %v2336 = vadd.f32 %v1596, %v2335
  %2337 = vmatmul.f32.gmra.mxu0 %v859
  %v2338 = vpop.f32.mrf.mxu0
  %v2339 = vadd.f32 %v1599, %v2338
  %2340 = vmatmul.f32.gmra.mxu0 %v862
  %v2341 = vpop.f32.mrf.mxu0
  %v2342 = vadd.f32 %v1602, %v2341
  %2343 = vmatmul.f32.gmra.mxu0 %v865
  %v2344 = vpop.f32.mrf.mxu0
  %v2345 = vadd.f32 %v1605, %v2344
  %2346 = vmatmul.f32.gmra.mxu0 %v868
  %v2347 = vpop.f32.mrf.mxu0
  %v2348 = vadd.f32 %v1608, %v2347
  %2349 = vmatmul.f32.gmra.mxu0 %v871
  %v2350 = vpop.f32.mrf.mxu0
  %v2351 = vadd.f32 %v1611, %v2350
  %2352 = vmatmul.f32.gmra.mxu0 %v874
  %v2353 = vpop.f32.mrf.mxu0
  %v2354 = vadd.f32 %v1614, %v2353
  %2355 = vmatmul.f32.gmra.mxu0 %v877
  %v2356 = vpop.f32.mrf.mxu0
  %v2357 = vadd.f32 %v1617, %v2356
  %2358 = vmatmul.f32.gmra.mxu0 %v880
  %v2359 = vpop.f32.mrf.mxu0
  %v2360 = vadd.f32 %v1620, %v2359
  %2361 = vmatmul.f32.gmra.mxu0 %v883
  %v2362 = vpop.f32.mrf.mxu0
  %v2363 = vadd.f32 %v1623, %v2362
  %2364 = vmatmul.f32.gmra.mxu0 %v886
  %v2365 = vpop.f32.mrf.mxu0
  %v2366 = vadd.f32 %v1626, %v2365
  %2367 = vmatmul.f32.gmra.mxu0 %v889
  %v2368 = vpop.f32.mrf.mxu0
  %v2369 = vadd.f32 %v1629, %v2368
  %2370 = vmatmul.f32.gmra.mxu0 %v892
  %v2371 = vpop.f32.mrf.mxu0
  %v2372 = vadd.f32 %v1632, %v2371
  %2373 = vmatmul.f32.gmra.mxu0 %v895
  %v2374 = vpop.f32.mrf.mxu0
  %v2375 = vadd.f32 %v1635, %v2374
  %2376 = vmatmul.f32.gmra.mxu0 %v898
  %v2377 = vpop.f32.mrf.mxu0
  %v2378 = vadd.f32 %v1638, %v2377
  %2379 = vmatmul.f32.gmra.mxu0 %v901
  %v2380 = vpop.f32.mrf.mxu0
  %v2381 = vadd.f32 %v1641, %v2380
  %2382 = vmatmul.f32.gmra.mxu0 %v904
  %v2383 = vpop.f32.mrf.mxu0
  %v2384 = vadd.f32 %v1644, %v2383
  %2385 = vmatmul.f32.gmra.mxu0 %v907
  %v2386 = vpop.f32.mrf.mxu0
  %v2387 = vadd.f32 %v1647, %v2386
  %2388 = vmatmul.f32.gmra.mxu0 %v910
  %v2389 = vpop.f32.mrf.mxu0
  %v2390 = vadd.f32 %v1650, %v2389
  %2391 = vmatmul.f32.gmra.mxu0 %v913
  %v2392 = vpop.f32.mrf.mxu0
  %v2393 = vadd.f32 %v1653, %v2392
  %2394 = vmatmul.f32.gmra.mxu0 %v916
  %v2395 = vpop.f32.mrf.mxu0
  %v2396 = vadd.f32 %v1656, %v2395
  %2397 = vmatmul.f32.gmra.mxu0 %v919
  %v2398 = vpop.f32.mrf.mxu0
  %v2399 = vadd.f32 %v1659, %v2398
  %2400 = vmatmul.f32.gmra.mxu0 %v922
  %v2401 = vpop.f32.mrf.mxu0
  %v2402 = vadd.f32 %v1662, %v2401
  %2403 = vmatmul.f32.gmra.mxu0 %v925
  %v2404 = vpop.f32.mrf.mxu0
  %v2405 = vadd.f32 %v1665, %v2404
  %2406 = vmatmul.f32.gmra.mxu0 %v928
  %v2407 = vpop.f32.mrf.mxu0
  %v2408 = vadd.f32 %v1668, %v2407
  %2409 = vmatmul.f32.gmra.mxu0 %v931
  %v2410 = vpop.f32.mrf.mxu0
  %v2411 = vadd.f32 %v1671, %v2410
  %2412 = vmatmul.f32.gmra.mxu0 %v934
  %v2413 = vpop.f32.mrf.mxu0
  %v2414 = vadd.f32 %v1674, %v2413
  %2415 = vmatmul.f32.gmra.mxu0 %v937
  %v2416 = vpop.f32.mrf.mxu0
  %v2417 = vadd.f32 %v1677, %v2416
  %2418 = vmatmul.f32.gmra.mxu0 %v940
  %v2419 = vpop.f32.mrf.mxu0
  %v2420 = vadd.f32 %v1680, %v2419
  %2421 = vmatmul.f32.gmra.mxu0 %v943
  %v2422 = vpop.f32.mrf.mxu0
  %v2423 = vadd.f32 %v1683, %v2422
  %2424 = vmatmul.f32.gmra.mxu0 %v946
  %v2425 = vpop.f32.mrf.mxu0
  %v2426 = vadd.f32 %v1686, %v2425
  %2427 = vmatmul.f32.gmra.mxu0 %v949
  %v2428 = vpop.f32.mrf.mxu0
  %v2429 = vadd.f32 %v1689, %v2428
  %2430 = vmatmul.f32.gmra.mxu0 %v952
  %v2431 = vpop.f32.mrf.mxu0
  %v2432 = vadd.f32 %v1692, %v2431
  %2433 = vmatmul.f32.gmra.mxu0 %v955
  %v2434 = vpop.f32.mrf.mxu0
  %v2435 = vadd.f32 %v1695, %v2434
  %2436 = vmatmul.f32.gmra.mxu0 %v958
  %v2437 = vpop.f32.mrf.mxu0
  %v2438 = vadd.f32 %v1698, %v2437
  %2439 = vmatmul.f32.gmra.mxu0 %v961
  %v2440 = vpop.f32.mrf.mxu0
  %v2441 = vadd.f32 %v1701, %v2440
  %2442 = vmatmul.f32.gmra.mxu0 %v964
  %v2443 = vpop.f32.mrf.mxu0
  %v2444 = vadd.f32 %v1704, %v2443
  %2445 = vmatmul.f32.gmra.mxu0 %v967
  %v2446 = vpop.f32.mrf.mxu0
  %v2447 = vadd.f32 %v1707, %v2446
  %2448 = vmatmul.f32.gmra.mxu0 %v970
  %v2449 = vpop.f32.mrf.mxu0
  %v2450 = vadd.f32 %v1710, %v2449
  %2451 = vmatmul.f32.gmra.mxu0 %v973
  %v2452 = vpop.f32.mrf.mxu0
  %v2453 = vadd.f32 %v1713, %v2452
  %2454 = vmatmul.f32.gmra.mxu0 %v976
  %v2455 = vpop.f32.mrf.mxu0
  %v2456 = vadd.f32 %v1716, %v2455
  %2457 = vmatmul.f32.gmra.mxu0 %v979
  %v2458 = vpop.f32.mrf.mxu0
  %v2459 = vadd.f32 %v1719, %v2458
  %2460 = vmatmul.f32.gmra.mxu0 %v982
  %v2461 = vpop.f32.mrf.mxu0
  %v2462 = vadd.f32 %v1722, %v2461
  %2463 = vmatmul.f32.gmra.mxu0 %v985
  %v2464 = vpop.f32.mrf.mxu0
  %v2465 = vadd.f32 %v1725, %v2464
  %2466 = vmatmul.f32.gmra.mxu0 %v988
  %v2467 = vpop.f32.mrf.mxu0
  %v2468 = vadd.f32 %v1728, %v2467
  %2469 = vmatmul.f32.gmra.mxu0 %v991
  %v2470 = vpop.f32.mrf.mxu0
  %v2471 = vadd.f32 %v1731, %v2470
  %2472 = vmatmul.f32.gmra.mxu0 %v994
  %v2473 = vpop.f32.mrf.mxu0
  %v2474 = vadd.f32 %v1734, %v2473
  %2475 = vmatmul.f32.gmra.mxu0 %v997
  %v2476 = vpop.f32.mrf.mxu0
  %v2477 = vadd.f32 %v1737, %v2476
  %2478 = vmatmul.f32.gmra.mxu0 %v1000
  %v2479 = vpop.f32.mrf.mxu0
  %v2480 = vadd.f32 %v1740, %v2479
  %2481 = vmatmul.f32.gmra.mxu0 %v1003
  %v2482 = vpop.f32.mrf.mxu0
  %v2483 = vadd.f32 %v1743, %v2482
  %2484 = vmatmul.f32.gmra.mxu0 %v1006
  %v2485 = vpop.f32.mrf.mxu0
  %v2486 = vadd.f32 %v1746, %v2485
  %2487 = vmatmul.f32.gmra.mxu0 %v1009
  %v2488 = vpop.f32.mrf.mxu0
  %v2489 = vadd.f32 %v1749, %v2488
  %2490 = vmatmul.f32.gmra.mxu0 %v1012
  %v2491 = vpop.f32.mrf.mxu0
  %v2492 = vadd.f32 %v1752, %v2491
  %2493 = vmatmul.f32.gmra.mxu0 %v1015
  %v2494 = vpop.f32.mrf.mxu0
  %v2495 = vadd.f32 %v1755, %v2494
  %2496 = vmatmul.f32.gmra.mxu0 %v1018
  %v2497 = vpop.f32.mrf.mxu0
  %v2498 = vadd.f32 %v1758, %v2497
  %2499 = vmatmul.f32.gmra.mxu0 %v1021
  %v2500 = vpop.f32.mrf.mxu0
  %v2501 = vadd.f32 %v1761, %v2500
  %2502 = vmatmul.f32.gmra.mxu0 %v1024
  %v2503 = vpop.f32.mrf.mxu0
  %v2504 = vadd.f32 %v1764, %v2503
  %2505 = vmatmul.f32.gmra.mxu0 %v1027
  %v2506 = vpop.f32.mrf.mxu0
  %v2507 = vadd.f32 %v1767, %v2506
  %2508 = vmatmul.f32.gmra.mxu0 %v1030
  %v2509 = vpop.f32.mrf.mxu0
  %v2510 = vadd.f32 %v1770, %v2509
  %2511 = vmatmul.f32.gmra.mxu0 %v1033
  %v2512 = vpop.f32.mrf.mxu0
  %v2513 = vadd.f32 %v1773, %v2512
  %2514 = vmatmul.f32.gmra.mxu0 %v1036
  %v2515 = vpop.f32.mrf.mxu0
  %v2516 = vadd.f32 %v1776, %v2515
  %2517 = vmatmul.f32.gmra.mxu0 %v1039
  %v2518 = vpop.f32.mrf.mxu0
  %v2519 = vadd.f32 %v1779, %v2518
  %2520 = vmatmul.f32.gmra.mxu0 %v1042
  %v2521 = vpop.f32.mrf.mxu0
  %v2522 = vadd.f32 %v1782, %v2521
  %2523 = vmatmul.f32.gmra.mxu0 %v1045
  %v2524 = vpop.f32.mrf.mxu0
  %v2525 = vadd.f32 %v1785, %v2524
  %2526 = vmatmul.f32.gmra.mxu0 %v1048
  %v2527 = vpop.f32.mrf.mxu0
  %v2528 = vadd.f32 %v1788, %v2527
  %2529 = vmatmul.f32.gmra.mxu0 %v1051
  %v2530 = vpop.f32.mrf.mxu0
  %v2531 = vadd.f32 %v1791, %v2530
  %2532 = vmatmul.f32.gmra.mxu0 %v1054
  %v2533 = vpop.f32.mrf.mxu0
  %v2534 = vadd.f32 %v1794, %v2533
  %2535 = vmatmul.f32.gmra.mxu0 %v1057
  %v2536 = vpop.f32.mrf.mxu0
  %v2537 = vadd.f32 %v1797, %v2536
  %2538 = vmatmul.f32.gmra.mxu0 %v1060
  %v2539 = vpop.f32.mrf.mxu0
  %v2540 = vadd.f32 %v1800, %v2539
  %2541 = vmatmul.f32.gmra.mxu0 %v1063
  %v2542 = vpop.f32.mrf.mxu0
  %v2543 = vadd.f32 %v1803, %v2542
  %2544 = vmatmul.f32.gmra.mxu0 %v1066
  %v2545 = vpop.f32.mrf.mxu0
  %v2546 = vadd.f32 %v1806, %v2545
  %2547 = vmatmul.f32.gmra.mxu0 %v1069
  %v2548 = vpop.f32.mrf.mxu0
  %v2549 = vadd.f32 %v1809, %v2548
  %2550 = vmatmul.f32.gmra.mxu0 %v1072
  %v2551 = vpop.f32.mrf.mxu0
  %v2552 = vadd.f32 %v1812, %v2551
  %2553 = vmatmul.f32.gmra.mxu0 %v1075
  %v2554 = vpop.f32.mrf.mxu0
  %v2555 = vadd.f32 %v1815, %v2554
  %2556 = vmatmul.f32.gmra.mxu0 %v1078
  %v2557 = vpop.f32.mrf.mxu0
  %v2558 = vadd.f32 %v1818, %v2557
  %2559 = vmatmul.f32.gmra.mxu0 %v1081
  %v2560 = vpop.f32.mrf.mxu0
  %v2561 = vadd.f32 %v1821, %v2560
  %2562 = vmatmul.f32.gmra.mxu0 %v1084
  %v2563 = vpop.f32.mrf.mxu0
  %v2564 = vadd.f32 %v1824, %v2563
  %2565 = vmatmul.f32.gmra.mxu0 %v1087
  %v2566 = vpop.f32.mrf.mxu0
  %v2567 = vadd.f32 %v1827, %v2566
  %2568 = vmatmul.f32.gmra.mxu0 %v1090
  %v2569 = vpop.f32.mrf.mxu0
  %v2570 = vadd.f32 %v1830, %v2569
  %2571 = vmatmul.f32.gmra.mxu0 %v1093
  %v2572 = vpop.f32.mrf.mxu0
  %v2573 = vadd.f32 %v1833, %v2572
  %2574 = vmatmul.f32.gmra.mxu0 %v1096
  %v2575 = vpop.f32.mrf.mxu0
  %v2576 = vadd.f32 %v1836, %v2575
  %2577 = vmatmul.f32.gmra.mxu0 %v1099
  %v2578 = vpop.f32.mrf.mxu0
  %v2579 = vadd.f32 %v1839, %v2578
  %2580 = vmatmul.f32.gmra.mxu0 %v1102
  %v2581 = vpop.f32.mrf.mxu0
  %v2582 = vadd.f32 %v1842, %v2581
  %2583 = vmatmul.f32.gmra.mxu0 %v1105
  %v2584 = vpop.f32.mrf.mxu0
  %v2585 = vadd.f32 %v1845, %v2584
  %2586 = vmatmul.f32.gmra.mxu0 %v1108
  %v2587 = vpop.f32.mrf.mxu0
  %v2588 = vadd.f32 %v1848, %v2587
  %2589 = vmatmul.f32.gmra.mxu0 %v1111
  %v2590 = vpop.f32.mrf.mxu0
  %v2591 = vadd.f32 %v1851, %v2590
  %2592 = vmatmul.f32.gmra.mxu0 %v1114
  %v2593 = vpop.f32.mrf.mxu0
  %v2594 = vadd.f32 %v1854, %v2593
  %2595 = vmatmul.f32.gmra.mxu0 %v1117
  %v2596 = vpop.f32.mrf.mxu0
  %v2597 = vadd.f32 %v1857, %v2596
  %2598 = vmatmul.f32.gmra.mxu0 %v1120
  %v2599 = vpop.f32.mrf.mxu0
  %v2600 = vadd.f32 %v1860, %v2599
  %2601 = vmatmul.f32.gmra.mxu0 %v1123
  %v2602 = vpop.f32.mrf.mxu0
  %v2603 = vadd.f32 %v1863, %v2602
  %2604 = vmatmul.f32.gmra.mxu0 %v1126
  %v2605 = vpop.f32.mrf.mxu0
  %v2606 = vadd.f32 %v1866, %v2605
  %2607 = vmatmul.f32.gmra.mxu0 %v1129
  %v2608 = vpop.f32.mrf.mxu0
  %v2609 = vadd.f32 %v1869, %v2608
  %2610 = vmatmul.f32.gmra.mxu0 %v1132
  %v2611 = vpop.f32.mrf.mxu0
  %v2612 = vadd.f32 %v1872, %v2611
  %2613 = vmatmul.f32.gmra.mxu0 %v1135
  %v2614 = vpop.f32.mrf.mxu0
  %v2615 = vadd.f32 %v1875, %v2614
  %2616 = vmatmul.f32.gmra.mxu0 %v1138
  %v2617 = vpop.f32.mrf.mxu0
  %v2618 = vadd.f32 %v1878, %v2617
  %2619 = vmatmul.f32.gmra.mxu0 %v1141
  %v2620 = vpop.f32.mrf.mxu0
  %v2621 = vadd.f32 %v1881, %v2620
  %2622 = vmatmul.f32.gmra.mxu0 %v1144
  %v2623 = vpop.f32.mrf.mxu0
  %v2624 = vadd.f32 %v1884, %v2623
  %2625 = vmatmul.f32.gmra.mxu0 %v1147
  %v2626 = vpop.f32.mrf.mxu0
  %v2627 = vadd.f32 %v1887, %v2626
  %2628 = vmatmul.f32.gmra.mxu0 %v1150
  %v2629 = vpop.f32.mrf.mxu0
  %v2630 = vadd.f32 %v1890, %v2629
  %2631 = vmatmul.f32.gmra.mxu0 %v1153
  %v2632 = vpop.f32.mrf.mxu0
  %v2633 = vadd.f32 %v1893, %v2632
  %2634 = vmatmul.f32.gmra.mxu0 %v1156
  %v2635 = vpop.f32.mrf.mxu0
  %v2636 = vadd.f32 %v1896, %v2635
  %2637 = vmatmul.f32.gmra.mxu0 %v1159
  %v2638 = vpop.f32.mrf.mxu0
  %v2639 = vadd.f32 %v1899, %v2638
  %2640 = vmatmul.f32.gmra.mxu0 %v1162
  %v2641 = vpop.f32.mrf.mxu0
  %v2642 = vadd.f32 %v1902, %v2641
  %2643 = vmatmul.f32.gmra.mxu0 %v1165
  %v2644 = vpop.f32.mrf.mxu0
  %v2645 = vadd.f32 %v1905, %v2644
  %2646 = vmatmul.f32.gmra.mxu0 %v1168
  %v2647 = vpop.f32.mrf.mxu0
  %v2648 = vadd.f32 %v1908, %v2647
  %2649 = vmatmul.f32.gmra.mxu0 %v1171
  %v2650 = vpop.f32.mrf.mxu0
  %v2651 = vadd.f32 %v1911, %v2650
  %2652 = vmatmul.f32.gmra.mxu0 %v1174
  %v2653 = vpop.f32.mrf.mxu0
  %v2654 = vadd.f32 %v1914, %v2653
  %2655 = vmatmul.f32.gmra.mxu0 %v1177
  %v2656 = vpop.f32.mrf.mxu0
  %v2657 = vadd.f32 %v1917, %v2656
  %2658 = vmatmul.f32.gmra.mxu0 %v1180
  %v2659 = vpop.f32.mrf.mxu0
  %v2660 = vadd.f32 %v1920, %v2659
  %2661 = vmatmul.f32.gmra.mxu0 %v1183
  %v2662 = vpop.f32.mrf.mxu0
  %v2663 = vadd.f32 %v1923, %v2662
  %2664 = vmatmul.f32.gmra.mxu0 %v1186
  %v2665 = vpop.f32.mrf.mxu0
  %v2666 = vadd.f32 %v1926, %v2665
  %2667 = vmatmul.f32.gmra.mxu0 %v1189
  %v2668 = vpop.f32.mrf.mxu0
  %v2669 = vadd.f32 %v1929, %v2668
  %2670 = vmatmul.f32.gmra.mxu0 %v1192
  %v2671 = vpop.f32.mrf.mxu0
  %v2672 = vadd.f32 %v1932, %v2671
  %2673 = vmatmul.f32.gmra.mxu0 %v1195
  %v2674 = vpop.f32.mrf.mxu0
  %v2675 = vadd.f32 %v1935, %v2674
  %2676 = vmatmul.f32.gmra.mxu0 %v1198
  %v2677 = vpop.f32.mrf.mxu0
  %v2678 = vadd.f32 %v1938, %v2677
  %2679 = vmatmul.f32.gmra.mxu0 %v1201
  %v2680 = vpop.f32.mrf.mxu0
  %v2681 = vadd.f32 %v1941, %v2680
  %2682 = vmatmul.f32.gmra.mxu0 %v1204
  %v2683 = vpop.f32.mrf.mxu0
  %v2684 = vadd.f32 %v1944, %v2683
  %2685 = vmatmul.f32.gmra.mxu0 %v1207
  %v2686 = vpop.f32.mrf.mxu0
  %v2687 = vadd.f32 %v1947, %v2686
  %2688 = vmatmul.f32.gmra.mxu0 %v1210
  %v2689 = vpop.f32.mrf.mxu0
  %v2690 = vadd.f32 %v1950, %v2689
  %2691 = vmatmul.f32.gmra.mxu0 %v1213
  %v2692 = vpop.f32.mrf.mxu0
  %v2693 = vadd.f32 %v1953, %v2692
  %2694 = vmatmul.f32.gmra.mxu0 %v1216
  %v2695 = vpop.f32.mrf.mxu0
  %v2696 = vadd.f32 %v1956, %v2695
  %2697 = vmatmul.f32.gmra.mxu0 %v1219
  %v2698 = vpop.f32.mrf.mxu0
  %v2699 = vadd.f32 %v1959, %v2698
  %2700 = vmatmul.f32.gmra.mxu0 %v1222
  %v2701 = vpop.f32.mrf.mxu0
  %v2702 = vadd.f32 %v1962, %v2701
  %2703 = vmatmul.f32.gmra.mxu0 %v1225
  %v2704 = vpop.f32.mrf.mxu0
  %v2705 = vadd.f32 %v1965, %v2704
  %2706 = vmatmul.f32.gmra.mxu0 %v1228
  %v2707 = vpop.f32.mrf.mxu0
  %v2708 = vadd.f32 %v1968, %v2707
  %2709 = vmatmul.f32.gmra.mxu0 %v1231
  %v2710 = vpop.f32.mrf.mxu0
  %v2711 = vadd.f32 %v1971, %v2710
  %2712 = vmatmul.f32.gmra.mxu0 %v1234
  %v2713 = vpop.f32.mrf.mxu0
  %v2714 = vadd.f32 %v1974, %v2713
  %2715 = vmatmul.f32.gmra.mxu0 %v1237
  %v2716 = vpop.f32.mrf.mxu0
  %v2717 = vadd.f32 %v1977, %v2716
  %2718 = vmatmul.f32.gmra.mxu0 %v1240
  %v2719 = vpop.f32.mrf.mxu0
  %v2720 = vadd.f32 %v1980, %v2719
  %2721 = vdwg.mxu0
  %vm2722 = vcmask 31744
  %2723 = vst.msk [vmem:[%s3] sm:$0xff] %vm2722, %v2000
  %2724 = vst.msk [vmem:[%s3 + $0x8] sm:$0xff] %vm2722, %v2003
  %2725 = vst.msk [vmem:[%s3 + $0x10] sm:$0xff] %vm2722, %v2006
  %2726 = vst.msk [vmem:[%s3 + $0x18] sm:$0xff] %vm2722, %v2009
  %2727 = vst.msk [vmem:[%s3 + $0x20] sm:$0xff] %vm2722, %v2012
  %2728 = vst.msk [vmem:[%s3 + $0x28] sm:$0xff] %vm2722, %v2015
  %2729 = vst.msk [vmem:[%s3 + $0x30] sm:$0xff] %vm2722, %v2018
  %2730 = vst.msk [vmem:[%s3 + $0x38] sm:$0xff] %vm2722, %v2021
  %2731 = vst.msk [vmem:[%s3 + $0x40] sm:$0xff] %vm2722, %v2024
  %2732 = vst.msk [vmem:[%s3 + $0x48] sm:$0xff] %vm2722, %v2027
  %2733 = vst.msk [vmem:[%s3 + $0x50] sm:$0xff] %vm2722, %v2030
  %2734 = vst.msk [vmem:[%s3 + $0x58] sm:$0xff] %vm2722, %v2033
  %2735 = vst.msk [vmem:[%s3 + $0x60] sm:$0xff] %vm2722, %v2036
  %2736 = vst.msk [vmem:[%s3 + $0x68] sm:$0xff] %vm2722, %v2039
  %2737 = vst.msk [vmem:[%s3 + $0x70] sm:$0xff] %vm2722, %v2042
  %2738 = vst.msk [vmem:[%s3 + $0x78] sm:$0xff] %vm2722, %v2045
  %2739 = vst.msk [vmem:[%s3 + $0x80] sm:$0xff] %vm2722, %v2048
  %2740 = vst.msk [vmem:[%s3 + $0x88] sm:$0xff] %vm2722, %v2051
  %2741 = vst.msk [vmem:[%s3 + $0x90] sm:$0xff] %vm2722, %v2054
  %2742 = vst.msk [vmem:[%s3 + $0x98] sm:$0xff] %vm2722, %v2057
  %2743 = vst.msk [vmem:[%s3 + $0xa0] sm:$0xff] %vm2722, %v2060
  %2744 = vst.msk [vmem:[%s3 + $0xa8] sm:$0xff] %vm2722, %v2063
  %2745 = vst.msk [vmem:[%s3 + $0xb0] sm:$0xff] %vm2722, %v2066
  %2746 = vst.msk [vmem:[%s3 + $0xb8] sm:$0xff] %vm2722, %v2069
  %2747 = vst.msk [vmem:[%s3 + $0xc0] sm:$0xff] %vm2722, %v2072
  %2748 = vst.msk [vmem:[%s3 + $0xc8] sm:$0xff] %vm2722, %v2075
  %2749 = vst.msk [vmem:[%s3 + $0xd0] sm:$0xff] %vm2722, %v2078
  %2750 = vst.msk [vmem:[%s3 + $0xd8] sm:$0xff] %vm2722, %v2081
  %2751 = vst.msk [vmem:[%s3 + $0xe0] sm:$0xff] %vm2722, %v2084
  %2752 = vst.msk [vmem:[%s3 + $0xe8] sm:$0xff] %vm2722, %v2087
  %2753 = vst.msk [vmem:[%s3 + $0xf0] sm:$0xff] %vm2722, %v2090
  %2754 = vst.msk [vmem:[%s3 + $0xf8] sm:$0xff] %vm2722, %v2093
  %2755 = vst.msk [vmem:[%s3 + $0x100] sm:$0xff] %vm2722, %v2096
  %2756 = vst.msk [vmem:[%s3 + $0x108] sm:$0xff] %vm2722, %v2099
  %2757 = vst.msk [vmem:[%s3 + $0x110] sm:$0xff] %vm2722, %v2102
  %2758 = vst.msk [vmem:[%s3 + $0x118] sm:$0xff] %vm2722, %v2105
  %2759 = vst.msk [vmem:[%s3 + $0x120] sm:$0xff] %vm2722, %v2108
  %2760 = vst.msk [vmem:[%s3 + $0x128] sm:$0xff] %vm2722, %v2111
  %2761 = vst.msk [vmem:[%s3 + $0x130] sm:$0xff] %vm2722, %v2114
  %2762 = vst.msk [vmem:[%s3 + $0x138] sm:$0xff] %vm2722, %v2117
  %2763 = vst.msk [vmem:[%s3 + $0x140] sm:$0xff] %vm2722, %v2120
  %2764 = vst.msk [vmem:[%s3 + $0x148] sm:$0xff] %vm2722, %v2123
  %2765 = vst.msk [vmem:[%s3 + $0x150] sm:$0xff] %vm2722, %v2126
  %2766 = vst.msk [vmem:[%s3 + $0x158] sm:$0xff] %vm2722, %v2129
  %2767 = vst.msk [vmem:[%s3 + $0x160] sm:$0xff] %vm2722, %v2132
  %2768 = vst.msk [vmem:[%s3 + $0x168] sm:$0xff] %vm2722, %v2135
  %2769 = vst.msk [vmem:[%s3 + $0x170] sm:$0xff] %vm2722, %v2138
  %2770 = vst.msk [vmem:[%s3 + $0x178] sm:$0xff] %vm2722, %v2141
  %2771 = vst.msk [vmem:[%s3 + $0x180] sm:$0xff] %vm2722, %v2144
  %2772 = vst.msk [vmem:[%s3 + $0x188] sm:$0xff] %vm2722, %v2147
  %2773 = vst.msk [vmem:[%s3 + $0x190] sm:$0xff] %vm2722, %v2150
  %2774 = vst.msk [vmem:[%s3 + $0x198] sm:$0xff] %vm2722, %v2153
  %2775 = vst.msk [vmem:[%s3 + $0x1a0] sm:$0xff] %vm2722, %v2156
  %2776 = vst.msk [vmem:[%s3 + $0x1a8] sm:$0xff] %vm2722, %v2159
  %2777 = vst.msk [vmem:[%s3 + $0x1b0] sm:$0xff] %vm2722, %v2162
  %2778 = vst.msk [vmem:[%s3 + $0x1b8] sm:$0xff] %vm2722, %v2165
  %2779 = vst.msk [vmem:[%s3 + $0x1c0] sm:$0xff] %vm2722, %v2168
  %2780 = vst.msk [vmem:[%s3 + $0x1c8] sm:$0xff] %vm2722, %v2171
  %2781 = vst.msk [vmem:[%s3 + $0x1d0] sm:$0xff] %vm2722, %v2174
  %2782 = vst.msk [vmem:[%s3 + $0x1d8] sm:$0xff] %vm2722, %v2177
  %2783 = vst.msk [vmem:[%s3 + $0x1e0] sm:$0xff] %vm2722, %v2180
  %2784 = vst.msk [vmem:[%s3 + $0x1e8] sm:$0xff] %vm2722, %v2183
  %2785 = vst.msk [vmem:[%s3 + $0x1f0] sm:$0xff] %vm2722, %v2186
  %2786 = vst.msk [vmem:[%s3 + $0x1f8] sm:$0xff] %vm2722, %v2189
  %2787 = vst.msk [vmem:[%s3 + $0x200] sm:$0xff] %vm2722, %v2192
  %2788 = vst.msk [vmem:[%s3 + $0x208] sm:$0xff] %vm2722, %v2195
  %2789 = vst.msk [vmem:[%s3 + $0x210] sm:$0xff] %vm2722, %v2198
  %2790 = vst.msk [vmem:[%s3 + $0x218] sm:$0xff] %vm2722, %v2201
  %2791 = vst.msk [vmem:[%s3 + $0x220] sm:$0xff] %vm2722, %v2204
  %2792 = vst.msk [vmem:[%s3 + $0x228] sm:$0xff] %vm2722, %v2207
  %2793 = vst.msk [vmem:[%s3 + $0x230] sm:$0xff] %vm2722, %v2210
  %2794 = vst.msk [vmem:[%s3 + $0x238] sm:$0xff] %vm2722, %v2213
  %2795 = vst.msk [vmem:[%s3 + $0x240] sm:$0xff] %vm2722, %v2216
  %2796 = vst.msk [vmem:[%s3 + $0x248] sm:$0xff] %vm2722, %v2219
  %2797 = vst.msk [vmem:[%s3 + $0x250] sm:$0xff] %vm2722, %v2222
  %2798 = vst.msk [vmem:[%s3 + $0x258] sm:$0xff] %vm2722, %v2225
  %2799 = vst.msk [vmem:[%s3 + $0x260] sm:$0xff] %vm2722, %v2228
  %2800 = vst.msk [vmem:[%s3 + $0x268] sm:$0xff] %vm2722, %v2231
  %2801 = vst.msk [vmem:[%s3 + $0x270] sm:$0xff] %vm2722, %v2234
  %2802 = vst.msk [vmem:[%s3 + $0x278] sm:$0xff] %vm2722, %v2237
  %2803 = vst.msk [vmem:[%s3 + $0x280] sm:$0xff] %vm2722, %v2240
  %2804 = vst.msk [vmem:[%s3 + $0x288] sm:$0xff] %vm2722, %v2243
  %2805 = vst.msk [vmem:[%s3 + $0x290] sm:$0xff] %vm2722, %v2246
  %2806 = vst.msk [vmem:[%s3 + $0x298] sm:$0xff] %vm2722, %v2249
  %2807 = vst.msk [vmem:[%s3 + $0x2a0] sm:$0xff] %vm2722, %v2252
  %2808 = vst.msk [vmem:[%s3 + $0x2a8] sm:$0xff] %vm2722, %v2255
  %2809 = vst.msk [vmem:[%s3 + $0x2b0] sm:$0xff] %vm2722, %v2258
  %2810 = vst.msk [vmem:[%s3 + $0x2b8] sm:$0xff] %vm2722, %v2261
  %2811 = vst.msk [vmem:[%s3 + $0x2c0] sm:$0xff] %vm2722, %v2264
  %2812 = vst.msk [vmem:[%s3 + $0x2c8] sm:$0xff] %vm2722, %v2267
  %2813 = vst.msk [vmem:[%s3 + $0x2d0] sm:$0xff] %vm2722, %v2270
  %2814 = vst.msk [vmem:[%s3 + $0x2d8] sm:$0xff] %vm2722, %v2273
  %2815 = vst.msk [vmem:[%s3 + $0x2e0] sm:$0xff] %vm2722, %v2276
  %2816 = vst.msk [vmem:[%s3 + $0x2e8] sm:$0xff] %vm2722, %v2279
  %2817 = vst.msk [vmem:[%s3 + $0x2f0] sm:$0xff] %vm2722, %v2282
  %2818 = vst.msk [vmem:[%s3 + $0x2f8] sm:$0xff] %vm2722, %v2285
  %2819 = vst.msk [vmem:[%s3 + $0x300] sm:$0xff] %vm2722, %v2288
  %2820 = vst.msk [vmem:[%s3 + $0x308] sm:$0xff] %vm2722, %v2291
  %2821 = vst.msk [vmem:[%s3 + $0x310] sm:$0xff] %vm2722, %v2294
  %2822 = vst.msk [vmem:[%s3 + $0x318] sm:$0xff] %vm2722, %v2297
  %2823 = vst.msk [vmem:[%s3 + $0x320] sm:$0xff] %vm2722, %v2300
  %2824 = vst.msk [vmem:[%s3 + $0x328] sm:$0xff] %vm2722, %v2303
  %2825 = vst.msk [vmem:[%s3 + $0x330] sm:$0xff] %vm2722, %v2306
  %2826 = vst.msk [vmem:[%s3 + $0x338] sm:$0xff] %vm2722, %v2309
  %2827 = vst.msk [vmem:[%s3 + $0x340] sm:$0xff] %vm2722, %v2312
  %2828 = vst.msk [vmem:[%s3 + $0x348] sm:$0xff] %vm2722, %v2315
  %2829 = vst.msk [vmem:[%s3 + $0x350] sm:$0xff] %vm2722, %v2318
  %2830 = vst.msk [vmem:[%s3 + $0x358] sm:$0xff] %vm2722, %v2321
  %2831 = vst.msk [vmem:[%s3 + $0x360] sm:$0xff] %vm2722, %v2324
  %2832 = vst.msk [vmem:[%s3 + $0x368] sm:$0xff] %vm2722, %v2327
  %2833 = vst.msk [vmem:[%s3 + $0x370] sm:$0xff] %vm2722, %v2330
  %2834 = vst.msk [vmem:[%s3 + $0x378] sm:$0xff] %vm2722, %v2333
  %2835 = vst.msk [vmem:[%s3 + $0x380] sm:$0xff] %vm2722, %v2336
  %2836 = vst.msk [vmem:[%s3 + $0x388] sm:$0xff] %vm2722, %v2339
  %2837 = vst.msk [vmem:[%s3 + $0x390] sm:$0xff] %vm2722, %v2342
  %2838 = vst.msk [vmem:[%s3 + $0x398] sm:$0xff] %vm2722, %v2345
  %2839 = vst.msk [vmem:[%s3 + $0x3a0] sm:$0xff] %vm2722, %v2348
  %2840 = vst.msk [vmem:[%s3 + $0x3a8] sm:$0xff] %vm2722, %v2351
  %2841 = vst.msk [vmem:[%s3 + $0x3b0] sm:$0xff] %vm2722, %v2354
  %2842 = vst.msk [vmem:[%s3 + $0x3b8] sm:$0xff] %vm2722, %v2357
  %2843 = vst.msk [vmem:[%s3 + $0x3c0] sm:$0xff] %vm2722, %v2360
  %2844 = vst.msk [vmem:[%s3 + $0x3c8] sm:$0xff] %vm2722, %v2363
  %2845 = vst.msk [vmem:[%s3 + $0x3d0] sm:$0xff] %vm2722, %v2366
  %2846 = vst.msk [vmem:[%s3 + $0x3d8] sm:$0xff] %vm2722, %v2369
  %2847 = vst.msk [vmem:[%s3 + $0x3e0] sm:$0xff] %vm2722, %v2372
  %2848 = vst.msk [vmem:[%s3 + $0x3e8] sm:$0xff] %vm2722, %v2375
  %2849 = vst.msk [vmem:[%s3 + $0x3f0] sm:$0xff] %vm2722, %v2378
  %2850 = vst.msk [vmem:[%s3 + $0x3f8] sm:$0xff] %vm2722, %v2381
  %2851 = vst.msk [vmem:[%s3 + $0x400] sm:$0xff] %vm2722, %v2384
  %2852 = vst.msk [vmem:[%s3 + $0x408] sm:$0xff] %vm2722, %v2387
  %2853 = vst.msk [vmem:[%s3 + $0x410] sm:$0xff] %vm2722, %v2390
  %2854 = vst.msk [vmem:[%s3 + $0x418] sm:$0xff] %vm2722, %v2393
  %2855 = vst.msk [vmem:[%s3 + $0x420] sm:$0xff] %vm2722, %v2396
  %2856 = vst.msk [vmem:[%s3 + $0x428] sm:$0xff] %vm2722, %v2399
  %2857 = vst.msk [vmem:[%s3 + $0x430] sm:$0xff] %vm2722, %v2402
  %2858 = vst.msk [vmem:[%s3 + $0x438] sm:$0xff] %vm2722, %v2405
  %2859 = vst.msk [vmem:[%s3 + $0x440] sm:$0xff] %vm2722, %v2408
  %2860 = vst.msk [vmem:[%s3 + $0x448] sm:$0xff] %vm2722, %v2411
  %2861 = vst.msk [vmem:[%s3 + $0x450] sm:$0xff] %vm2722, %v2414
  %2862 = vst.msk [vmem:[%s3 + $0x458] sm:$0xff] %vm2722, %v2417
  %2863 = vst.msk [vmem:[%s3 + $0x460] sm:$0xff] %vm2722, %v2420
  %2864 = vst.msk [vmem:[%s3 + $0x468] sm:$0xff] %vm2722, %v2423
  %2865 = vst.msk [vmem:[%s3 + $0x470] sm:$0xff] %vm2722, %v2426
  %2866 = vst.msk [vmem:[%s3 + $0x478] sm:$0xff] %vm2722, %v2429
  %2867 = vst.msk [vmem:[%s3 + $0x480] sm:$0xff] %vm2722, %v2432
  %2868 = vst.msk [vmem:[%s3 + $0x488] sm:$0xff] %vm2722, %v2435
  %2869 = vst.msk [vmem:[%s3 + $0x490] sm:$0xff] %vm2722, %v2438
  %2870 = vst.msk [vmem:[%s3 + $0x498] sm:$0xff] %vm2722, %v2441
  %2871 = vst.msk [vmem:[%s3 + $0x4a0] sm:$0xff] %vm2722, %v2444
  %2872 = vst.msk [vmem:[%s3 + $0x4a8] sm:$0xff] %vm2722, %v2447
  %2873 = vst.msk [vmem:[%s3 + $0x4b0] sm:$0xff] %vm2722, %v2450
  %2874 = vst.msk [vmem:[%s3 + $0x4b8] sm:$0xff] %vm2722, %v2453
  %2875 = vst.msk [vmem:[%s3 + $0x4c0] sm:$0xff] %vm2722, %v2456
  %2876 = vst.msk [vmem:[%s3 + $0x4c8] sm:$0xff] %vm2722, %v2459
  %2877 = vst.msk [vmem:[%s3 + $0x4d0] sm:$0xff] %vm2722, %v2462
  %2878 = vst.msk [vmem:[%s3 + $0x4d8] sm:$0xff] %vm2722, %v2465
  %2879 = vst.msk [vmem:[%s3 + $0x4e0] sm:$0xff] %vm2722, %v2468
  %2880 = vst.msk [vmem:[%s3 + $0x4e8] sm:$0xff] %vm2722, %v2471
  %2881 = vst.msk [vmem:[%s3 + $0x4f0] sm:$0xff] %vm2722, %v2474
  %2882 = vst.msk [vmem:[%s3 + $0x4f8] sm:$0xff] %vm2722, %v2477
  %2883 = vst.msk [vmem:[%s3 + $0x500] sm:$0xff] %vm2722, %v2480
  %2884 = vst.msk [vmem:[%s3 + $0x508] sm:$0xff] %vm2722, %v2483
  %2885 = vst.msk [vmem:[%s3 + $0x510] sm:$0xff] %vm2722, %v2486
  %2886 = vst.msk [vmem:[%s3 + $0x518] sm:$0xff] %vm2722, %v2489
  %2887 = vst.msk [vmem:[%s3 + $0x520] sm:$0xff] %vm2722, %v2492
  %2888 = vst.msk [vmem:[%s3 + $0x528] sm:$0xff] %vm2722, %v2495
  %2889 = vst.msk [vmem:[%s3 + $0x530] sm:$0xff] %vm2722, %v2498
  %2890 = vst.msk [vmem:[%s3 + $0x538] sm:$0xff] %vm2722, %v2501
  %2891 = vst.msk [vmem:[%s3 + $0x540] sm:$0xff] %vm2722, %v2504
  %2892 = vst.msk [vmem:[%s3 + $0x548] sm:$0xff] %vm2722, %v2507
  %2893 = vst.msk [vmem:[%s3 + $0x550] sm:$0xff] %vm2722, %v2510
  %2894 = vst.msk [vmem:[%s3 + $0x558] sm:$0xff] %vm2722, %v2513
  %2895 = vst.msk [vmem:[%s3 + $0x560] sm:$0xff] %vm2722, %v2516
  %2896 = vst.msk [vmem:[%s3 + $0x568] sm:$0xff] %vm2722, %v2519
  %2897 = vst.msk [vmem:[%s3 + $0x570] sm:$0xff] %vm2722, %v2522
  %2898 = vst.msk [vmem:[%s3 + $0x578] sm:$0xff] %vm2722, %v2525
  %2899 = vst.msk [vmem:[%s3 + $0x580] sm:$0xff] %vm2722, %v2528
  %2900 = vst.msk [vmem:[%s3 + $0x588] sm:$0xff] %vm2722, %v2531
  %2901 = vst.msk [vmem:[%s3 + $0x590] sm:$0xff] %vm2722, %v2534
  %2902 = vst.msk [vmem:[%s3 + $0x598] sm:$0xff] %vm2722, %v2537
  %2903 = vst.msk [vmem:[%s3 + $0x5a0] sm:$0xff] %vm2722, %v2540
  %2904 = vst.msk [vmem:[%s3 + $0x5a8] sm:$0xff] %vm2722, %v2543
  %2905 = vst.msk [vmem:[%s3 + $0x5b0] sm:$0xff] %vm2722, %v2546
  %2906 = vst.msk [vmem:[%s3 + $0x5b8] sm:$0xff] %vm2722, %v2549
  %2907 = vst.msk [vmem:[%s3 + $0x5c0] sm:$0xff] %vm2722, %v2552
  %2908 = vst.msk [vmem:[%s3 + $0x5c8] sm:$0xff] %vm2722, %v2555
  %2909 = vst.msk [vmem:[%s3 + $0x5d0] sm:$0xff] %vm2722, %v2558
  %2910 = vst.msk [vmem:[%s3 + $0x5d8] sm:$0xff] %vm2722, %v2561
  %2911 = vst.msk [vmem:[%s3 + $0x5e0] sm:$0xff] %vm2722, %v2564
  %2912 = vst.msk [vmem:[%s3 + $0x5e8] sm:$0xff] %vm2722, %v2567
  %2913 = vst.msk [vmem:[%s3 + $0x5f0] sm:$0xff] %vm2722, %v2570
  %2914 = vst.msk [vmem:[%s3 + $0x5f8] sm:$0xff] %vm2722, %v2573
  %2915 = vst.msk [vmem:[%s3 + $0x600] sm:$0xff] %vm2722, %v2576
  %2916 = vst.msk [vmem:[%s3 + $0x608] sm:$0xff] %vm2722, %v2579
  %2917 = vst.msk [vmem:[%s3 + $0x610] sm:$0xff] %vm2722, %v2582
  %2918 = vst.msk [vmem:[%s3 + $0x618] sm:$0xff] %vm2722, %v2585
  %2919 = vst.msk [vmem:[%s3 + $0x620] sm:$0xff] %vm2722, %v2588
  %2920 = vst.msk [vmem:[%s3 + $0x628] sm:$0xff] %vm2722, %v2591
  %2921 = vst.msk [vmem:[%s3 + $0x630] sm:$0xff] %vm2722, %v2594
  %2922 = vst.msk [vmem:[%s3 + $0x638] sm:$0xff] %vm2722, %v2597
  %2923 = vst.msk [vmem:[%s3 + $0x640] sm:$0xff] %vm2722, %v2600
  %2924 = vst.msk [vmem:[%s3 + $0x648] sm:$0xff] %vm2722, %v2603
  %2925 = vst.msk [vmem:[%s3 + $0x650] sm:$0xff] %vm2722, %v2606
  %2926 = vst.msk [vmem:[%s3 + $0x658] sm:$0xff] %vm2722, %v2609
  %2927 = vst.msk [vmem:[%s3 + $0x660] sm:$0xff] %vm2722, %v2612
  %2928 = vst.msk [vmem:[%s3 + $0x668] sm:$0xff] %vm2722, %v2615
  %2929 = vst.msk [vmem:[%s3 + $0x670] sm:$0xff] %vm2722, %v2618
  %2930 = vst.msk [vmem:[%s3 + $0x678] sm:$0xff] %vm2722, %v2621
  %2931 = vst.msk [vmem:[%s3 + $0x680] sm:$0xff] %vm2722, %v2624
  %2932 = vst.msk [vmem:[%s3 + $0x688] sm:$0xff] %vm2722, %v2627
  %2933 = vst.msk [vmem:[%s3 + $0x690] sm:$0xff] %vm2722, %v2630
  %2934 = vst.msk [vmem:[%s3 + $0x698] sm:$0xff] %vm2722, %v2633
  %2935 = vst.msk [vmem:[%s3 + $0x6a0] sm:$0xff] %vm2722, %v2636
  %2936 = vst.msk [vmem:[%s3 + $0x6a8] sm:$0xff] %vm2722, %v2639
  %2937 = vst.msk [vmem:[%s3 + $0x6b0] sm:$0xff] %vm2722, %v2642
  %2938 = vst.msk [vmem:[%s3 + $0x6b8] sm:$0xff] %vm2722, %v2645
  %2939 = vst.msk [vmem:[%s3 + $0x6c0] sm:$0xff] %vm2722, %v2648
  %2940 = vst.msk [vmem:[%s3 + $0x6c8] sm:$0xff] %vm2722, %v2651
  %2941 = vst.msk [vmem:[%s3 + $0x6d0] sm:$0xff] %vm2722, %v2654
  %2942 = vst.msk [vmem:[%s3 + $0x6d8] sm:$0xff] %vm2722, %v2657
  %2943 = vst.msk [vmem:[%s3 + $0x6e0] sm:$0xff] %vm2722, %v2660
  %2944 = vst.msk [vmem:[%s3 + $0x6e8] sm:$0xff] %vm2722, %v2663
  %2945 = vst.msk [vmem:[%s3 + $0x6f0] sm:$0xff] %vm2722, %v2666
  %2946 = vst.msk [vmem:[%s3 + $0x6f8] sm:$0xff] %vm2722, %v2669
  %2947 = vst.msk [vmem:[%s3 + $0x700] sm:$0xff] %vm2722, %v2672
  %2948 = vst.msk [vmem:[%s3 + $0x708] sm:$0xff] %vm2722, %v2675
  %2949 = vst.msk [vmem:[%s3 + $0x710] sm:$0xff] %vm2722, %v2678
  %2950 = vst.msk [vmem:[%s3 + $0x718] sm:$0xff] %vm2722, %v2681
  %2951 = vst.msk [vmem:[%s3 + $0x720] sm:$0xff] %vm2722, %v2684
  %2952 = vst.msk [vmem:[%s3 + $0x728] sm:$0xff] %vm2722, %v2687
  %2953 = vst.msk [vmem:[%s3 + $0x730] sm:$0xff] %vm2722, %v2690
  %2954 = vst.msk [vmem:[%s3 + $0x738] sm:$0xff] %vm2722, %v2693
  %2955 = vst.msk [vmem:[%s3 + $0x740] sm:$0xff] %vm2722, %v2696
  %2956 = vst.msk [vmem:[%s3 + $0x748] sm:$0xff] %vm2722, %v2699
  %2957 = vst.msk [vmem:[%s3 + $0x750] sm:$0xff] %vm2722, %v2702
  %2958 = vst.msk [vmem:[%s3 + $0x758] sm:$0xff] %vm2722, %v2705
  %2959 = vst.msk [vmem:[%s3 + $0x760] sm:$0xff] %vm2722, %v2708
  %2960 = vst.msk [vmem:[%s3 + $0x768] sm:$0xff] %vm2722, %v2711
  %2961 = vst.msk [vmem:[%s3 + $0x770] sm:$0xff] %vm2722, %v2714
  %2962 = vst.msk [vmem:[%s3 + $0x778] sm:$0xff] %vm2722, %v2717
  %vm2963 = vcmask 25600
  %2964 = vst.msk [vmem:[%s3 + $0x780] sm:$0x3] %vm2963, %v2720
  // Predicated region
  $region14: #{esa_forward.5} parent=0 // pred_check
    _
  $region15: #{esa_forward.5} parent=0 // pred_check_branch
    %2966 = sbr.rel (0) target = $region17
  $region16: #{esa_forward.5} parent=0 // pred_region
    _
  $region17: #{esa_forward.5} parent=0 // pred_fallthru
    _
  // Predicated region
  $region18: #{esa_forward.5} parent=0 // pred_check
    _
  $region19: #{esa_forward.5} parent=0 // pred_check_branch
    %2968 = sbr.rel (0) target = $region21
  $region20: #{esa_forward.5} parent=0 // pred_region
    _
  $region21: #{esa_forward.5} parent=0 // pred_fallthru
    _

// kernel: esa_forward.6
$region0: #{esa_forward.6}
  #allocation0 [shape = 'u32[]', space=smem, size = 0x4, offset = 0x4, fixed_abs, tag = 'smem constant byte address 0x4 - core index']
  #allocation1 [shape = 'u32[72,128]{1,0:T(1,128)}', space=vmem, size = 0x9000, scoped, tag = 'internal scratch']
  %s0 = inlined_call_operand.vmem [shape: f32[98,36], index: 0, kind: input, shape index: {}]
  %s1 = inlined_call_operand.vmem [shape: f32[36,4], index: 1, kind: input, shape index: {}]
  %s2 = inlined_call_operand.vmem [shape: f32[1,4], index: 2, kind: input, shape index: {}]
  %s3 = inlined_call_operand.vmem [shape: f32[98,4], index: 3, kind: output, shape index: {}]
  %s4 = sld [smem:[#allocation0]]
  $region22: #{esa_forward.6} parent=0
    _
  %s6 = ssub.s32 1, %s4
  %s7 = scalar_select 0, %s6, %s4
  // Predicated region
  $region2: #{esa_forward.6} parent=0 // pred_check
    _
  $region3: #{esa_forward.6} parent=0 // pred_check_branch
    %9 = sbr.rel (0) target = $region5
  $region4: #{esa_forward.6} parent=0 // pred_region
    _
  $region5: #{esa_forward.6} parent=0 // pred_fallthru
    _
  // Predicated region
  $region6: #{esa_forward.6} parent=0 // pred_check
    _
  $region7: #{esa_forward.6} parent=0 // pred_check_branch
    %11 = sbr.rel (0) target = $region9
  $region8: #{esa_forward.6} parent=0 // pred_region
    _
  $region9: #{esa_forward.6} parent=0 // pred_fallthru
    _
  // Predicated region
  $region10: #{esa_forward.6} parent=0 // pred_check
    _
  $region11: #{esa_forward.6} parent=0 // pred_check_branch
    %13 = sbr.rel (0) target = $region13
  $region12: #{esa_forward.6} parent=0 // pred_region
    _
  $region13: #{esa_forward.6} parent=0 // pred_fallthru
    _
  %v14 = vld [vmem:[%s0] sm:$0xff]
  %v15 = vld [vmem:[%s0 + $0x8] sm:$0xff]
  %v16 = vld [vmem:[%s0 + $0x10] sm:$0xff]
  %v17 = vld [vmem:[%s0 + $0x18] sm:$0xff]
  %v18 = vld [vmem:[%s0 + $0x20] sm:$0xff]
  %v19 = vld [vmem:[%s0 + $0x28] sm:$0xff]
  %v20 = vld [vmem:[%s0 + $0x30] sm:$0xff]
  %v21 = vld [vmem:[%s0 + $0x38] sm:$0xff]
  %v22 = vld [vmem:[%s0 + $0x40] sm:$0xff]
  %v23 = vld [vmem:[%s0 + $0x48] sm:$0xff]
  %v24 = vld [vmem:[%s0 + $0x50] sm:$0xff]
  %v25 = vld [vmem:[%s0 + $0x58] sm:$0xff]
  %v26 = vld [vmem:[%s0 + $0x60] sm:$0x3]
  %v27 = vld [vmem:[%s1] sm:$0xff]
  %v28 = vld [vmem:[%s1 + $0x8] sm:$0xff]
  %v29 = vld [vmem:[%s1 + $0x10] sm:$0xff]
  %v30 = vld [vmem:[%s1 + $0x18] sm:$0xff]
  %v31 = vld [vmem:[%s1 + $0x20] sm:$0xf]
  %v32 = vld [vmem:[%s2] sm:$0x1]
  %v34 = vperm.slane %v32, 0
  %vm36 = vcmask 293888
  %v38 = vsel %vm36, %v14, 0
  %v41 = vsel %vm36, %v15, 0
  %v44 = vsel %vm36, %v16, 0
  %v47 = vsel %vm36, %v17, 0
  %v50 = vsel %vm36, %v18, 0
  %v53 = vsel %vm36, %v19, 0
  %v56 = vsel %vm36, %v20, 0
  %v59 = vsel %vm36, %v21, 0
  %v62 = vsel %vm36, %v22, 0
  %v65 = vsel %vm36, %v23, 0
  %v68 = vsel %vm36, %v24, 0
  %v71 = vsel %vm36, %v25, 0
  %v74 = vsel %vm36, %v26, 0
  %vm76 = vcmask 1043456
  %v78 = vsel %vm76, %v31, 0
  %80 = vmatpush.msra.mxu0 0.0
  %81 = vmatpush.msra.mxu0 0.0
  %82 = vmatpush.msra.mxu0 0.0
  %83 = vmatpush.msra.mxu0 0.0
  %84 = vmatpush.msra.mxu0 0.0
  %85 = vmatpush.msra.mxu0 0.0
  %86 = vmatpush.msra.mxu0 0.0
  %87 = vmatpush.msra.mxu0 0.0
  %88 = vmatpush.msra.mxu0 0.0
  %89 = vmatpush.msra.mxu0 0.0
  %90 = vmatpush.msra.mxu0 0.0
  %91 = vmatpush.msra.mxu0 %v78
  %92 = vmatpush.msra.mxu0 %v30
  %93 = vmatpush.msra.mxu0 %v29
  %94 = vmatpush.msra.mxu0 %v28
  %95 = vmatpush.msra.mxu0 %v27
  %96 = vmatmul.f32.gmra.mxu0 %v38
  %v97 = vpop.f32.mrf.mxu0
  %v98 = vadd.f32 %v34, %v97
  %99 = vmatmul.f32.gmra.mxu0 %v41
  %v100 = vpop.f32.mrf.mxu0
  %v101 = vadd.f32 %v34, %v100
  %102 = vmatmul.f32.gmra.mxu0 %v44
  %v103 = vpop.f32.mrf.mxu0
  %v104 = vadd.f32 %v34, %v103
  %105 = vmatmul.f32.gmra.mxu0 %v47
  %v106 = vpop.f32.mrf.mxu0
  %v107 = vadd.f32 %v34, %v106
  %108 = vmatmul.f32.gmra.mxu0 %v50
  %v109 = vpop.f32.mrf.mxu0
  %v110 = vadd.f32 %v34, %v109
  %111 = vmatmul.f32.gmra.mxu0 %v53
  %v112 = vpop.f32.mrf.mxu0
  %v113 = vadd.f32 %v34, %v112
  %114 = vmatmul.f32.gmra.mxu0 %v56
  %v115 = vpop.f32.mrf.mxu0
  %v116 = vadd.f32 %v34, %v115
  %117 = vmatmul.f32.gmra.mxu0 %v59
  %v118 = vpop.f32.mrf.mxu0
  %v119 = vadd.f32 %v34, %v118
  %120 = vmatmul.f32.gmra.mxu0 %v62
  %v121 = vpop.f32.mrf.mxu0
  %v122 = vadd.f32 %v34, %v121
  %123 = vmatmul.f32.gmra.mxu0 %v65
  %v124 = vpop.f32.mrf.mxu0
  %v125 = vadd.f32 %v34, %v124
  %126 = vmatmul.f32.gmra.mxu0 %v68
  %v127 = vpop.f32.mrf.mxu0
  %v128 = vadd.f32 %v34, %v127
  %129 = vmatmul.f32.gmra.mxu0 %v71
  %v130 = vpop.f32.mrf.mxu0
  %v131 = vadd.f32 %v34, %v130
  %132 = vmatmul.f32.gmra.mxu0 %v74
  %v133 = vpop.f32.mrf.mxu0
  %v134 = vadd.f32 %v34, %v133
  %135 = vdwg.mxu0
  %vm136 = vcmask 31744
  %137 = vst.msk [vmem:[%s3] sm:$0xff] %vm136, %v98
  %138 = vst.msk [vmem:[%s3 + $0x8] sm:$0xff] %vm136, %v101
  %139 = vst.msk [vmem:[%s3 + $0x10] sm:$0xff] %vm136, %v104
  %140 = vst.msk [vmem:[%s3 + $0x18] sm:$0xff] %vm136, %v107
  %141 = vst.msk [vmem:[%s3 + $0x20] sm:$0xff] %vm136, %v110
  %142 = vst.msk [vmem:[%s3 + $0x28] sm:$0xff] %vm136, %v113
  %143 = vst.msk [vmem:[%s3 + $0x30] sm:$0xff] %vm136, %v116
  %144 = vst.msk [vmem:[%s3 + $0x38] sm:$0xff] %vm136, %v119
  %145 = vst.msk [vmem:[%s3 + $0x40] sm:$0xff] %vm136, %v122
  %146 = vst.msk [vmem:[%s3 + $0x48] sm:$0xff] %vm136, %v125
  %147 = vst.msk [vmem:[%s3 + $0x50] sm:$0xff] %vm136, %v128
  %148 = vst.msk [vmem:[%s3 + $0x58] sm:$0xff] %vm136, %v131
  %vm149 = vcmask 25600
  %150 = vst.msk [vmem:[%s3 + $0x60] sm:$0x3] %vm149, %v134
  // Predicated region
  $region14: #{esa_forward.6} parent=0 // pred_check
    _
  $region15: #{esa_forward.6} parent=0 // pred_check_branch
    %152 = sbr.rel (0) target = $region17
  $region16: #{esa_forward.6} parent=0 // pred_region
    _
  $region17: #{esa_forward.6} parent=0 // pred_fallthru
    _
  // Predicated region
  $region18: #{esa_forward.6} parent=0 // pred_check
    _
  $region19: #{esa_forward.6} parent=0 // pred_check_branch
    %154 = sbr.rel (0) target = $region21
  $region20: #{esa_forward.6} parent=0 // pred_region
    _
  $region21: #{esa_forward.6} parent=0 // pred_fallthru
    _

// kernel: esa_forward.7
$region0: #{esa_forward.7}
  #allocation0 [shape = 'u32[]', space=smem, size = 0x4, offset = 0x4, fixed_abs, tag = 'smem constant byte address 0x4 - core index']
  #allocation1 [shape = 'u32[72,128]{1,0:T(1,128)}', space=vmem, size = 0x9000, scoped, tag = 'internal scratch']
  %s0 = inlined_call_operand.vmem [shape: f32[50,36], index: 0, kind: input, shape index: {}]
  %s1 = inlined_call_operand.vmem [shape: f32[36,4], index: 1, kind: input, shape index: {}]
  %s2 = inlined_call_operand.vmem [shape: f32[1,4], index: 2, kind: input, shape index: {}]
  %s3 = inlined_call_operand.vmem [shape: f32[50,4], index: 3, kind: output, shape index: {}]
  %s4 = sld [smem:[#allocation0]]
  $region22: #{esa_forward.7} parent=0
    _
  %s6 = ssub.s32 1, %s4
  %s7 = scalar_select 0, %s6, %s4
  // Predicated region
  $region2: #{esa_forward.7} parent=0 // pred_check
    _
  $region3: #{esa_forward.7} parent=0 // pred_check_branch
    %9 = sbr.rel (0) target = $region5
  $region4: #{esa_forward.7} parent=0 // pred_region
    _
  $region5: #{esa_forward.7} parent=0 // pred_fallthru
    _
  // Predicated region
  $region6: #{esa_forward.7} parent=0 // pred_check
    _
  $region7: #{esa_forward.7} parent=0 // pred_check_branch
    %11 = sbr.rel (0) target = $region9
  $region8: #{esa_forward.7} parent=0 // pred_region
    _
  $region9: #{esa_forward.7} parent=0 // pred_fallthru
    _
  // Predicated region
  $region10: #{esa_forward.7} parent=0 // pred_check
    _
  $region11: #{esa_forward.7} parent=0 // pred_check_branch
    %13 = sbr.rel (0) target = $region13
  $region12: #{esa_forward.7} parent=0 // pred_region
    _
  $region13: #{esa_forward.7} parent=0 // pred_fallthru
    _
  %v14 = vld [vmem:[%s0] sm:$0xff]
  %v15 = vld [vmem:[%s0 + $0x8] sm:$0xff]
  %v16 = vld [vmem:[%s0 + $0x10] sm:$0xff]
  %v17 = vld [vmem:[%s0 + $0x18] sm:$0xff]
  %v18 = vld [vmem:[%s0 + $0x20] sm:$0xff]
  %v19 = vld [vmem:[%s0 + $0x28] sm:$0xff]
  %v20 = vld [vmem:[%s0 + $0x30] sm:$0x3]
  %v21 = vld [vmem:[%s1] sm:$0xff]
  %v22 = vld [vmem:[%s1 + $0x8] sm:$0xff]
  %v23 = vld [vmem:[%s1 + $0x10] sm:$0xff]
  %v24 = vld [vmem:[%s1 + $0x18] sm:$0xff]
  %v25 = vld [vmem:[%s1 + $0x20] sm:$0xf]
  %v26 = vld [vmem:[%s2] sm:$0x1]
  %v28 = vperm.slane %v26, 0
  %vm30 = vcmask 293888
  %v32 = vsel %vm30, %v14, 0
  %v35 = vsel %vm30, %v15, 0
  %v38 = vsel %vm30, %v16, 0
  %v41 = vsel %vm30, %v17, 0
  %v44 = vsel %vm30, %v18, 0
  %v47 = vsel %vm30, %v19, 0
  %v50 = vsel %vm30, %v20, 0
  %vm52 = vcmask 1043456
  %v54 = vsel %vm52, %v25, 0
  %56 = vmatpush.msra.mxu0 0.0
  %57 = vmatpush.msra.mxu0 0.0
  %58 = vmatpush.msra.mxu0 0.0
  %59 = vmatpush.msra.mxu0 0.0
  %60 = vmatpush.msra.mxu0 0.0
  %61 = vmatpush.msra.mxu0 0.0
  %62 = vmatpush.msra.mxu0 0.0
  %63 = vmatpush.msra.mxu0 0.0
  %64 = vmatpush.msra.mxu0 0.0
  %65 = vmatpush.msra.mxu0 0.0
  %66 = vmatpush.msra.mxu0 0.0
  %67 = vmatpush.msra.mxu0 %v54
  %68 = vmatpush.msra.mxu0 %v24
  %69 = vmatpush.msra.mxu0 %v23
  %70 = vmatpush.msra.mxu0 %v22
  %71 = vmatpush.msra.mxu0 %v21
  %72 = vmatmul.f32.gmra.mxu0 %v32
  %v73 = vpop.f32.mrf.mxu0
  %v74 = vadd.f32 %v28, %v73
  %75 = vmatmul.f32.gmra.mxu0 %v35
  %v76 = vpop.f32.mrf.mxu0
  %v77 = vadd.f32 %v28, %v76
  %78 = vmatmul.f32.gmra.mxu0 %v38
  %v79 = vpop.f32.mrf.mxu0
  %v80 = vadd.f32 %v28, %v79
  %81 = vmatmul.f32.gmra.mxu0 %v41
  %v82 = vpop.f32.mrf.mxu0
  %v83 = vadd.f32 %v28, %v82
  %84 = vmatmul.f32.gmra.mxu0 %v44
  %v85 = vpop.f32.mrf.mxu0
  %v86 = vadd.f32 %v28, %v85
  %87 = vmatmul.f32.gmra.mxu0 %v47
  %v88 = vpop.f32.mrf.mxu0
  %v89 = vadd.f32 %v28, %v88
  %90 = vmatmul.f32.gmra.mxu0 %v50
  %v91 = vpop.f32.mrf.mxu0
  %v92 = vadd.f32 %v28, %v91
  %93 = vdwg.mxu0
  %vm94 = vcmask 31744
  %95 = vst.msk [vmem:[%s3] sm:$0xff] %vm94, %v74
  %96 = vst.msk [vmem:[%s3 + $0x8] sm:$0xff] %vm94, %v77
  %97 = vst.msk [vmem:[%s3 + $0x10] sm:$0xff] %vm94, %v80
  %98 = vst.msk [vmem:[%s3 + $0x18] sm:$0xff] %vm94, %v83
  %99 = vst.msk [vmem:[%s3 + $0x20] sm:$0xff] %vm94, %v86
  %100 = vst.msk [vmem:[%s3 + $0x28] sm:$0xff] %vm94, %v89
  %vm101 = vcmask 25600
  %102 = vst.msk [vmem:[%s3 + $0x30] sm:$0x3] %vm101, %v92
  // Predicated region
  $region14: #{esa_forward.7} parent=0 // pred_check
    _
  $region15: #{esa_forward.7} parent=0 // pred_check_branch
    %104 = sbr.rel (0) target = $region17
  $region16: #{esa_forward.7} parent=0 // pred_region
    _
  $region17: #{esa_forward.7} parent=0 // pred_fallthru
    _
  // Predicated region
  $region18: #{esa_forward.7} parent=0 // pred_check
    _
  $region19: #{esa_forward.7} parent=0 // pred_check_branch
    %106 = sbr.rel (0) target = $region21
  $region20: #{esa_forward.7} parent=0 // pred_region
    _
  $region21: #{esa_forward.7} parent=0 // pred_fallthru
    _

// kernel: esa_forward.8
$region0: #{esa_forward.8}
  #allocation0 [shape = 'u32[]', space=smem, size = 0x4, offset = 0x4, fixed_abs, tag = 'smem constant byte address 0x4 - core index']
  #allocation1 [shape = 'u32[72,128]{1,0:T(1,128)}', space=vmem, size = 0x9000, scoped, tag = 'internal scratch']
  %s0 = inlined_call_operand.vmem [shape: f32[18,36], index: 0, kind: input, shape index: {}]
  %s1 = inlined_call_operand.vmem [shape: f32[36,4], index: 1, kind: input, shape index: {}]
  %s2 = inlined_call_operand.vmem [shape: f32[1,4], index: 2, kind: input, shape index: {}]
  %s3 = inlined_call_operand.vmem [shape: f32[18,4], index: 3, kind: output, shape index: {}]
  %s4 = sld [smem:[#allocation0]]
  $region22: #{esa_forward.8} parent=0
    _
  %s6 = ssub.s32 1, %s4
  %s7 = scalar_select 0, %s6, %s4
  // Predicated region
  $region2: #{esa_forward.8} parent=0 // pred_check
    _
  $region3: #{esa_forward.8} parent=0 // pred_check_branch
    %9 = sbr.rel (0) target = $region5
  $region4: #{esa_forward.8} parent=0 // pred_region
    _
  $region5: #{esa_forward.8} parent=0 // pred_fallthru
    _
  // Predicated region
  $region6: #{esa_forward.8} parent=0 // pred_check
    _
  $region7: #{esa_forward.8} parent=0 // pred_check_branch
    %11 = sbr.rel (0) target = $region9
  $region8: #{esa_forward.8} parent=0 // pred_region
    _
  $region9: #{esa_forward.8} parent=0 // pred_fallthru
    _
  // Predicated region
  $region10: #{esa_forward.8} parent=0 // pred_check
    _
  $region11: #{esa_forward.8} parent=0 // pred_check_branch
    %13 = sbr.rel (0) target = $region13
  $region12: #{esa_forward.8} parent=0 // pred_region
    _
  $region13: #{esa_forward.8} parent=0 // pred_fallthru
    _
  %v14 = vld [vmem:[%s0] sm:$0xff]
  %v15 = vld [vmem:[%s0 + $0x8] sm:$0xff]
  %v16 = vld [vmem:[%s0 + $0x10] sm:$0x3]
  %v17 = vld [vmem:[%s1] sm:$0xff]
  %v18 = vld [vmem:[%s1 + $0x8] sm:$0xff]
  %v19 = vld [vmem:[%s1 + $0x10] sm:$0xff]
  %v20 = vld [vmem:[%s1 + $0x18] sm:$0xff]
  %v21 = vld [vmem:[%s1 + $0x20] sm:$0xf]
  %v22 = vld [vmem:[%s2] sm:$0x1]
  %v24 = vperm.slane %v22, 0
  %vm26 = vcmask 293888
  %v28 = vsel %vm26, %v14, 0
  %v31 = vsel %vm26, %v15, 0
  %v34 = vsel %vm26, %v16, 0
  %vm36 = vcmask 1043456
  %v38 = vsel %vm36, %v21, 0
  %40 = vmatpush.msra.mxu0 0.0
  %41 = vmatpush.msra.mxu0 0.0
  %42 = vmatpush.msra.mxu0 0.0
  %43 = vmatpush.msra.mxu0 0.0
  %44 = vmatpush.msra.mxu0 0.0
  %45 = vmatpush.msra.mxu0 0.0
  %46 = vmatpush.msra.mxu0 0.0
  %47 = vmatpush.msra.mxu0 0.0
  %48 = vmatpush.msra.mxu0 0.0
  %49 = vmatpush.msra.mxu0 0.0
  %50 = vmatpush.msra.mxu0 0.0
  %51 = vmatpush.msra.mxu0 %v38
  %52 = vmatpush.msra.mxu0 %v20
  %53 = vmatpush.msra.mxu0 %v19
  %54 = vmatpush.msra.mxu0 %v18
  %55 = vmatpush.msra.mxu0 %v17
  %56 = vmatmul.f32.gmra.mxu0 %v28
  %v57 = vpop.f32.mrf.mxu0
  %v58 = vadd.f32 %v24, %v57
  %59 = vmatmul.f32.gmra.mxu0 %v31
  %v60 = vpop.f32.mrf.mxu0
  %v61 = vadd.f32 %v24, %v60
  %62 = vmatmul.f32.gmra.mxu0 %v34
  %v63 = vpop.f32.mrf.mxu0
  %v64 = vadd.f32 %v24, %v63
  %65 = vdwg.mxu0
  %vm66 = vcmask 31744
  %67 = vst.msk [vmem:[%s3] sm:$0xff] %vm66, %v58
  %68 = vst.msk [vmem:[%s3 + $0x8] sm:$0xff] %vm66, %v61
  %vm69 = vcmask 25600
  %70 = vst.msk [vmem:[%s3 + $0x10] sm:$0x3] %vm69, %v64
  // Predicated region
  $region14: #{esa_forward.8} parent=0 // pred_check
    _
  $region15: #{esa_forward.8} parent=0 // pred_check_branch
    %72 = sbr.rel (0) target = $region17
  $region16: #{esa_forward.8} parent=0 // pred_region
    _
  $region17: #{esa_forward.8} parent=0 // pred_fallthru
    _
  // Predicated region
  $region18: #{esa_forward.8} parent=0 // pred_check
    _
  $region19: #{esa_forward.8} parent=0 // pred_check_branch
    %74 = sbr.rel (0) target = $region21
  $region20: #{esa_forward.8} parent=0 // pred_region
    _
  $region21: #{esa_forward.8} parent=0 // pred_fallthru
    _

// kernel: tile.13
$region0: #{tile.13}
  #allocation0 [shape = 's32[1]{0}', space=sflag, size = 0x4, scoped, tag = 'scoped memory for tile.13']
  %s0 = inlined_call_operand.vmem [shape: f32[4], index: 0, kind: input, shape index: {}]
  %s1 = inlined_call_operand.vmem [shape: f32[8,4], index: 1, kind: output, shape index: {}]
  // Predicated region
  $region2: #{tile.13} parent=0 // pred_check
    _
  $region3: #{tile.13} parent=0 // pred_check_branch
    %3 = sbr.rel (0) target = $region5
  $region4: #{tile.13} parent=0 // pred_region
    _
  $region5: #{tile.13} parent=0 // pred_fallthru
    _
  %v4 = vld [vmem:[%s0] ss:$0 sm:$0xff]
  %5 = vst [vmem:[%s1] sm:$0xff] %v4

// kernel: tile.14
$region0: #{tile.14}
  %s0 = inlined_call_operand.vmem [shape: f32[8,4], index: 0, kind: input, shape index: {}]
  %s1 = inlined_call_operand.vmem [shape: f32[1,32], index: 1, kind: output, shape index: {}]
  $region1: #{tile.14} parent=0
    #allocation0 [shape = 'u8[4096]{0}', space=vmem, size = 0x1000, scoped, tag = 'scoped mem for output reshape']
    %v2 = vld [vmem:[%s0] sm:$0x1]
    %vm3 = vcmask 31744
    %4 = vst.msk [vmem:[#allocation0] sm:$0x1] %vm3, %v2
    %s5 = scalar_lea.vmem %s0, 7
    %v6 = vld [vmem:[%s5] sm:$0x1]
    %7 = vrot.lane.b32.xlu0 %v6, 28
    %v8 = vpop.permute.xlu0 %7
    %vm9 = vcmask 261344
    %10 = vst.msk [vmem:[#allocation0] sm:$0x1] %vm9, %v8
    %s11 = scalar_lea.vmem %s0, 6
    %v12 = vld [vmem:[%s11] sm:$0x1]
    %13 = vrot.lane.b32.xlu0 %v12, 24
    %v14 = vpop.permute.xlu0 %13
    %vm15 = vcmask 228544
    %16 = vst.msk [vmem:[#allocation0] sm:$0x1] %vm15, %v14
    %s17 = scalar_lea.vmem %s0, 5
    %v18 = vld [vmem:[%s17] sm:$0x1]
    %19 = vrot.lane.b32.xlu0 %v18, 20
    %v20 = vpop.permute.xlu0 %19
    %vm21 = vcmask 195744
    %22 = vst.msk [vmem:[#allocation0] sm:$0x1] %vm21, %v20
    %s23 = scalar_lea.vmem %s0, 4
    %v24 = vld [vmem:[%s23] sm:$0x1]
    %25 = vrot.lane.b32.xlu0 %v24, 16
    %v26 = vpop.permute.xlu0 %25
    %vm27 = vcmask 162944
    %28 = vst.msk [vmem:[#allocation0] sm:$0x1] %vm27, %v26
    %s29 = scalar_lea.vmem %s0, 3
    %v30 = vld [vmem:[%s29] sm:$0x1]
    %31 = vrot.lane.b32.xlu0 %v30, 12
    %v32 = vpop.permute.xlu0 %31
    %vm33 = vcmask 130144
    %34 = vst.msk [vmem:[#allocation0] sm:$0x1] %vm33, %v32
    %s35 = scalar_lea.vmem %s0, 2
    %v36 = vld [vmem:[%s35] sm:$0x1]
    %37 = vrot.lane.b32.xlu0 %v36, 8
    %v38 = vpop.permute.xlu0 %37
    %vm39 = vcmask 97344
    %40 = vst.msk [vmem:[#allocation0] sm:$0x1] %vm39, %v38
    %s41 = scalar_lea.vmem %s0, 1
    %v42 = vld [vmem:[%s41] sm:$0x1]
    %43 = vrot.lane.b32.xlu0 %v42, 4
    %v44 = vpop.permute.xlu0 %43
    %vm45 = vcmask 64544
    %46 = vst.msk [vmem:[#allocation0] sm:$0x1] %vm45, %v44
    %s48 = ssub.s32 2, 1
    %v49 = vld [vmem:[#allocation0] sm:%s48]
    %s51 = ssub.s32 2, 1
    %52 = vst [vmem:[%s1] sm:%s51] %v49

// kernel: tile.18
$region0: #{tile.18}
  #allocation0 [shape = 's32[1]{0}', space=sflag, size = 0x4, scoped, tag = 'scoped memory for tile.18']
  %s0 = inlined_call_operand.vmem [shape: f32[16], index: 0, kind: input, shape index: {}]
  %s1 = inlined_call_operand.vmem [shape: f32[8,16], index: 1, kind: output, shape index: {}]
  // Predicated region
  $region2: #{tile.18} parent=0 // pred_check
    _
  $region3: #{tile.18} parent=0 // pred_check_branch
    %3 = sbr.rel (0) target = $region5
  $region4: #{tile.18} parent=0 // pred_region
    _
  $region5: #{tile.18} parent=0 // pred_fallthru
    _
  %v4 = vld [vmem:[%s0] ss:$0 sm:$0xff]
  %5 = vst [vmem:[%s1] sm:$0xff] %v4

// kernel: tile.19
$region0: #{tile.19}
  %s0 = inlined_call_operand.vmem [shape: f32[8,16], index: 0, kind: input, shape index: {}]
  %s1 = inlined_call_operand.vmem [shape: f32[1,128], index: 1, kind: output, shape index: {}]
  $region1: #{tile.19} parent=0
    #allocation0 [shape = 'u8[4096]{0}', space=vmem, size = 0x1000, scoped, tag = 'scoped mem for output reshape']
    %v2 = vld [vmem:[%s0] sm:$0x1]
    %vm3 = vcmask 130048
    %4 = vst.msk [vmem:[#allocation0] sm:$0x1] %vm3, %v2
    %s5 = scalar_lea.vmem %s0, 7
    %v6 = vld [vmem:[%s5] sm:$0x1]
    %7 = vrot.lane.b32.xlu0 %v6, 112
    %v8 = vpop.permute.xlu0 %7
    %vm9 = vcmask 1048448
    %10 = vst.msk [vmem:[#allocation0] sm:$0x1] %vm9, %v8
    %s11 = scalar_lea.vmem %s0, 6
    %v12 = vld [vmem:[%s11] sm:$0x1]
    %13 = vrot.lane.b32.xlu0 %v12, 96
    %v14 = vpop.permute.xlu0 %13
    %vm15 = vcmask 917248
    %16 = vst.msk [vmem:[#allocation0] sm:$0x1] %vm15, %v14
    %s17 = scalar_lea.vmem %s0, 5
    %v18 = vld [vmem:[%s17] sm:$0x1]
    %19 = vrot.lane.b32.xlu0 %v18, 80
    %v20 = vpop.permute.xlu0 %19
    %vm21 = vcmask 786048
    %22 = vst.msk [vmem:[#allocation0] sm:$0x1] %vm21, %v20
    %s23 = scalar_lea.vmem %s0, 4
    %v24 = vld [vmem:[%s23] sm:$0x1]
    %25 = vrot.lane.b32.xlu0 %v24, 64
    %v26 = vpop.permute.xlu0 %25
    %vm27 = vcmask 654848
    %28 = vst.msk [vmem:[#allocation0] sm:$0x1] %vm27, %v26
    %s29 = scalar_lea.vmem %s0, 3
    %v30 = vld [vmem:[%s29] sm:$0x1]
    %31 = vrot.lane.b32.xlu0 %v30, 48
    %v32 = vpop.permute.xlu0 %31
    %vm33 = vcmask 523648
    %34 = vst.msk [vmem:[#allocation0] sm:$0x1] %vm33, %v32
    %s35 = scalar_lea.vmem %s0, 2
    %v36 = vld [vmem:[%s35] sm:$0x1]
    %37 = vrot.lane.b32.xlu0 %v36, 32
    %v38 = vpop.permute.xlu0 %37
    %vm39 = vcmask 392448
    %40 = vst.msk [vmem:[#allocation0] sm:$0x1] %vm39, %v38
    %s41 = scalar_lea.vmem %s0, 1
    %v42 = vld [vmem:[%s41] sm:$0x1]
    %43 = vrot.lane.b32.xlu0 %v42, 16
    %v44 = vpop.permute.xlu0 %43
    %vm45 = vcmask 261248
    %46 = vst.msk [vmem:[#allocation0] sm:$0x1] %vm45, %v44
    %s48 = ssub.s32 2, 1
    %v49 = vld [vmem:[#allocation0] sm:%s48]
    %s51 = ssub.s32 2, 1
    %52 = vst [vmem:[%s1] sm:%s51] %v49

// kernel: esa_forward.9
$region0: #{esa_forward.9}
  #allocation0 [shape = 'u32[]', space=smem, size = 0x4, offset = 0x4, fixed_abs, tag = 'smem constant byte address 0x4 - core index']
  #allocation1 [shape = 'u32[72,128]{1,0:T(1,128)}', space=vmem, size = 0x9000, scoped, tag = 'internal scratch']
  %s0 = inlined_call_operand.vmem [shape: f32[1024,128], index: 0, kind: input, shape index: {}]
  %s1 = inlined_call_operand.vmem [shape: f32[1024,32], index: 1, kind: input, shape index: {}]
  %s2 = inlined_call_operand.vmem [shape: f32[128,32], index: 2, kind: input, shape index: {}]
  %s3 = inlined_call_operand.vmem [shape: f32[1,32], index: 3, kind: input, shape index: {}]
  %s4 = inlined_call_operand.vmem [shape: f32[32,128], index: 4, kind: input, shape index: {}]
  %s5 = inlined_call_operand.vmem [shape: f32[1,128], index: 5, kind: input, shape index: {}]
  %s6 = inlined_call_operand.vmem [shape: f32[1024,128], index: 6, kind: output, shape index: {}]
  %s7 = sld [smem:[#allocation0]]
  $region57: #{esa_forward.9} parent=0
    _
  %s9 = ssub.s32 1, %s7
  %s10 = scalar_select 0, %s9, %s7
  loop: start=0, step=1, limit=6
  $region2: #{esa_forward.9} parent=0 // loop_pre_header
    _
  $region3: #{esa_forward.9} parent=0 // loop_header
    %s12 = sphi 0, %s16
    %p13 = scmp.ge.s32.totalorder %s12, 6
    %s22 = sphi 0, %s24
    %s25 = sphi 0, %s22
    %s26 = sphi 0, %s25
    %s42 = sphi 0, %s26
    %s48 = sphi 0, %s50
    %s51 = sphi 0, %s48
    %s52 = sphi 0, %s51
    %s68 = sphi 0, %s52
    %s72 = sphi 0, %s72
    %s74 = sphi 0, %s72
    %s75 = sphi 0, %s74
    %s89 = sphi 0, %s75
    %s93 = sphi 0, %s93
    %s95 = sphi 0, %s93
    %s96 = sphi 0, %s95
    %s110 = sphi 0, %s96
    %s114 = sphi 0, %s114
    %s116 = sphi 0, %s114
    %s117 = sphi 0, %s116
    %s131 = sphi 0, %s117
    %s135 = sphi 0, %s135
    %s137 = sphi 0, %s135
    %s138 = sphi 0, %s137
    %s152 = sphi 0, %s138
    %s158 = sphi 0, %s160
    %s161 = sphi 0, %s158
    %s162 = sphi 0, %s161
    %s178 = sphi 0, %s162
  $region4: #{esa_forward.9} parent=0 // loop_header_branch
    %15 = sbr.rel (%p13) target = $region8
  $region5: #{esa_forward.9} parent=0 // loop_body
    %s17 = ssub.s32 %s12, 1
    %s18 = ssub.s32 %s12, 2
    %s19 = sadd.s32 %s12, 1
    %s20 = ssub.s32 %s12, %s19
    %p21 = scmp.eq.s32.totalorder %s20, 0
    %s23 = sadd.s32 %s22, 1
    %s24 = scalar_select %p21, %s22, %s23
    %p27 = pneg %p21
    %p28 = scmp.eq.s32.totalorder %s12, 3
    %p29 = por %p27, %p28
    %p30 = scmp.ne.s32.totalorder %s22, %s25
    %p31 = scmp.eq.s32.totalorder %s12, 0
    %p32 = por %p30, %p31
    %p33 = scmp.ne.s32.totalorder %s22, %s25
    %p34 = scmp.eq.s32.totalorder %s17, 3
    %p35 = por %p33, %p34
    %p36 = scmp.ne.s32.totalorder %s25, %s26
    %p37 = scmp.eq.s32.totalorder %s17, 0
    %p38 = por %p36, %p37
    %p39 = scmp.ne.s32.totalorder %s25, %s26
    %p40 = scmp.eq.s32.totalorder %s18, 3
    %p41 = por %p39, %p40
    %p43 = scmp.ne.s32.totalorder %s26, %s42
    %p44 = scmp.eq.s32.totalorder %s18, 0
    %p45 = por %p43, %p44
    %s46 = ssub.s32 %s12, %s19
    %p47 = scmp.eq.s32.totalorder %s46, 0
    %s49 = sadd.s32 %s48, 1
    %s50 = scalar_select %p47, %s48, %s49
    %p53 = pneg %p47
    %p54 = scmp.eq.s32.totalorder %s12, 3
    %p55 = por %p53, %p54
    %p56 = scmp.ne.s32.totalorder %s48, %s51
    %p57 = scmp.eq.s32.totalorder %s12, 0
    %p58 = por %p56, %p57
    %p59 = scmp.ne.s32.totalorder %s48, %s51
    %p60 = scmp.eq.s32.totalorder %s17, 3
    %p61 = por %p59, %p60
    %p62 = scmp.ne.s32.totalorder %s51, %s52
    %p63 = scmp.eq.s32.totalorder %s17, 0
    %p64 = por %p62, %p63
    %p65 = scmp.ne.s32.totalorder %s51, %s52
    %p66 = scmp.eq.s32.totalorder %s18, 3
    %p67 = por %p65, %p66
    %p69 = scmp.ne.s32.totalorder %s52, %s68
    %p70 = scmp.eq.s32.totalorder %s18, 0
    %p71 = por %p69, %p70
    %s73 = sadd.s32 %s72, 1
    %p76 = scmp.eq.s32.totalorder %s12, 3
    %p77 = scmp.ne.s32.totalorder %s72, %s74
    %p78 = scmp.eq.s32.totalorder %s12, 0
    %p79 = por %p77, %p78
    %p80 = scmp.ne.s32.totalorder %s72, %s74
    %p81 = scmp.eq.s32.totalorder %s17, 3
    %p82 = por %p80, %p81
    %p83 = scmp.ne.s32.totalorder %s74, %s75
    %p84 = scmp.eq.s32.totalorder %s17, 0
    %p85 = por %p83, %p84
    %p86 = scmp.ne.s32.totalorder %s74, %s75
    %p87 = scmp.eq.s32.totalorder %s18, 3
    %p88 = por %p86, %p87
    %p90 = scmp.ne.s32.totalorder %s75, %s89
    %p91 = scmp.eq.s32.totalorder %s18, 0
    %p92 = por %p90, %p91
    %s94 = sadd.s32 %s93, 1
    %p97 = scmp.eq.s32.totalorder %s12, 3
    %p98 = scmp.ne.s32.totalorder %s93, %s95
    %p99 = scmp.eq.s32.totalorder %s12, 0
    %p100 = por %p98, %p99
    %p101 = scmp.ne.s32.totalorder %s93, %s95
    %p102 = scmp.eq.s32.totalorder %s17, 3
    %p103 = por %p101, %p102
    %p104 = scmp.ne.s32.totalorder %s95, %s96
    %p105 = scmp.eq.s32.totalorder %s17, 0
    %p106 = por %p104, %p105
    %p107 = scmp.ne.s32.totalorder %s95, %s96
    %p108 = scmp.eq.s32.totalorder %s18, 3
    %p109 = por %p107, %p108
    %p111 = scmp.ne.s32.totalorder %s96, %s110
    %p112 = scmp.eq.s32.totalorder %s18, 0
    %p113 = por %p111, %p112
    %s115 = sadd.s32 %s114, 1
    %p118 = scmp.eq.s32.totalorder %s12, 3
    %p119 = scmp.ne.s32.totalorder %s114, %s116
    %p120 = scmp.eq.s32.totalorder %s12, 0
    %p121 = por %p119, %p120
    %p122 = scmp.ne.s32.totalorder %s114, %s116
    %p123 = scmp.eq.s32.totalorder %s17, 3
    %p124 = por %p122, %p123
    %p125 = scmp.ne.s32.totalorder %s116, %s117
    %p126 = scmp.eq.s32.totalorder %s17, 0
    %p127 = por %p125, %p126
    %p128 = scmp.ne.s32.totalorder %s116, %s117
    %p129 = scmp.eq.s32.totalorder %s18, 3
    %p130 = por %p128, %p129
    %p132 = scmp.ne.s32.totalorder %s117, %s131
    %p133 = scmp.eq.s32.totalorder %s18, 0
    %p134 = por %p132, %p133
    %s136 = sadd.s32 %s135, 1
    %p139 = scmp.eq.s32.totalorder %s12, 3
    %p140 = scmp.ne.s32.totalorder %s135, %s137
    %p141 = scmp.eq.s32.totalorder %s12, 0
    %p142 = por %p140, %p141
    %p143 = scmp.ne.s32.totalorder %s135, %s137
    %p144 = scmp.eq.s32.totalorder %s17, 3
    %p145 = por %p143, %p144
    %p146 = scmp.ne.s32.totalorder %s137, %s138
    %p147 = scmp.eq.s32.totalorder %s17, 0
    %p148 = por %p146, %p147
    %p149 = scmp.ne.s32.totalorder %s137, %s138
    %p150 = scmp.eq.s32.totalorder %s18, 3
    %p151 = por %p149, %p150
    %p153 = scmp.ne.s32.totalorder %s138, %s152
    %p154 = scmp.eq.s32.totalorder %s18, 0
    %p155 = por %p153, %p154
    %s156 = ssub.s32 %s12, %s19
    %p157 = scmp.eq.s32.totalorder %s156, 0
    %s159 = sadd.s32 %s158, 1
    %s160 = scalar_select %p157, %s158, %s159
    %p163 = pneg %p157
    %p164 = scmp.eq.s32.totalorder %s12, 3
    %p165 = por %p163, %p164
    %p166 = scmp.ne.s32.totalorder %s158, %s161
    %p167 = scmp.eq.s32.totalorder %s12, 0
    %p168 = por %p166, %p167
    %p169 = scmp.ne.s32.totalorder %s158, %s161
    %p170 = scmp.eq.s32.totalorder %s17, 3
    %p171 = por %p169, %p170
    %p172 = scmp.ne.s32.totalorder %s161, %s162
    %p173 = scmp.eq.s32.totalorder %s17, 0
    %p174 = por %p172, %p173
    %p175 = scmp.ne.s32.totalorder %s161, %s162
    %p176 = scmp.eq.s32.totalorder %s18, 3
    %p177 = por %p175, %p176
    %p179 = scmp.ne.s32.totalorder %s162, %s178
    %p180 = scmp.eq.s32.totalorder %s18, 0
    %p181 = por %p179, %p180
    %p182 = scmp.le.s32.totalorder 1, %s12
    %p183 = scmp.lt.s32.totalorder %s12, 5
    %p184 = pnand %p182, %p183
    %p185 = pneg %p184
    // Predicated region
    $region9: #{esa_forward.9} parent=5 // pred_check
      _
    $region10: #{esa_forward.9} parent=5 // pred_check_branch
      %187 = sbr.rel (%p184) target = $region12
    $region11: #{esa_forward.9} parent=5 // pred_region
      %s188 = ssub.s32 %s12, 1
      // Predicated region
      $region13: #{esa_forward.9} parent=11 // pred_check
        %p189 = pneg %p85
      $region14: #{esa_forward.9} parent=11 // pred_check_branch
        %191 = sbr.rel (%p189) target = $region16
      $region15: #{esa_forward.9} parent=11 // pred_region
        _
      $region16: #{esa_forward.9} parent=11 // pred_fallthru
        _
      // Predicated region
      $region17: #{esa_forward.9} parent=11 // pred_check
        %p192 = pneg %p106
      $region18: #{esa_forward.9} parent=11 // pred_check_branch
        %194 = sbr.rel (%p192) target = $region20
      $region19: #{esa_forward.9} parent=11 // pred_region
        _
      $region20: #{esa_forward.9} parent=11 // pred_fallthru
        _
      // Predicated region
      $region21: #{esa_forward.9} parent=11 // pred_check
        %p195 = pneg %p127
      $region22: #{esa_forward.9} parent=11 // pred_check_branch
        %197 = sbr.rel (%p195) target = $region24
      $region23: #{esa_forward.9} parent=11 // pred_region
        _
      $region24: #{esa_forward.9} parent=11 // pred_fallthru
        _
      // Predicated region
      $region25: #{esa_forward.9} parent=11 // pred_check
        %p198 = pneg %p148
      $region26: #{esa_forward.9} parent=11 // pred_check_branch
        %200 = sbr.rel (%p198) target = $region28
      $region27: #{esa_forward.9} parent=11 // pred_region
        _
      $region28: #{esa_forward.9} parent=11 // pred_fallthru
        _
    $region12: #{esa_forward.9} parent=5 // pred_fallthru
      _
    %p201 = scmp.lt.s32.totalorder %s12, 4
    // Predicated region
    $region29: #{esa_forward.9} parent=5 // pred_check
      %p202 = pneg %p201
    $region30: #{esa_forward.9} parent=5 // pred_check_branch
      %204 = sbr.rel (%p202) target = $region32
    $region31: #{esa_forward.9} parent=5 // pred_region
      // Predicated region
      $region33: #{esa_forward.9} parent=31 // pred_check
        %p205 = pneg %p32
      $region34: #{esa_forward.9} parent=31 // pred_check_branch
        %207 = sbr.rel (%p205) target = $region36
      $region35: #{esa_forward.9} parent=31 // pred_region
        %s208 = smul.u32 32, %s12
        %p209 = scmp.lt.s32.totalorder %s208, 127
        %s210 = scalar_select %p209, %s208, 127
        %s211 = smul.addr %s210, 8
        %s212 = scalar_lea.vmem %s0, %s211
        %s213 = smul.u32 32, %s12
      $region36: #{esa_forward.9} parent=31 // pred_fallthru
        _
      // Predicated region
      $region37: #{esa_forward.9} parent=31 // pred_check
        %p214 = pneg %p58
      $region38: #{esa_forward.9} parent=31 // pred_check_branch
        %216 = sbr.rel (%p214) target = $region40
      $region39: #{esa_forward.9} parent=31 // pred_region
        %s217 = smul.u32 32, %s12
        %p218 = scmp.lt.s32.totalorder %s217, 127
        %s219 = scalar_select %p218, %s217, 127
        %s220 = smul.addr %s219, 8
        %s221 = scalar_lea.vmem %s1, %s220
        %s222 = smul.u32 32, %s12
      $region40: #{esa_forward.9} parent=31 // pred_fallthru
        _
    $region32: #{esa_forward.9} parent=5 // pred_fallthru
      _
    %p223 = scmp.le.s32.totalorder 1, %s12
    %p224 = scmp.lt.s32.totalorder %s12, 5
    %p225 = pnand %p223, %p224
    %p226 = pneg %p225
    // Predicated region
    $region41: #{esa_forward.9} parent=5 // pred_check
      _
    $region42: #{esa_forward.9} parent=5 // pred_check_branch
      %228 = sbr.rel (%p225) target = $region44
    $region43: #{esa_forward.9} parent=5 // pred_region
      %s229 = ssub.s32 %s12, 1
      %s230 = smul.u32 32, %s17
      %p231 = scmp.lt.s32.totalorder %s230, 127
      %s232 = scalar_select %p231, %s230, 127
      %s233 = smul.addr %s232, 8
      %s234 = scalar_lea.vmem %s0, %s233
      %p235 = pneg %p38
      %p236 = pneg %p35
      %s237 = smul.u32 32, %s17
      %p238 = scmp.lt.s32.totalorder %s237, 127
      %s239 = scalar_select %p238, %s237, 127
      %s240 = smul.addr %s239, 8
      %s241 = scalar_lea.vmem %s1, %s240
      %p242 = pneg %p64
      %p243 = pneg %p61
      %p244 = pneg %p85
      %p245 = pneg %p82
      %p246 = pneg %p106
      %p247 = pneg %p103
      %p248 = pneg %p127
      %p249 = pneg %p124
      %p250 = pneg %p148
      %p251 = pneg %p145
      %p252 = pneg %p174
      %p253 = pneg %p171
      %s254 = smul.u32 32, %s17
      %p255 = scmp.lt.s32.totalorder %s254, 127
      %s256 = scalar_select %p255, %s254, 127
      %s257 = smul.addr %s256, 8
      %s258 = scalar_lea.vmem %s6, %s257
      %s259 = smul.u32 32, %s17
      %p260 = scmp.lt.s32.totalorder %s259, 127
      %s261 = scalar_select %p260, %s259, 127
      %s262 = smul.addr %s261, 8
      %s263 = scalar_lea.vmem %s0, %s262
      %s264 = smul.u32 32, %s17
      %s265 = smul.u32 32, %s17
      %p266 = scmp.lt.s32.totalorder %s265, 127
      %s267 = scalar_select %p266, %s265, 127
      %s268 = smul.addr %s267, 8
      %s269 = scalar_lea.vmem %s1, %s268
      %s270 = smul.u32 32, %s17
      %s271 = smul.u32 32, %s17
      %p272 = scmp.lt.s32.totalorder %s271, 127
      %s273 = scalar_select %p272, %s271, 127
      %s274 = smul.addr %s273, 8
      %s275 = scalar_lea.vmem %s6, %s274
      %s276 = smul.u32 32, %s17
      %v277 = vld [vmem:[%s263] sm:$0xff]
      %v278 = vld [vmem:[%s263 + $0x8] sm:$0xff]
      %v279 = vld [vmem:[%s263 + $0x10] sm:$0xff]
      %v280 = vld [vmem:[%s263 + $0x18] sm:$0xff]
      %v281 = vld [vmem:[%s263 + $0x20] sm:$0xff]
      %v282 = vld [vmem:[%s263 + $0x28] sm:$0xff]
      %v283 = vld [vmem:[%s263 + $0x30] sm:$0xff]
      %v284 = vld [vmem:[%s263 + $0x38] sm:$0xff]
      %v285 = vld [vmem:[%s263 + $0x40] sm:$0xff]
      %v286 = vld [vmem:[%s263 + $0x48] sm:$0xff]
      %v287 = vld [vmem:[%s263 + $0x50] sm:$0xff]
      %v288 = vld [vmem:[%s263 + $0x58] sm:$0xff]
      %v289 = vld [vmem:[%s263 + $0x60] sm:$0xff]
      %v290 = vld [vmem:[%s263 + $0x68] sm:$0xff]
      %v291 = vld [vmem:[%s263 + $0x70] sm:$0xff]
      %v292 = vld [vmem:[%s263 + $0x78] sm:$0xff]
      %v293 = vld [vmem:[%s263 + $0x80] sm:$0xff]
      %v294 = vld [vmem:[%s263 + $0x88] sm:$0xff]
      %v295 = vld [vmem:[%s263 + $0x90] sm:$0xff]
      %v296 = vld [vmem:[%s263 + $0x98] sm:$0xff]
      %v297 = vld [vmem:[%s263 + $0xa0] sm:$0xff]
      %v298 = vld [vmem:[%s263 + $0xa8] sm:$0xff]
      %v299 = vld [vmem:[%s263 + $0xb0] sm:$0xff]
      %v300 = vld [vmem:[%s263 + $0xb8] sm:$0xff]
      %v301 = vld [vmem:[%s263 + $0xc0] sm:$0xff]
      %v302 = vld [vmem:[%s263 + $0xc8] sm:$0xff]
      %v303 = vld [vmem:[%s263 + $0xd0] sm:$0xff]
      %v304 = vld [vmem:[%s263 + $0xd8] sm:$0xff]
      %v305 = vld [vmem:[%s263 + $0xe0] sm:$0xff]
      %v306 = vld [vmem:[%s263 + $0xe8] sm:$0xff]
      %v307 = vld [vmem:[%s263 + $0xf0] sm:$0xff]
      %v308 = vld [vmem:[%s263 + $0xf8] sm:$0xff]
      %v309 = vld [vmem:[%s2] sm:$0xff]
      %v310 = vld [vmem:[%s2 + $0x8] sm:$0xff]
      %v311 = vld [vmem:[%s2 + $0x10] sm:$0xff]
      %v312 = vld [vmem:[%s2 + $0x18] sm:$0xff]
      %v313 = vld [vmem:[%s2 + $0x20] sm:$0xff]
      %v314 = vld [vmem:[%s2 + $0x28] sm:$0xff]
      %v315 = vld [vmem:[%s2 + $0x30] sm:$0xff]
      %v316 = vld [vmem:[%s2 + $0x38] sm:$0xff]
      %v317 = vld [vmem:[%s2 + $0x40] sm:$0xff]
      %v318 = vld [vmem:[%s2 + $0x48] sm:$0xff]
      %v319 = vld [vmem:[%s2 + $0x50] sm:$0xff]
      %v320 = vld [vmem:[%s2 + $0x58] sm:$0xff]
      %v321 = vld [vmem:[%s2 + $0x60] sm:$0xff]
      %v322 = vld [vmem:[%s2 + $0x68] sm:$0xff]
      %v323 = vld [vmem:[%s2 + $0x70] sm:$0xff]
      %v324 = vld [vmem:[%s2 + $0x78] sm:$0xff]
      %v325 = vld [vmem:[%s3] sm:$0x1]
      %v327 = vperm.slane %v325, 0
      %329 = vmatpush.msra.mxu0 %v324
      %330 = vmatpush.msra.mxu0 %v323
      %331 = vmatpush.msra.mxu0 %v322
      %332 = vmatpush.msra.mxu0 %v321
      %333 = vmatpush.msra.mxu0 %v320
      %334 = vmatpush.msra.mxu0 %v319
      %335 = vmatpush.msra.mxu0 %v318
      %336 = vmatpush.msra.mxu0 %v317
      %337 = vmatpush.msra.mxu0 %v316
      %338 = vmatpush.msra.mxu0 %v315
      %339 = vmatpush.msra.mxu0 %v314
      %340 = vmatpush.msra.mxu0 %v313
      %341 = vmatpush.msra.mxu0 %v312
      %342 = vmatpush.msra.mxu0 %v311
      %343 = vmatpush.msra.mxu0 %v310
      %344 = vmatpush.msra.mxu0 %v309
      %345 = vmatmul.f32.gmra.mxu0 %v277
      %v346 = vpop.f32.mrf.mxu0
      %v347 = vadd.f32 %v327, %v346
      %348 = vmatmul.f32.gmra.mxu0 %v278
      %v349 = vpop.f32.mrf.mxu0
      %v350 = vadd.f32 %v327, %v349
      %351 = vmatmul.f32.gmra.mxu0 %v279
      %v352 = vpop.f32.mrf.mxu0
      %v353 = vadd.f32 %v327, %v352
      %354 = vmatmul.f32.gmra.mxu0 %v280
      %v355 = vpop.f32.mrf.mxu0
      %v356 = vadd.f32 %v327, %v355
      %357 = vmatmul.f32.gmra.mxu0 %v281
      %v358 = vpop.f32.mrf.mxu0
      %v359 = vadd.f32 %v327, %v358
      %360 = vmatmul.f32.gmra.mxu0 %v282
      %v361 = vpop.f32.mrf.mxu0
      %v362 = vadd.f32 %v327, %v361
      %363 = vmatmul.f32.gmra.mxu0 %v283
      %v364 = vpop.f32.mrf.mxu0
      %v365 = vadd.f32 %v327, %v364
      %366 = vmatmul.f32.gmra.mxu0 %v284
      %v367 = vpop.f32.mrf.mxu0
      %v368 = vadd.f32 %v327, %v367
      %369 = vmatmul.f32.gmra.mxu0 %v285
      %v370 = vpop.f32.mrf.mxu0
      %v371 = vadd.f32 %v327, %v370
      %372 = vmatmul.f32.gmra.mxu0 %v286
      %v373 = vpop.f32.mrf.mxu0
      %v374 = vadd.f32 %v327, %v373
      %375 = vmatmul.f32.gmra.mxu0 %v287
      %v376 = vpop.f32.mrf.mxu0
      %v377 = vadd.f32 %v327, %v376
      %378 = vmatmul.f32.gmra.mxu0 %v288
      %v379 = vpop.f32.mrf.mxu0
      %v380 = vadd.f32 %v327, %v379
      %381 = vmatmul.f32.gmra.mxu0 %v289
      %v382 = vpop.f32.mrf.mxu0
      %v383 = vadd.f32 %v327, %v382
      %384 = vmatmul.f32.gmra.mxu0 %v290
      %v385 = vpop.f32.mrf.mxu0
      %v386 = vadd.f32 %v327, %v385
      %387 = vmatmul.f32.gmra.mxu0 %v291
      %v388 = vpop.f32.mrf.mxu0
      %v389 = vadd.f32 %v327, %v388
      %390 = vmatmul.f32.gmra.mxu0 %v292
      %v391 = vpop.f32.mrf.mxu0
      %v392 = vadd.f32 %v327, %v391
      %393 = vmatmul.f32.gmra.mxu0 %v293
      %v394 = vpop.f32.mrf.mxu0
      %v395 = vadd.f32 %v327, %v394
      %396 = vmatmul.f32.gmra.mxu0 %v294
      %v397 = vpop.f32.mrf.mxu0
      %v398 = vadd.f32 %v327, %v397
      %399 = vmatmul.f32.gmra.mxu0 %v295
      %v400 = vpop.f32.mrf.mxu0
      %v401 = vadd.f32 %v327, %v400
      %402 = vmatmul.f32.gmra.mxu0 %v296
      %v403 = vpop.f32.mrf.mxu0
      %v404 = vadd.f32 %v327, %v403
      %405 = vmatmul.f32.gmra.mxu0 %v297
      %v406 = vpop.f32.mrf.mxu0
      %v407 = vadd.f32 %v327, %v406
      %408 = vmatmul.f32.gmra.mxu0 %v298
      %v409 = vpop.f32.mrf.mxu0
      %v410 = vadd.f32 %v327, %v409
      %411 = vmatmul.f32.gmra.mxu0 %v299
      %v412 = vpop.f32.mrf.mxu0
      %v413 = vadd.f32 %v327, %v412
      %414 = vmatmul.f32.gmra.mxu0 %v300
      %v415 = vpop.f32.mrf.mxu0
      %v416 = vadd.f32 %v327, %v415
      %417 = vmatmul.f32.gmra.mxu0 %v301
      %v418 = vpop.f32.mrf.mxu0
      %v419 = vadd.f32 %v327, %v418
      %420 = vmatmul.f32.gmra.mxu0 %v302
      %v421 = vpop.f32.mrf.mxu0
      %v422 = vadd.f32 %v327, %v421
      %423 = vmatmul.f32.gmra.mxu0 %v303
      %v424 = vpop.f32.mrf.mxu0
      %v425 = vadd.f32 %v327, %v424
      %426 = vmatmul.f32.gmra.mxu0 %v304
      %v427 = vpop.f32.mrf.mxu0
      %v428 = vadd.f32 %v327, %v427
      %429 = vmatmul.f32.gmra.mxu0 %v305
      %v430 = vpop.f32.mrf.mxu0
      %v431 = vadd.f32 %v327, %v430
      %432 = vmatmul.f32.gmra.mxu0 %v306
      %v433 = vpop.f32.mrf.mxu0
      %v434 = vadd.f32 %v327, %v433
      %435 = vmatmul.f32.gmra.mxu0 %v307
      %v436 = vpop.f32.mrf.mxu0
      %v437 = vadd.f32 %v327, %v436
      %438 = vmatmul.f32.gmra.mxu0 %v308
      %v439 = vpop.f32.mrf.mxu0
      %v440 = vadd.f32 %v327, %v439
      %441 = vdwg.mxu0
      %v442 = vld [vmem:[%s269] sm:$0xff]
      %v443 = vld [vmem:[%s269 + $0x8] sm:$0xff]
      %v444 = vld [vmem:[%s269 + $0x10] sm:$0xff]
      %v445 = vld [vmem:[%s269 + $0x18] sm:$0xff]
      %v446 = vld [vmem:[%s269 + $0x20] sm:$0xff]
      %v447 = vld [vmem:[%s269 + $0x28] sm:$0xff]
      %v448 = vld [vmem:[%s269 + $0x30] sm:$0xff]
      %v449 = vld [vmem:[%s269 + $0x38] sm:$0xff]
      %v450 = vld [vmem:[%s269 + $0x40] sm:$0xff]
      %v451 = vld [vmem:[%s269 + $0x48] sm:$0xff]
      %v452 = vld [vmem:[%s269 + $0x50] sm:$0xff]
      %v453 = vld [vmem:[%s269 + $0x58] sm:$0xff]
      %v454 = vld [vmem:[%s269 + $0x60] sm:$0xff]
      %v455 = vld [vmem:[%s269 + $0x68] sm:$0xff]
      %v456 = vld [vmem:[%s269 + $0x70] sm:$0xff]
      %v457 = vld [vmem:[%s269 + $0x78] sm:$0xff]
      %v458 = vld [vmem:[%s269 + $0x80] sm:$0xff]
      %v459 = vld [vmem:[%s269 + $0x88] sm:$0xff]
      %v460 = vld [vmem:[%s269 + $0x90] sm:$0xff]
      %v461 = vld [vmem:[%s269 + $0x98] sm:$0xff]
      %v462 = vld [vmem:[%s269 + $0xa0] sm:$0xff]
      %v463 = vld [vmem:[%s269 + $0xa8] sm:$0xff]
      %v464 = vld [vmem:[%s269 + $0xb0] sm:$0xff]
      %v465 = vld [vmem:[%s269 + $0xb8] sm:$0xff]
      %v466 = vld [vmem:[%s269 + $0xc0] sm:$0xff]
      %v467 = vld [vmem:[%s269 + $0xc8] sm:$0xff]
      %v468 = vld [vmem:[%s269 + $0xd0] sm:$0xff]
      %v469 = vld [vmem:[%s269 + $0xd8] sm:$0xff]
      %v470 = vld [vmem:[%s269 + $0xe0] sm:$0xff]
      %v471 = vld [vmem:[%s269 + $0xe8] sm:$0xff]
      %v472 = vld [vmem:[%s269 + $0xf0] sm:$0xff]
      %v473 = vld [vmem:[%s269 + $0xf8] sm:$0xff]
      %v474 = vadd.f32 %v442, %v347
      %v475 = vadd.f32 %v443, %v350
      %v476 = vadd.f32 %v444, %v353
      %v477 = vadd.f32 %v445, %v356
      %v478 = vadd.f32 %v446, %v359
      %v479 = vadd.f32 %v447, %v362
      %v480 = vadd.f32 %v448, %v365
      %v481 = vadd.f32 %v449, %v368
      %v482 = vadd.f32 %v450, %v371
      %v483 = vadd.f32 %v451, %v374
      %v484 = vadd.f32 %v452, %v377
      %v485 = vadd.f32 %v453, %v380
      %v486 = vadd.f32 %v454, %v383
      %v487 = vadd.f32 %v455, %v386
      %v488 = vadd.f32 %v456, %v389
      %v489 = vadd.f32 %v457, %v392
      %v490 = vadd.f32 %v458, %v395
      %v491 = vadd.f32 %v459, %v398
      %v492 = vadd.f32 %v460, %v401
      %v493 = vadd.f32 %v461, %v404
      %v494 = vadd.f32 %v462, %v407
      %v495 = vadd.f32 %v463, %v410
      %v496 = vadd.f32 %v464, %v413
      %v497 = vadd.f32 %v465, %v416
      %v498 = vadd.f32 %v466, %v419
      %v499 = vadd.f32 %v467, %v422
      %v500 = vadd.f32 %v468, %v425
      %v501 = vadd.f32 %v469, %v428
      %v502 = vadd.f32 %v470, %v431
      %v503 = vadd.f32 %v471, %v434
      %v504 = vadd.f32 %v472, %v437
      %v505 = vadd.f32 %v473, %v440
      %v506 = vld [vmem:[%s4] sm:$0xff]
      %v507 = vld [vmem:[%s4 + $0x8] sm:$0xff]
      %v508 = vld [vmem:[%s4 + $0x10] sm:$0xff]
      %v509 = vld [vmem:[%s4 + $0x18] sm:$0xff]
      %v510 = vld [vmem:[%s5] sm:$0x1]
      %v512 = vperm.slane %v510, 0
      %vm514 = vcmask 261120
      %v516 = vsel %vm514, %v474, 0
      %v519 = vsel %vm514, %v475, 0
      %v522 = vsel %vm514, %v476, 0
      %v525 = vsel %vm514, %v477, 0
      %v528 = vsel %vm514, %v478, 0
      %v531 = vsel %vm514, %v479, 0
      %v534 = vsel %vm514, %v480, 0
      %v537 = vsel %vm514, %v481, 0
      %v540 = vsel %vm514, %v482, 0
      %v543 = vsel %vm514, %v483, 0
      %v546 = vsel %vm514, %v484, 0
      %v549 = vsel %vm514, %v485, 0
      %v552 = vsel %vm514, %v486, 0
      %v555 = vsel %vm514, %v487, 0
      %v558 = vsel %vm514, %v488, 0
      %v561 = vsel %vm514, %v489, 0
      %v564 = vsel %vm514, %v490, 0
      %v567 = vsel %vm514, %v491, 0
      %v570 = vsel %vm514, %v492, 0
      %v573 = vsel %vm514, %v493, 0
      %v576 = vsel %vm514, %v494, 0
      %v579 = vsel %vm514, %v495, 0
      %v582 = vsel %vm514, %v496, 0
      %v585 = vsel %vm514, %v497, 0
      %v588 = vsel %vm514, %v498, 0
      %v591 = vsel %vm514, %v499, 0
      %v594 = vsel %vm514, %v500, 0
      %v597 = vsel %vm514, %v501, 0
      %v600 = vsel %vm514, %v502, 0
      %v603 = vsel %vm514, %v503, 0
      %v606 = vsel %vm514, %v504, 0
      %v609 = vsel %vm514, %v505, 0
      %611 = vmatpush.msra.mxu0 0.0
      %612 = vmatpush.msra.mxu0 0.0
      %613 = vmatpush.msra.mxu0 0.0
      %614 = vmatpush.msra.mxu0 0.0
      %615 = vmatpush.msra.mxu0 0.0
      %616 = vmatpush.msra.mxu0 0.0
      %617 = vmatpush.msra.mxu0 0.0
      %618 = vmatpush.msra.mxu0 0.0
      %619 = vmatpush.msra.mxu0 0.0
      %620 = vmatpush.msra.mxu0 0.0
      %621 = vmatpush.msra.mxu0 0.0
      %622 = vmatpush.msra.mxu0 0.0
      %623 = vmatpush.msra.mxu0 %v509
      %624 = vmatpush.msra.mxu0 %v508
      %625 = vmatpush.msra.mxu0 %v507
      %626 = vmatpush.msra.mxu0 %v506
      %627 = vmatmul.f32.gmra.mxu0 %v516
      %v628 = vpop.f32.mrf.mxu0
      %v629 = vadd.f32 %v512, %v628
      %630 = vmatmul.f32.gmra.mxu0 %v519
      %v631 = vpop.f32.mrf.mxu0
      %v632 = vadd.f32 %v512, %v631
      %633 = vmatmul.f32.gmra.mxu0 %v522
      %v634 = vpop.f32.mrf.mxu0
      %v635 = vadd.f32 %v512, %v634
      %636 = vmatmul.f32.gmra.mxu0 %v525
      %v637 = vpop.f32.mrf.mxu0
      %v638 = vadd.f32 %v512, %v637
      %639 = vmatmul.f32.gmra.mxu0 %v528
      %v640 = vpop.f32.mrf.mxu0
      %v641 = vadd.f32 %v512, %v640
      %642 = vmatmul.f32.gmra.mxu0 %v531
      %v643 = vpop.f32.mrf.mxu0
      %v644 = vadd.f32 %v512, %v643
      %645 = vmatmul.f32.gmra.mxu0 %v534
      %v646 = vpop.f32.mrf.mxu0
      %v647 = vadd.f32 %v512, %v646
      %648 = vmatmul.f32.gmra.mxu0 %v537
      %v649 = vpop.f32.mrf.mxu0
      %v650 = vadd.f32 %v512, %v649
      %651 = vmatmul.f32.gmra.mxu0 %v540
      %v652 = vpop.f32.mrf.mxu0
      %v653 = vadd.f32 %v512, %v652
      %654 = vmatmul.f32.gmra.mxu0 %v543
      %v655 = vpop.f32.mrf.mxu0
      %v656 = vadd.f32 %v512, %v655
      %657 = vmatmul.f32.gmra.mxu0 %v546
      %v658 = vpop.f32.mrf.mxu0
      %v659 = vadd.f32 %v512, %v658
      %660 = vmatmul.f32.gmra.mxu0 %v549
      %v661 = vpop.f32.mrf.mxu0
      %v662 = vadd.f32 %v512, %v661
      %663 = vmatmul.f32.gmra.mxu0 %v552
      %v664 = vpop.f32.mrf.mxu0
      %v665 = vadd.f32 %v512, %v664
      %666 = vmatmul.f32.gmra.mxu0 %v555
      %v667 = vpop.f32.mrf.mxu0
      %v668 = vadd.f32 %v512, %v667
      %669 = vmatmul.f32.gmra.mxu0 %v558
      %v670 = vpop.f32.mrf.mxu0
      %v671 = vadd.f32 %v512, %v670
      %672 = vmatmul.f32.gmra.mxu0 %v561
      %v673 = vpop.f32.mrf.mxu0
      %v674 = vadd.f32 %v512, %v673
      %675 = vmatmul.f32.gmra.mxu0 %v564
      %v676 = vpop.f32.mrf.mxu0
      %v677 = vadd.f32 %v512, %v676
      %678 = vmatmul.f32.gmra.mxu0 %v567
      %v679 = vpop.f32.mrf.mxu0
      %v680 = vadd.f32 %v512, %v679
      %681 = vmatmul.f32.gmra.mxu0 %v570
      %v682 = vpop.f32.mrf.mxu0
      %v683 = vadd.f32 %v512, %v682
      %684 = vmatmul.f32.gmra.mxu0 %v573
      %v685 = vpop.f32.mrf.mxu0
      %v686 = vadd.f32 %v512, %v685
      %687 = vmatmul.f32.gmra.mxu0 %v576
      %v688 = vpop.f32.mrf.mxu0
      %v689 = vadd.f32 %v512, %v688
      %690 = vmatmul.f32.gmra.mxu0 %v579
      %v691 = vpop.f32.mrf.mxu0
      %v692 = vadd.f32 %v512, %v691
      %693 = vmatmul.f32.gmra.mxu0 %v582
      %v694 = vpop.f32.mrf.mxu0
      %v695 = vadd.f32 %v512, %v694
      %696 = vmatmul.f32.gmra.mxu0 %v585
      %v697 = vpop.f32.mrf.mxu0
      %v698 = vadd.f32 %v512, %v697
      %699 = vmatmul.f32.gmra.mxu0 %v588
      %v700 = vpop.f32.mrf.mxu0
      %v701 = vadd.f32 %v512, %v700
      %702 = vmatmul.f32.gmra.mxu0 %v591
      %v703 = vpop.f32.mrf.mxu0
      %v704 = vadd.f32 %v512, %v703
      %705 = vmatmul.f32.gmra.mxu0 %v594
      %v706 = vpop.f32.mrf.mxu0
      %v707 = vadd.f32 %v512, %v706
      %708 = vmatmul.f32.gmra.mxu0 %v597
      %v709 = vpop.f32.mrf.mxu0
      %v710 = vadd.f32 %v512, %v709
      %711 = vmatmul.f32.gmra.mxu0 %v600
      %v712 = vpop.f32.mrf.mxu0
      %v713 = vadd.f32 %v512, %v712
      %714 = vmatmul.f32.gmra.mxu0 %v603
      %v715 = vpop.f32.mrf.mxu0
      %v716 = vadd.f32 %v512, %v715
      %717 = vmatmul.f32.gmra.mxu0 %v606
      %v718 = vpop.f32.mrf.mxu0
      %v719 = vadd.f32 %v512, %v718
      %720 = vmatmul.f32.gmra.mxu0 %v609
      %v721 = vpop.f32.mrf.mxu0
      %v722 = vadd.f32 %v512, %v721
      %723 = vdwg.mxu0
      %v724 = vsub.f32 0.0, %v629
      %v725 = vsub.f32 0.0, %v632
      %v726 = vsub.f32 0.0, %v635
      %v727 = vsub.f32 0.0, %v638
      %v728 = vsub.f32 0.0, %v641
      %v729 = vsub.f32 0.0, %v644
      %v730 = vsub.f32 0.0, %v647
      %v731 = vsub.f32 0.0, %v650
      %v732 = vsub.f32 0.0, %v653
      %v733 = vsub.f32 0.0, %v656
      %v734 = vsub.f32 0.0, %v659
      %v735 = vsub.f32 0.0, %v662
      %v736 = vsub.f32 0.0, %v665
      %v737 = vsub.f32 0.0, %v668
      %v738 = vsub.f32 0.0, %v671
      %v739 = vsub.f32 0.0, %v674
      %v740 = vsub.f32 0.0, %v677
      %v741 = vsub.f32 0.0, %v680
      %v742 = vsub.f32 0.0, %v683
      %v743 = vsub.f32 0.0, %v686
      %v744 = vsub.f32 0.0, %v689
      %v745 = vsub.f32 0.0, %v692
      %v746 = vsub.f32 0.0, %v695
      %v747 = vsub.f32 0.0, %v698
      %v748 = vsub.f32 0.0, %v701
      %v749 = vsub.f32 0.0, %v704
      %v750 = vsub.f32 0.0, %v707
      %v751 = vsub.f32 0.0, %v710
      %v752 = vsub.f32 0.0, %v713
      %v753 = vsub.f32 0.0, %v716
      %v754 = vsub.f32 0.0, %v719
      %v755 = vsub.f32 0.0, %v722
      %v756 = vmul.f32 %v724, 1.442695
      %v757 = vpow.pop %v756
      %v758 = vmul.f32 %v725, 1.442695
      %v759 = vpow.pop %v758
      %v760 = vmul.f32 %v726, 1.442695
      %v761 = vpow.pop %v760
      %v762 = vmul.f32 %v727, 1.442695
      %v763 = vpow.pop %v762
      %v764 = vmul.f32 %v728, 1.442695
      %v765 = vpow.pop %v764
      %v766 = vmul.f32 %v729, 1.442695
      %v767 = vpow.pop %v766
      %v768 = vmul.f32 %v730, 1.442695
      %v769 = vpow.pop %v768
      %v770 = vmul.f32 %v731, 1.442695
      %v771 = vpow.pop %v770
      %v772 = vmul.f32 %v732, 1.442695
      %v773 = vpow.pop %v772
      %v774 = vmul.f32 %v733, 1.442695
      %v775 = vpow.pop %v774
      %v776 = vmul.f32 %v734, 1.442695
      %v777 = vpow.pop %v776
      %v778 = vmul.f32 %v735, 1.442695
      %v779 = vpow.pop %v778
      %v780 = vmul.f32 %v736, 1.442695
      %v781 = vpow.pop %v780
      %v782 = vmul.f32 %v737, 1.442695
      %v783 = vpow.pop %v782
      %v784 = vmul.f32 %v738, 1.442695
      %v785 = vpow.pop %v784
      %v786 = vmul.f32 %v739, 1.442695
      %v787 = vpow.pop %v786
      %v788 = vmul.f32 %v740, 1.442695
      %v789 = vpow.pop %v788
      %v790 = vmul.f32 %v741, 1.442695
      %v791 = vpow.pop %v790
      %v792 = vmul.f32 %v742, 1.442695
      %v793 = vpow.pop %v792
      %v794 = vmul.f32 %v743, 1.442695
      %v795 = vpow.pop %v794
      %v796 = vmul.f32 %v744, 1.442695
      %v797 = vpow.pop %v796
      %v798 = vmul.f32 %v745, 1.442695
      %v799 = vpow.pop %v798
      %v800 = vmul.f32 %v746, 1.442695
      %v801 = vpow.pop %v800
      %v802 = vmul.f32 %v747, 1.442695
      %v803 = vpow.pop %v802
      %v804 = vmul.f32 %v748, 1.442695
      %v805 = vpow.pop %v804
      %v806 = vmul.f32 %v749, 1.442695
      %v807 = vpow.pop %v806
      %v808 = vmul.f32 %v750, 1.442695
      %v809 = vpow.pop %v808
      %v810 = vmul.f32 %v751, 1.442695
      %v811 = vpow.pop %v810
      %v812 = vmul.f32 %v752, 1.442695
      %v813 = vpow.pop %v812
      %v814 = vmul.f32 %v753, 1.442695
      %v815 = vpow.pop %v814
      %v816 = vmul.f32 %v754, 1.442695
      %v817 = vpow.pop %v816
      %v818 = vmul.f32 %v755, 1.442695
      %v819 = vpow.pop %v818
      %v820 = vadd.f32 %v757, 1.0
      %v821 = vadd.f32 %v759, 1.0
      %v822 = vadd.f32 %v761, 1.0
      %v823 = vadd.f32 %v763, 1.0
      %v824 = vadd.f32 %v765, 1.0
      %v825 = vadd.f32 %v767, 1.0
      %v826 = vadd.f32 %v769, 1.0
      %v827 = vadd.f32 %v771, 1.0
      %v828 = vadd.f32 %v773, 1.0
      %v829 = vadd.f32 %v775, 1.0
      %v830 = vadd.f32 %v777, 1.0
      %v831 = vadd.f32 %v779, 1.0
      %v832 = vadd.f32 %v781, 1.0
      %v833 = vadd.f32 %v783, 1.0
      %v834 = vadd.f32 %v785, 1.0
      %v835 = vadd.f32 %v787, 1.0
      %v836 = vadd.f32 %v789, 1.0
      %v837 = vadd.f32 %v791, 1.0
      %v838 = vadd.f32 %v793, 1.0
      %v839 = vadd.f32 %v795, 1.0
      %v840 = vadd.f32 %v797, 1.0
      %v841 = vadd.f32 %v799, 1.0
      %v842 = vadd.f32 %v801, 1.0
      %v843 = vadd.f32 %v803, 1.0
      %v844 = vadd.f32 %v805, 1.0
      %v845 = vadd.f32 %v807, 1.0
      %v846 = vadd.f32 %v809, 1.0
      %v847 = vadd.f32 %v811, 1.0
      %v848 = vadd.f32 %v813, 1.0
      %v849 = vadd.f32 %v815, 1.0
      %v850 = vadd.f32 %v817, 1.0
      %v851 = vadd.f32 %v819, 1.0
      %v852 = vrcp.pop %v820
      %v853 = vmul.f32 %v820, %v852
      %v854 = vsub.f32 1.0, %v853
      %v855 = vmul.f32 %v852, %v854
      %v856 = vadd.f32 %v852, %v855
      %vm857 = vweird.f32 %v820
      %vm858 = vweird.f32 %v852
      %vm859 = vmor %vm857, %vm858
      %v860 = vsel %vm859, %v852, %v856
      %v861 = vand.u32 2147483647, %v820
      %vm862 = vcmp.eq.f32.partialorder %v861, 8.507059e+37
      %v863 = vand.u32 %v820, 2147483648
      %v864 = vor.u32 1.1754944e-38, %v863
      %v865 = vsel %vm862, %v864, %v860
      %v866 = vmul.f32 1.0, %v865
      %v867 = vrcp.pop %v821
      %v868 = vmul.f32 %v821, %v867
      %v869 = vsub.f32 1.0, %v868
      %v870 = vmul.f32 %v867, %v869
      %v871 = vadd.f32 %v867, %v870
      %vm872 = vweird.f32 %v821
      %vm873 = vweird.f32 %v867
      %vm874 = vmor %vm872, %vm873
      %v875 = vsel %vm874, %v867, %v871
      %v876 = vand.u32 2147483647, %v821
      %vm877 = vcmp.eq.f32.partialorder %v876, 8.507059e+37
      %v878 = vand.u32 %v821, 2147483648
      %v879 = vor.u32 1.1754944e-38, %v878
      %v880 = vsel %vm877, %v879, %v875
      %v881 = vmul.f32 1.0, %v880
      %v882 = vrcp.pop %v822
      %v883 = vmul.f32 %v822, %v882
      %v884 = vsub.f32 1.0, %v883
      %v885 = vmul.f32 %v882, %v884
      %v886 = vadd.f32 %v882, %v885
      %vm887 = vweird.f32 %v822
      %vm888 = vweird.f32 %v882
      %vm889 = vmor %vm887, %vm888
      %v890 = vsel %vm889, %v882, %v886
      %v891 = vand.u32 2147483647, %v822
      %vm892 = vcmp.eq.f32.partialorder %v891, 8.507059e+37
      %v893 = vand.u32 %v822, 2147483648
      %v894 = vor.u32 1.1754944e-38, %v893
      %v895 = vsel %vm892, %v894, %v890
      %v896 = vmul.f32 1.0, %v895
      %v897 = vrcp.pop %v823
      %v898 = vmul.f32 %v823, %v897
      %v899 = vsub.f32 1.0, %v898
      %v900 = vmul.f32 %v897, %v899
      %v901 = vadd.f32 %v897, %v900
      %vm902 = vweird.f32 %v823
      %vm903 = vweird.f32 %v897
      %vm904 = vmor %vm902, %vm903
      %v905 = vsel %vm904, %v897, %v901
      %v906 = vand.u32 2147483647, %v823
      %vm907 = vcmp.eq.f32.partialorder %v906, 8.507059e+37
      %v908 = vand.u32 %v823, 2147483648
      %v909 = vor.u32 1.1754944e-38, %v908
      %v910 = vsel %vm907, %v909, %v905
      %v911 = vmul.f32 1.0, %v910
      %v912 = vrcp.pop %v824
      %v913 = vmul.f32 %v824, %v912
      %v914 = vsub.f32 1.0, %v913
      %v915 = vmul.f32 %v912, %v914
      %v916 = vadd.f32 %v912, %v915
      %vm917 = vweird.f32 %v824
      %vm918 = vweird.f32 %v912
      %vm919 = vmor %vm917, %vm918
      %v920 = vsel %vm919, %v912, %v916
      %v921 = vand.u32 2147483647, %v824
      %vm922 = vcmp.eq.f32.partialorder %v921, 8.507059e+37
      %v923 = vand.u32 %v824, 2147483648
      %v924 = vor.u32 1.1754944e-38, %v923
      %v925 = vsel %vm922, %v924, %v920
      %v926 = vmul.f32 1.0, %v925
      %v927 = vrcp.pop %v825
      %v928 = vmul.f32 %v825, %v927
      %v929 = vsub.f32 1.0, %v928
      %v930 = vmul.f32 %v927, %v929
      %v931 = vadd.f32 %v927, %v930
      %vm932 = vweird.f32 %v825
      %vm933 = vweird.f32 %v927
      %vm934 = vmor %vm932, %vm933
      %v935 = vsel %vm934, %v927, %v931
      %v936 = vand.u32 2147483647, %v825
      %vm937 = vcmp.eq.f32.partialorder %v936, 8.507059e+37
      %v938 = vand.u32 %v825, 2147483648
      %v939 = vor.u32 1.1754944e-38, %v938
      %v940 = vsel %vm937, %v939, %v935
      %v941 = vmul.f32 1.0, %v940
      %v942 = vrcp.pop %v826
      %v943 = vmul.f32 %v826, %v942
      %v944 = vsub.f32 1.0, %v943
      %v945 = vmul.f32 %v942, %v944
      %v946 = vadd.f32 %v942, %v945
      %vm947 = vweird.f32 %v826
      %vm948 = vweird.f32 %v942
      %vm949 = vmor %vm947, %vm948
      %v950 = vsel %vm949, %v942, %v946
      %v951 = vand.u32 2147483647, %v826
      %vm952 = vcmp.eq.f32.partialorder %v951, 8.507059e+37
      %v953 = vand.u32 %v826, 2147483648
      %v954 = vor.u32 1.1754944e-38, %v953
      %v955 = vsel %vm952, %v954, %v950
      %v956 = vmul.f32 1.0, %v955
      %v957 = vrcp.pop %v827
      %v958 = vmul.f32 %v827, %v957
      %v959 = vsub.f32 1.0, %v958
      %v960 = vmul.f32 %v957, %v959
      %v961 = vadd.f32 %v957, %v960
      %vm962 = vweird.f32 %v827
      %vm963 = vweird.f32 %v957
      %vm964 = vmor %vm962, %vm963
      %v965 = vsel %vm964, %v957, %v961
      %v966 = vand.u32 2147483647, %v827
      %vm967 = vcmp.eq.f32.partialorder %v966, 8.507059e+37
      %v968 = vand.u32 %v827, 2147483648
      %v969 = vor.u32 1.1754944e-38, %v968
      %v970 = vsel %vm967, %v969, %v965
      %v971 = vmul.f32 1.0, %v970
      %v972 = vrcp.pop %v828
      %v973 = vmul.f32 %v828, %v972
      %v974 = vsub.f32 1.0, %v973
      %v975 = vmul.f32 %v972, %v974
      %v976 = vadd.f32 %v972, %v975
      %vm977 = vweird.f32 %v828
      %vm978 = vweird.f32 %v972
      %vm979 = vmor %vm977, %vm978
      %v980 = vsel %vm979, %v972, %v976
      %v981 = vand.u32 2147483647, %v828
      %vm982 = vcmp.eq.f32.partialorder %v981, 8.507059e+37
      %v983 = vand.u32 %v828, 2147483648
      %v984 = vor.u32 1.1754944e-38, %v983
      %v985 = vsel %vm982, %v984, %v980
      %v986 = vmul.f32 1.0, %v985
      %v987 = vrcp.pop %v829
      %v988 = vmul.f32 %v829, %v987
      %v989 = vsub.f32 1.0, %v988
      %v990 = vmul.f32 %v987, %v989
      %v991 = vadd.f32 %v987, %v990
      %vm992 = vweird.f32 %v829
      %vm993 = vweird.f32 %v987
      %vm994 = vmor %vm992, %vm993
      %v995 = vsel %vm994, %v987, %v991
      %v996 = vand.u32 2147483647, %v829
      %vm997 = vcmp.eq.f32.partialorder %v996, 8.507059e+37
      %v998 = vand.u32 %v829, 2147483648
      %v999 = vor.u32 1.1754944e-38, %v998
      %v1000 = vsel %vm997, %v999, %v995
      %v1001 = vmul.f32 1.0, %v1000
      %v1002 = vrcp.pop %v830
      %v1003 = vmul.f32 %v830, %v1002
      %v1004 = vsub.f32 1.0, %v1003
      %v1005 = vmul.f32 %v1002, %v1004
      %v1006 = vadd.f32 %v1002, %v1005
      %vm1007 = vweird.f32 %v830
      %vm1008 = vweird.f32 %v1002
      %vm1009 = vmor %vm1007, %vm1008
      %v1010 = vsel %vm1009, %v1002, %v1006
      %v1011 = vand.u32 2147483647, %v830
      %vm1012 = vcmp.eq.f32.partialorder %v1011, 8.507059e+37
      %v1013 = vand.u32 %v830, 2147483648
      %v1014 = vor.u32 1.1754944e-38, %v1013
      %v1015 = vsel %vm1012, %v1014, %v1010
      %v1016 = vmul.f32 1.0, %v1015
      %v1017 = vrcp.pop %v831
      %v1018 = vmul.f32 %v831, %v1017
      %v1019 = vsub.f32 1.0, %v1018
      %v1020 = vmul.f32 %v1017, %v1019
      %v1021 = vadd.f32 %v1017, %v1020
      %vm1022 = vweird.f32 %v831
      %vm1023 = vweird.f32 %v1017
      %vm1024 = vmor %vm1022, %vm1023
      %v1025 = vsel %vm1024, %v1017, %v1021
      %v1026 = vand.u32 2147483647, %v831
      %vm1027 = vcmp.eq.f32.partialorder %v1026, 8.507059e+37
      %v1028 = vand.u32 %v831, 2147483648
      %v1029 = vor.u32 1.1754944e-38, %v1028
      %v1030 = vsel %vm1027, %v1029, %v1025
      %v1031 = vmul.f32 1.0, %v1030
      %v1032 = vrcp.pop %v832
      %v1033 = vmul.f32 %v832, %v1032
      %v1034 = vsub.f32 1.0, %v1033
      %v1035 = vmul.f32 %v1032, %v1034
      %v1036 = vadd.f32 %v1032, %v1035
      %vm1037 = vweird.f32 %v832
      %vm1038 = vweird.f32 %v1032
      %vm1039 = vmor %vm1037, %vm1038
      %v1040 = vsel %vm1039, %v1032, %v1036
      %v1041 = vand.u32 2147483647, %v832
      %vm1042 = vcmp.eq.f32.partialorder %v1041, 8.507059e+37
      %v1043 = vand.u32 %v832, 2147483648
      %v1044 = vor.u32 1.1754944e-38, %v1043
      %v1045 = vsel %vm1042, %v1044, %v1040
      %v1046 = vmul.f32 1.0, %v1045
      %v1047 = vrcp.pop %v833
      %v1048 = vmul.f32 %v833, %v1047
      %v1049 = vsub.f32 1.0, %v1048
      %v1050 = vmul.f32 %v1047, %v1049
      %v1051 = vadd.f32 %v1047, %v1050
      %vm1052 = vweird.f32 %v833
      %vm1053 = vweird.f32 %v1047
      %vm1054 = vmor %vm1052, %vm1053
      %v1055 = vsel %vm1054, %v1047, %v1051
      %v1056 = vand.u32 2147483647, %v833
      %vm1057 = vcmp.eq.f32.partialorder %v1056, 8.507059e+37
      %v1058 = vand.u32 %v833, 2147483648
      %v1059 = vor.u32 1.1754944e-38, %v1058
      %v1060 = vsel %vm1057, %v1059, %v1055
      %v1061 = vmul.f32 1.0, %v1060
      %v1062 = vrcp.pop %v834
      %v1063 = vmul.f32 %v834, %v1062
      %v1064 = vsub.f32 1.0, %v1063
      %v1065 = vmul.f32 %v1062, %v1064
      %v1066 = vadd.f32 %v1062, %v1065
      %vm1067 = vweird.f32 %v834
      %vm1068 = vweird.f32 %v1062
      %vm1069 = vmor %vm1067, %vm1068
      %v1070 = vsel %vm1069, %v1062, %v1066
      %v1071 = vand.u32 2147483647, %v834
      %vm1072 = vcmp.eq.f32.partialorder %v1071, 8.507059e+37
      %v1073 = vand.u32 %v834, 2147483648
      %v1074 = vor.u32 1.1754944e-38, %v1073
      %v1075 = vsel %vm1072, %v1074, %v1070
      %v1076 = vmul.f32 1.0, %v1075
      %v1077 = vrcp.pop %v835
      %v1078 = vmul.f32 %v835, %v1077
      %v1079 = vsub.f32 1.0, %v1078
      %v1080 = vmul.f32 %v1077, %v1079
      %v1081 = vadd.f32 %v1077, %v1080
      %vm1082 = vweird.f32 %v835
      %vm1083 = vweird.f32 %v1077
      %vm1084 = vmor %vm1082, %vm1083
      %v1085 = vsel %vm1084, %v1077, %v1081
      %v1086 = vand.u32 2147483647, %v835
      %vm1087 = vcmp.eq.f32.partialorder %v1086, 8.507059e+37
      %v1088 = vand.u32 %v835, 2147483648
      %v1089 = vor.u32 1.1754944e-38, %v1088
      %v1090 = vsel %vm1087, %v1089, %v1085
      %v1091 = vmul.f32 1.0, %v1090
      %v1092 = vrcp.pop %v836
      %v1093 = vmul.f32 %v836, %v1092
      %v1094 = vsub.f32 1.0, %v1093
      %v1095 = vmul.f32 %v1092, %v1094
      %v1096 = vadd.f32 %v1092, %v1095
      %vm1097 = vweird.f32 %v836
      %vm1098 = vweird.f32 %v1092
      %vm1099 = vmor %vm1097, %vm1098
      %v1100 = vsel %vm1099, %v1092, %v1096
      %v1101 = vand.u32 2147483647, %v836
      %vm1102 = vcmp.eq.f32.partialorder %v1101, 8.507059e+37
      %v1103 = vand.u32 %v836, 2147483648
      %v1104 = vor.u32 1.1754944e-38, %v1103
      %v1105 = vsel %vm1102, %v1104, %v1100
      %v1106 = vmul.f32 1.0, %v1105
      %v1107 = vrcp.pop %v837
      %v1108 = vmul.f32 %v837, %v1107
      %v1109 = vsub.f32 1.0, %v1108
      %v1110 = vmul.f32 %v1107, %v1109
      %v1111 = vadd.f32 %v1107, %v1110
      %vm1112 = vweird.f32 %v837
      %vm1113 = vweird.f32 %v1107
      %vm1114 = vmor %vm1112, %vm1113
      %v1115 = vsel %vm1114, %v1107, %v1111
      %v1116 = vand.u32 2147483647, %v837
      %vm1117 = vcmp.eq.f32.partialorder %v1116, 8.507059e+37
      %v1118 = vand.u32 %v837, 2147483648
      %v1119 = vor.u32 1.1754944e-38, %v1118
      %v1120 = vsel %vm1117, %v1119, %v1115
      %v1121 = vmul.f32 1.0, %v1120
      %v1122 = vrcp.pop %v838
      %v1123 = vmul.f32 %v838, %v1122
      %v1124 = vsub.f32 1.0, %v1123
      %v1125 = vmul.f32 %v1122, %v1124
      %v1126 = vadd.f32 %v1122, %v1125
      %vm1127 = vweird.f32 %v838
      %vm1128 = vweird.f32 %v1122
      %vm1129 = vmor %vm1127, %vm1128
      %v1130 = vsel %vm1129, %v1122, %v1126
      %v1131 = vand.u32 2147483647, %v838
      %vm1132 = vcmp.eq.f32.partialorder %v1131, 8.507059e+37
      %v1133 = vand.u32 %v838, 2147483648
      %v1134 = vor.u32 1.1754944e-38, %v1133
      %v1135 = vsel %vm1132, %v1134, %v1130
      %v1136 = vmul.f32 1.0, %v1135
      %v1137 = vrcp.pop %v839
      %v1138 = vmul.f32 %v839, %v1137
      %v1139 = vsub.f32 1.0, %v1138
      %v1140 = vmul.f32 %v1137, %v1139
      %v1141 = vadd.f32 %v1137, %v1140
      %vm1142 = vweird.f32 %v839
      %vm1143 = vweird.f32 %v1137
      %vm1144 = vmor %vm1142, %vm1143
      %v1145 = vsel %vm1144, %v1137, %v1141
      %v1146 = vand.u32 2147483647, %v839
      %vm1147 = vcmp.eq.f32.partialorder %v1146, 8.507059e+37
      %v1148 = vand.u32 %v839, 2147483648
      %v1149 = vor.u32 1.1754944e-38, %v1148
      %v1150 = vsel %vm1147, %v1149, %v1145
      %v1151 = vmul.f32 1.0, %v1150
      %v1152 = vrcp.pop %v840
      %v1153 = vmul.f32 %v840, %v1152
      %v1154 = vsub.f32 1.0, %v1153
      %v1155 = vmul.f32 %v1152, %v1154
      %v1156 = vadd.f32 %v1152, %v1155
      %vm1157 = vweird.f32 %v840
      %vm1158 = vweird.f32 %v1152
      %vm1159 = vmor %vm1157, %vm1158
      %v1160 = vsel %vm1159, %v1152, %v1156
      %v1161 = vand.u32 2147483647, %v840
      %vm1162 = vcmp.eq.f32.partialorder %v1161, 8.507059e+37
      %v1163 = vand.u32 %v840, 2147483648
      %v1164 = vor.u32 1.1754944e-38, %v1163
      %v1165 = vsel %vm1162, %v1164, %v1160
      %v1166 = vmul.f32 1.0, %v1165
      %v1167 = vrcp.pop %v841
      %v1168 = vmul.f32 %v841, %v1167
      %v1169 = vsub.f32 1.0, %v1168
      %v1170 = vmul.f32 %v1167, %v1169
      %v1171 = vadd.f32 %v1167, %v1170
      %vm1172 = vweird.f32 %v841
      %vm1173 = vweird.f32 %v1167
      %vm1174 = vmor %vm1172, %vm1173
      %v1175 = vsel %vm1174, %v1167, %v1171
      %v1176 = vand.u32 2147483647, %v841
      %vm1177 = vcmp.eq.f32.partialorder %v1176, 8.507059e+37
      %v1178 = vand.u32 %v841, 2147483648
      %v1179 = vor.u32 1.1754944e-38, %v1178
      %v1180 = vsel %vm1177, %v1179, %v1175
      %v1181 = vmul.f32 1.0, %v1180
      %v1182 = vrcp.pop %v842
      %v1183 = vmul.f32 %v842, %v1182
      %v1184 = vsub.f32 1.0, %v1183
      %v1185 = vmul.f32 %v1182, %v1184
      %v1186 = vadd.f32 %v1182, %v1185
      %vm1187 = vweird.f32 %v842
      %vm1188 = vweird.f32 %v1182
      %vm1189 = vmor %vm1187, %vm1188
      %v1190 = vsel %vm1189, %v1182, %v1186
      %v1191 = vand.u32 2147483647, %v842
      %vm1192 = vcmp.eq.f32.partialorder %v1191, 8.507059e+37
      %v1193 = vand.u32 %v842, 2147483648
      %v1194 = vor.u32 1.1754944e-38, %v1193
      %v1195 = vsel %vm1192, %v1194, %v1190
      %v1196 = vmul.f32 1.0, %v1195
      %v1197 = vrcp.pop %v843
      %v1198 = vmul.f32 %v843, %v1197
      %v1199 = vsub.f32 1.0, %v1198
      %v1200 = vmul.f32 %v1197, %v1199
      %v1201 = vadd.f32 %v1197, %v1200
      %vm1202 = vweird.f32 %v843
      %vm1203 = vweird.f32 %v1197
      %vm1204 = vmor %vm1202, %vm1203
      %v1205 = vsel %vm1204, %v1197, %v1201
      %v1206 = vand.u32 2147483647, %v843
      %vm1207 = vcmp.eq.f32.partialorder %v1206, 8.507059e+37
      %v1208 = vand.u32 %v843, 2147483648
      %v1209 = vor.u32 1.1754944e-38, %v1208
      %v1210 = vsel %vm1207, %v1209, %v1205
      %v1211 = vmul.f32 1.0, %v1210
      %v1212 = vrcp.pop %v844
      %v1213 = vmul.f32 %v844, %v1212
      %v1214 = vsub.f32 1.0, %v1213
      %v1215 = vmul.f32 %v1212, %v1214
      %v1216 = vadd.f32 %v1212, %v1215
      %vm1217 = vweird.f32 %v844
      %vm1218 = vweird.f32 %v1212
      %vm1219 = vmor %vm1217, %vm1218
      %v1220 = vsel %vm1219, %v1212, %v1216
      %v1221 = vand.u32 2147483647, %v844
      %vm1222 = vcmp.eq.f32.partialorder %v1221, 8.507059e+37
      %v1223 = vand.u32 %v844, 2147483648
      %v1224 = vor.u32 1.1754944e-38, %v1223
      %v1225 = vsel %vm1222, %v1224, %v1220
      %v1226 = vmul.f32 1.0, %v1225
      %v1227 = vrcp.pop %v845
      %v1228 = vmul.f32 %v845, %v1227
      %v1229 = vsub.f32 1.0, %v1228
      %v1230 = vmul.f32 %v1227, %v1229
      %v1231 = vadd.f32 %v1227, %v1230
      %vm1232 = vweird.f32 %v845
      %vm1233 = vweird.f32 %v1227
      %vm1234 = vmor %vm1232, %vm1233
      %v1235 = vsel %vm1234, %v1227, %v1231
      %v1236 = vand.u32 2147483647, %v845
      %vm1237 = vcmp.eq.f32.partialorder %v1236, 8.507059e+37
      %v1238 = vand.u32 %v845, 2147483648
      %v1239 = vor.u32 1.1754944e-38, %v1238
      %v1240 = vsel %vm1237, %v1239, %v1235
      %v1241 = vmul.f32 1.0, %v1240
      %v1242 = vrcp.pop %v846
      %v1243 = vmul.f32 %v846, %v1242
      %v1244 = vsub.f32 1.0, %v1243
      %v1245 = vmul.f32 %v1242, %v1244
      %v1246 = vadd.f32 %v1242, %v1245
      %vm1247 = vweird.f32 %v846
      %vm1248 = vweird.f32 %v1242
      %vm1249 = vmor %vm1247, %vm1248
      %v1250 = vsel %vm1249, %v1242, %v1246
      %v1251 = vand.u32 2147483647, %v846
      %vm1252 = vcmp.eq.f32.partialorder %v1251, 8.507059e+37
      %v1253 = vand.u32 %v846, 2147483648
      %v1254 = vor.u32 1.1754944e-38, %v1253
      %v1255 = vsel %vm1252, %v1254, %v1250
      %v1256 = vmul.f32 1.0, %v1255
      %v1257 = vrcp.pop %v847
      %v1258 = vmul.f32 %v847, %v1257
      %v1259 = vsub.f32 1.0, %v1258
      %v1260 = vmul.f32 %v1257, %v1259
      %v1261 = vadd.f32 %v1257, %v1260
      %vm1262 = vweird.f32 %v847
      %vm1263 = vweird.f32 %v1257
      %vm1264 = vmor %vm1262, %vm1263
      %v1265 = vsel %vm1264, %v1257, %v1261
      %v1266 = vand.u32 2147483647, %v847
      %vm1267 = vcmp.eq.f32.partialorder %v1266, 8.507059e+37
      %v1268 = vand.u32 %v847, 2147483648
      %v1269 = vor.u32 1.1754944e-38, %v1268
      %v1270 = vsel %vm1267, %v1269, %v1265
      %v1271 = vmul.f32 1.0, %v1270
      %v1272 = vrcp.pop %v848
      %v1273 = vmul.f32 %v848, %v1272
      %v1274 = vsub.f32 1.0, %v1273
      %v1275 = vmul.f32 %v1272, %v1274
      %v1276 = vadd.f32 %v1272, %v1275
      %vm1277 = vweird.f32 %v848
      %vm1278 = vweird.f32 %v1272
      %vm1279 = vmor %vm1277, %vm1278
      %v1280 = vsel %vm1279, %v1272, %v1276
      %v1281 = vand.u32 2147483647, %v848
      %vm1282 = vcmp.eq.f32.partialorder %v1281, 8.507059e+37
      %v1283 = vand.u32 %v848, 2147483648
      %v1284 = vor.u32 1.1754944e-38, %v1283
      %v1285 = vsel %vm1282, %v1284, %v1280
      %v1286 = vmul.f32 1.0, %v1285
      %v1287 = vrcp.pop %v849
      %v1288 = vmul.f32 %v849, %v1287
      %v1289 = vsub.f32 1.0, %v1288
      %v1290 = vmul.f32 %v1287, %v1289
      %v1291 = vadd.f32 %v1287, %v1290
      %vm1292 = vweird.f32 %v849
      %vm1293 = vweird.f32 %v1287
      %vm1294 = vmor %vm1292, %vm1293
      %v1295 = vsel %vm1294, %v1287, %v1291
      %v1296 = vand.u32 2147483647, %v849
      %vm1297 = vcmp.eq.f32.partialorder %v1296, 8.507059e+37
      %v1298 = vand.u32 %v849, 2147483648
      %v1299 = vor.u32 1.1754944e-38, %v1298
      %v1300 = vsel %vm1297, %v1299, %v1295
      %v1301 = vmul.f32 1.0, %v1300
      %v1302 = vrcp.pop %v850
      %v1303 = vmul.f32 %v850, %v1302
      %v1304 = vsub.f32 1.0, %v1303
      %v1305 = vmul.f32 %v1302, %v1304
      %v1306 = vadd.f32 %v1302, %v1305
      %vm1307 = vweird.f32 %v850
      %vm1308 = vweird.f32 %v1302
      %vm1309 = vmor %vm1307, %vm1308
      %v1310 = vsel %vm1309, %v1302, %v1306
      %v1311 = vand.u32 2147483647, %v850
      %vm1312 = vcmp.eq.f32.partialorder %v1311, 8.507059e+37
      %v1313 = vand.u32 %v850, 2147483648
      %v1314 = vor.u32 1.1754944e-38, %v1313
      %v1315 = vsel %vm1312, %v1314, %v1310
      %v1316 = vmul.f32 1.0, %v1315
      %v1317 = vrcp.pop %v851
      %v1318 = vmul.f32 %v851, %v1317
      %v1319 = vsub.f32 1.0, %v1318
      %v1320 = vmul.f32 %v1317, %v1319
      %v1321 = vadd.f32 %v1317, %v1320
      %vm1322 = vweird.f32 %v851
      %vm1323 = vweird.f32 %v1317
      %vm1324 = vmor %vm1322, %vm1323
      %v1325 = vsel %vm1324, %v1317, %v1321
      %v1326 = vand.u32 2147483647, %v851
      %vm1327 = vcmp.eq.f32.partialorder %v1326, 8.507059e+37
      %v1328 = vand.u32 %v851, 2147483648
      %v1329 = vor.u32 1.1754944e-38, %v1328
      %v1330 = vsel %vm1327, %v1329, %v1325
      %v1331 = vmul.f32 1.0, %v1330
      %v1332 = vmul.f32 %v277, %v866
      %v1333 = vmul.f32 %v278, %v881
      %v1334 = vmul.f32 %v279, %v896
      %v1335 = vmul.f32 %v280, %v911
      %v1336 = vmul.f32 %v281, %v926
      %v1337 = vmul.f32 %v282, %v941
      %v1338 = vmul.f32 %v283, %v956
      %v1339 = vmul.f32 %v284, %v971
      %v1340 = vmul.f32 %v285, %v986
      %v1341 = vmul.f32 %v286, %v1001
      %v1342 = vmul.f32 %v287, %v1016
      %v1343 = vmul.f32 %v288, %v1031
      %v1344 = vmul.f32 %v289, %v1046
      %v1345 = vmul.f32 %v290, %v1061
      %v1346 = vmul.f32 %v291, %v1076
      %v1347 = vmul.f32 %v292, %v1091
      %v1348 = vmul.f32 %v293, %v1106
      %v1349 = vmul.f32 %v294, %v1121
      %v1350 = vmul.f32 %v295, %v1136
      %v1351 = vmul.f32 %v296, %v1151
      %v1352 = vmul.f32 %v297, %v1166
      %v1353 = vmul.f32 %v298, %v1181
      %v1354 = vmul.f32 %v299, %v1196
      %v1355 = vmul.f32 %v300, %v1211
      %v1356 = vmul.f32 %v301, %v1226
      %v1357 = vmul.f32 %v302, %v1241
      %v1358 = vmul.f32 %v303, %v1256
      %v1359 = vmul.f32 %v304, %v1271
      %v1360 = vmul.f32 %v305, %v1286
      %v1361 = vmul.f32 %v306, %v1301
      %v1362 = vmul.f32 %v307, %v1316
      %v1363 = vmul.f32 %v308, %v1331
      %1364 = vst [vmem:[%s275] sm:$0xff] %v1332
      %1365 = vst [vmem:[%s275 + $0x8] sm:$0xff] %v1333
      %1366 = vst [vmem:[%s275 + $0x10] sm:$0xff] %v1334
      %1367 = vst [vmem:[%s275 + $0x18] sm:$0xff] %v1335
      %1368 = vst [vmem:[%s275 + $0x20] sm:$0xff] %v1336
      %1369 = vst [vmem:[%s275 + $0x28] sm:$0xff] %v1337
      %1370 = vst [vmem:[%s275 + $0x30] sm:$0xff] %v1338
      %1371 = vst [vmem:[%s275 + $0x38] sm:$0xff] %v1339
      %1372 = vst [vmem:[%s275 + $0x40] sm:$0xff] %v1340
      %1373 = vst [vmem:[%s275 + $0x48] sm:$0xff] %v1341
      %1374 = vst [vmem:[%s275 + $0x50] sm:$0xff] %v1342
      %1375 = vst [vmem:[%s275 + $0x58] sm:$0xff] %v1343
      %1376 = vst [vmem:[%s275 + $0x60] sm:$0xff] %v1344
      %1377 = vst [vmem:[%s275 + $0x68] sm:$0xff] %v1345
      %1378 = vst [vmem:[%s275 + $0x70] sm:$0xff] %v1346
      %1379 = vst [vmem:[%s275 + $0x78] sm:$0xff] %v1347
      %1380 = vst [vmem:[%s275 + $0x80] sm:$0xff] %v1348
      %1381 = vst [vmem:[%s275 + $0x88] sm:$0xff] %v1349
      %1382 = vst [vmem:[%s275 + $0x90] sm:$0xff] %v1350
      %1383 = vst [vmem:[%s275 + $0x98] sm:$0xff] %v1351
      %1384 = vst [vmem:[%s275 + $0xa0] sm:$0xff] %v1352
      %1385 = vst [vmem:[%s275 + $0xa8] sm:$0xff] %v1353
      %1386 = vst [vmem:[%s275 + $0xb0] sm:$0xff] %v1354
      %1387 = vst [vmem:[%s275 + $0xb8] sm:$0xff] %v1355
      %1388 = vst [vmem:[%s275 + $0xc0] sm:$0xff] %v1356
      %1389 = vst [vmem:[%s275 + $0xc8] sm:$0xff] %v1357
      %1390 = vst [vmem:[%s275 + $0xd0] sm:$0xff] %v1358
      %1391 = vst [vmem:[%s275 + $0xd8] sm:$0xff] %v1359
      %1392 = vst [vmem:[%s275 + $0xe0] sm:$0xff] %v1360
      %1393 = vst [vmem:[%s275 + $0xe8] sm:$0xff] %v1361
      %1394 = vst [vmem:[%s275 + $0xf0] sm:$0xff] %v1362
      %1395 = vst [vmem:[%s275 + $0xf8] sm:$0xff] %v1363
      %s1396 = smul.u32 32, %s17
      %p1397 = scmp.lt.s32.totalorder %s1396, 127
      %s1398 = scalar_select %p1397, %s1396, 127
      %s1399 = smul.addr %s1398, 8
      %s1400 = scalar_lea.vmem %s6, %s1399
      // Predicated region
      $region45: #{esa_forward.9} parent=43 // pred_check
        %p1401 = pneg %p171
      $region46: #{esa_forward.9} parent=43 // pred_check_branch
        %1403 = sbr.rel (%p1401) target = $region48
      $region47: #{esa_forward.9} parent=43 // pred_region
        %s1404 = smul.u32 32, %s17
      $region48: #{esa_forward.9} parent=43 // pred_fallthru
        _
    $region44: #{esa_forward.9} parent=5 // pred_fallthru
      _
    %p1405 = scmp.le.s32.totalorder 2, %s12
    // Predicated region
    $region49: #{esa_forward.9} parent=5 // pred_check
      %p1406 = pneg %p1405
    $region50: #{esa_forward.9} parent=5 // pred_check_branch
      %1408 = sbr.rel (%p1406) target = $region52
    $region51: #{esa_forward.9} parent=5 // pred_region
      %s1409 = ssub.s32 %s12, 2
      // Predicated region
      $region53: #{esa_forward.9} parent=51 // pred_check
        %p1410 = pneg %p177
      $region54: #{esa_forward.9} parent=51 // pred_check_branch
        %1412 = sbr.rel (%p1410) target = $region56
      $region55: #{esa_forward.9} parent=51 // pred_region
        %s1413 = smul.u32 32, %s18
        %p1414 = scmp.lt.s32.totalorder %s1413, 127
        %s1415 = scalar_select %p1414, %s1413, 127
        %s1416 = smul.addr %s1415, 8
        %s1417 = scalar_lea.vmem %s6, %s1416
      $region56: #{esa_forward.9} parent=51 // pred_fallthru
        _
    $region52: #{esa_forward.9} parent=5 // pred_fallthru
      _
  $region6: #{esa_forward.9} parent=0 // loop_footer
    %s16 = sadd.s32 1, %s12
  $region7: #{esa_forward.9} parent=0 // loop_footer_branch
    %11 = sbr.rel target = $region3
  $region8: #{esa_forward.9} parent=0 // loop_exit
    _

</llo_original>
